<compile_context>
chip_gen: v7x
topology: tpu7x:2x2x1
jax: 0.10.0
libtpu: 0.0.40
codegen_flags: <defaults>
</compile_context>

<pallas_src>
import functools

import jax
import jax.numpy as jnp
from jax import lax
from jax.experimental import pallas as pl
from jax.experimental.pallas import tpu as pltpu


# Contract the last dim of both operands (the Q @ K^T pattern used by flash attention).
_NT_DIMS = (((1,), (1,)), ((), ()))


def _round_up(x, m):
    return (x + m - 1) // m * m


def mean_predict_kernel(pat_ref, gr_ref, lens_ref, wtop_ref, wbot_ref, wd_ref,
                        consts_ref, out_ref):
    H = wd_ref.shape[0]
    mxu_dt = wtop_ref.dtype

    lens = lens_ref[...]                    # (TB, 8) f32: [plf, glf, 1/plf, 1/glf, 1, 0, 0, 0]

    bp = consts_ref[0:1, :]                 # (1, H) p_layer bias
    bg = consts_ref[1:2, :]                 # (1, H) g_layer bias
    w1s8 = consts_ref[8:16, :]              # (8, H) rows 0-3: lens rank-1 rows of w1; row 4: fused bias
    w2y8 = consts_ref[16:24, :]             # (8, H) row 0: pred_layer2 weight on y (rest zero)
    w2s8 = consts_ref[24:32, 0:8]           # (8, 8) row 0: pred_layer2 lens weights + b2 (rest zero)

    # Fused first layer: each dot yields [h | ylin_h]; the sequence mean and the p/g linear parts
    # of pred_layer1 are already folded into the resident weights.
    a = jnp.dot(pat_ref[...].astype(mxu_dt), wtop_ref[...],
                preferred_element_type=jnp.float32)        # (TB, 2H)
    c = jnp.dot(gr_ref[...].astype(mxu_dt), wbot_ref[...],
                preferred_element_type=jnp.float32)        # (TB, 2H)

    p = a[:, :H] + bp                                      # p_layer(mean(pattern, 1))
    g = c[:, :H] + bg                                      # mean(g_layer(graph), 1)

    y = (a[:, H:] + c[:, H:]                               # p@(A-C) + g@(B+C) parts of pred_layer1
         + jnp.dot(lens, w1s8, preferred_element_type=jnp.float32)       # rank-1 lens terms + bias
         + jnp.dot((g * p).astype(mxu_dt), wd_ref[...],
                   preferred_element_type=jnp.float32))                  # (g*p) @ D
    y = jnp.maximum(y, 0.0)                                # relu; dropout (p=0 / eval) is identity

    # pred_layer2, emitted lane-dense: batch lands on the lane axis of a (1, TB) row so the output
    # store is an unmasked, contiguous vst (not a masked (TB, 1) column store).
    r_y = lax.dot_general(w2y8, y, _NT_DIMS, preferred_element_type=jnp.float32)      # (8, TB)
    r_l = lax.dot_general(w2s8, lens, _NT_DIMS, preferred_element_type=jnp.float32)   # (8, TB)
    out_ref[...] = (r_y[0:1, :] + r_l[0:1, :]).astype(out_ref.dtype)


@functools.partial(jax.jit, static_argnames=("block_b", "mxu_dtype"))
def mean_predict_net(pattern, pattern_len, graph, graph_len, params, *,
                     block_b=2048, mxu_dtype=jnp.bfloat16):
    """Pallas forward of MeanPredictNet. pattern: [B, Lp, Dp], graph: [B, Lg, Dg]."""
    B, Lp, Dp = pattern.shape
    _, Lg, Dg = graph.shape
    H = params["bp"].shape[0]
    if H < 8:
        raise ValueError("hidden_dim must be >= 8")
    Kp, Kg = Lp * Dp, Lg * Dg

    # --- batch tiling: no wrapper-side padding, partial last block handled by Pallas ---
    TB = _round_up(min(block_b, B), 128)
    if B > 256:                              # give both v7x TensorCores >=1 block when possible
        TB = min(TB, _round_up(pl.cdiv(B, 2), 128))
    if TB >= B:
        TB = B                               # single full-extent block (always a legal shape)
    G = pl.cdiv(B, TB)

    # --- inputs: free reshapes only, native dtype (no pad / copy through HBM) ---
    pat2d = pattern.reshape(B, Kp)
    gr2d = graph.reshape(B, Kg)
    plf = pattern_len.astype(jnp.float32).reshape(B, 1)
    glf = graph_len.astype(jnp.float32).reshape(B, 1)
    lens = jnp.concatenate(
        [plf, glf, 1.0 / plf, 1.0 / glf,
         jnp.ones((B, 1), jnp.float32), jnp.zeros((B, 3), jnp.float32)], axis=1)   # (B, 8)

    # --- fold the module's linear algebra into a few small resident weights ---
    w1t = params["w1"].T.astype(jnp.float32)                  # (4H+4, H)
    A, Bm, C, D = w1t[:H], w1t[H:2 * H], w1t[2 * H:3 * H], w1t[3 * H:4 * H]
    w1s = w1t[4 * H:4 * H + 4]                                # (4, H): plf, glf, 1/plf, 1/glf rows
    AmC, BpC = A - C, Bm + C

    # sequence mean folded into 1/L-scaled tiled weights (exact; biases are seq-constant)
    wp_fold = jnp.tile(params["wp"].T.astype(jnp.float32), (Lp, 1)) / float(Lp)    # (Kp, H)
    wg_fold = jnp.tile(params["wg"].T.astype(jnp.float32), (Lg, 1)) / float(Lg)    # (Kg, H)
    wtop = jnp.concatenate([wp_fold, wp_fold @ AmC], axis=1).astype(mxu_dtype)     # (Kp, 2H)
    wbot = jnp.concatenate([wg_fold, wg_fold @ BpC], axis=1).astype(mxu_dtype)     # (Kg, 2H)
    wd = D.astype(mxu_dtype)                                                       # (H, H)

    b_y = (params["b1"].astype(jnp.float32)
           + params["bp"].astype(jnp.float32) @ AmC
           + params["bg"].astype(jnp.float32) @ BpC)                               # (H,)
    w2t = params["w2"].T.astype(jnp.float32)                  # (H+4, 1)
    w2y = w2t[:H, 0]
    w2s = w2t[H:H + 4, 0]
    b2 = params["b2"].astype(jnp.float32).reshape(())

    consts = jnp.zeros((32, H), jnp.float32)
    consts = consts.at[0].set(params["bp"].astype(jnp.float32))
    consts = consts.at[1].set(params["bg"].astype(jnp.float32))
    consts = consts.at[8:12].set(w1s).at[12].set(b_y)         # lens col 4 is the constant 1.0
    consts = consts.at[16].set(w2y)
    consts = consts.at[24, 0:4].set(w2s).at[24, 4].set(b2)

    # --- resources: generation-aware VMEM limit + scheduler cost hint ---
    in_isz = jnp.dtype(pattern.dtype).itemsize
    gr_isz = jnp.dtype(graph.dtype).itemsize
    w_isz = jnp.dtype(mxu_dtype).itemsize
    step_bytes = TB * (Kp * in_isz + Kg * gr_isz + 8 * 4 + 4)
    weight_bytes = (wtop.size + wbot.size + wd.size) * w_isz + consts.size * 4
    try:
        vmem_cap = int(getattr(pltpu.get_tpu_info(), "vmem_capacity_bytes", 128 << 20))
    except Exception:  # pragma: no cover - conservative fallback
        vmem_cap = 64 << 20
    vmem_limit = int(min(max(2 * step_bytes + 2 * weight_bytes + (4 << 20), 16 << 20),
                         int(vmem_cap * 0.7)))

    flops = int(2 * B * ((Kp + Kg) * 2 * H + 8 * H + H * H + H + 8))
    bytes_accessed = int(B * (Kp * in_isz + Kg * gr_isz + 8 * 4 + 4) + weight_bytes)

    grid_spec = pltpu.PrefetchScalarGridSpec(
        num_scalar_prefetch=0,
        grid=(G,),
        in_specs=[
            pl.BlockSpec((TB, Kp), lambda b: (b, 0)),        # pattern batch block
            pl.BlockSpec((TB, Kg), lambda b: (b, 0)),        # graph batch block
            pl.BlockSpec((TB, 8), lambda b: (b, 0)),         # lens batch block
            pl.BlockSpec((Kp, 2 * H), lambda b: (0, 0)),     # resident weights
            pl.BlockSpec((Kg, 2 * H), lambda b: (0, 0)),
            pl.BlockSpec((H, H), lambda b: (0, 0)),
            pl.BlockSpec((32, H), lambda b: (0, 0)),
        ],
        out_specs=pl.BlockSpec((1, TB), lambda b: (0, b)),   # lane-dense output row
    )

    out = pl.pallas_call(
        mean_predict_kernel,
        out_shape=jax.ShapeDtypeStruct((1, B), jnp.float32),
        grid_spec=grid_spec,
        compiler_params=pltpu.CompilerParams(
            dimension_semantics=("parallel",),
            vmem_limit_bytes=vmem_limit,
        ),
        cost_estimate=pl.CostEstimate(flops=flops, transcendentals=0,
                                      bytes_accessed=bytes_accessed),
    )(pat2d, gr2d, lens, wtop, wbot, wd, consts)

    return out.reshape(B, 1)


def init_params(key, pattern_dim, graph_dim, hidden_dim, *, nontrivial_head=False):
    """Init matching the PyTorch module. The original zero-inits pred_layer2 (output would be
    identically 0); nontrivial_head=True randomizes the head/biases so the numeric checks below
    are meaningful (forward semantics are unchanged)."""
    ks = jax.random.split(key, 8)
    std = 1.0 / (hidden_dim ** 0.5)
    wp = jax.random.normal(ks[0], (hidden_dim, pattern_dim), jnp.float32) * std
    wg = jax.random.normal(ks[1], (hidden_dim, graph_dim), jnp.float32) * std
    w1 = jax.random.normal(ks[2], (hidden_dim, hidden_dim * 4 + 4), jnp.float32) * std
    if nontrivial_head:
        bp = jax.random.normal(ks[3], (hidden_dim,), jnp.float32) * 0.1
        bg = jax.random.normal(ks[4], (hidden_dim,), jnp.float32) * 0.1
        b1 = jax.random.normal(ks[5], (hidden_dim,), jnp.float32) * 0.1
        w2 = jax.random.normal(ks[6], (1, hidden_dim + 4), jnp.float32) * std
        b2 = jax.random.normal(ks[7], (1,), jnp.float32) * 0.1
    else:
        bp = jnp.zeros((hidden_dim,), jnp.float32)
        bg = jnp.zeros((hidden_dim,), jnp.float32)
        b1 = jnp.zeros((hidden_dim,), jnp.float32)
        w2 = jnp.zeros((1, hidden_dim + 4), jnp.float32)
        b2 = jnp.zeros((1,), jnp.float32)
    return dict(wp=wp, bp=bp, wg=wg, bg=bg, w1=w1, b1=b1, w2=w2, b2=b2)


def mean_predict_net_ref(pattern, pattern_len, graph, graph_len, params):
    """Pure-JAX reference mirroring the PyTorch MeanPredictNet.forward."""
    B = pattern.shape[0]
    plf = pattern_len.astype(jnp.float32).reshape(B, 1)
    glf = graph_len.astype(jnp.float32).reshape(B, 1)
    inv_plf, inv_glf = 1.0 / plf, 1.0 / glf
    pat = pattern.astype(jnp.float32)
    gr = graph.astype(jnp.float32)
    p = jnp.mean(pat, axis=1) @ params["wp"].T + params["bp"]
    g = jnp.mean(gr @ params["wg"].T + params["bg"], axis=1)
    x1 = jnp.concatenate([p, g, g - p, g * p, plf, glf, inv_plf, inv_glf], axis=1)
    y = jnp.maximum(x1 @ params["w1"].T + params["b1"], 0.0)
    x2 = jnp.concatenate([y, plf, glf, inv_plf, inv_glf], axis=1)
    return x2 @ params["w2"].T + params["b2"]


if __name__ == "__main__":
    # Full-precision XLA matmuls for the reference / weight folding (the default TPU matmul
    # precision would otherwise dominate the "exact" comparison below).
    jax.config.update("jax_default_matmul_precision", "highest")

    Lp = Lg = 8
    pattern_dim = graph_dim = 16
    hidden_dim = 32

    key = jax.random.PRNGKey(0)
    kp, kg, kparams, kb = jax.random.split(key, 4)
    params = init_params(kparams, pattern_dim, graph_dim, hidden_dim, nontrivial_head=True)

    # --- small spec-sized case (batch = 2) ---
    B = 2
    pattern = jax.random.normal(kp, (B, Lp, pattern_dim), jnp.float32)
    graph = jax.random.normal(kg, (B, Lg, graph_dim), jnp.float32)
    pattern_len = jnp.array([[3.0], [5.0]], jnp.float32)
    graph_len = jnp.array([[7.0], [8.0]], jnp.float32)

    ref = mean_predict_net_ref(pattern, pattern_len, graph, graph_len, params)

    # f32-MXU path: near-exact check against the reference.
    out_f32 = jax.block_until_ready(
        mean_predict_net(pattern, pattern_len, graph, graph_len, params,
                         mxu_dtype=jnp.float32))
    assert out_f32.shape == (B, 1), out_f32.shape
    assert bool(jnp.allclose(out_f32, ref, atol=1e-2, rtol=1e-2)), (out_f32, ref)

    # Default path: bf16 MXU operands, f32 accumulation.
    out_bf16mxu = jax.block_until_ready(
        mean_predict_net(pattern, pattern_len, graph, graph_len, params))
    assert bool(jnp.allclose(out_bf16mxu, ref, atol=8e-2, rtol=8e-2)), (out_bf16mxu, ref)

    # bf16 inputs (native-dtype DMA straight to the MXU).
    out_bf = jax.block_until_ready(
        mean_predict_net(pattern.astype(jnp.bfloat16), pattern_len,
                         graph.astype(jnp.bfloat16), graph_len, params))
    ref_bf = mean_predict_net_ref(pattern.astype(jnp.bfloat16), pattern_len,
                                  graph.astype(jnp.bfloat16), graph_len, params)
    assert bool(jnp.allclose(out_bf, ref_bf, atol=1e-1, rtol=1e-1)), (out_bf, ref_bf)

    # --- multi-block grid with a partial tail block (no wrapper-side padding) ---
    B2 = 300
    k1, k2, k3, k4 = jax.random.split(kb, 4)
    pattern2 = jax.random.normal(k1, (B2, Lp, pattern_dim), jnp.float32)
    graph2 = jax.random.normal(k2, (B2, Lg, graph_dim), jnp.float32)
    pattern_len2 = jax.random.randint(k3, (B2, 1), 1, Lp + 1).astype(jnp.float32)
    graph_len2 = jax.random.randint(k4, (B2, 1), 1, Lg + 1).astype(jnp.float32)
    out2 = jax.block_until_ready(
        mean_predict_net(pattern2, pattern_len2, graph2, graph_len2, params,
                         block_b=128, mxu_dtype=jnp.float32))
    ref2 = mean_predict_net_ref(pattern2, pattern_len2, graph2, graph_len2, params)
    assert out2.shape == (B2, 1), out2.shape
    assert bool(jnp.allclose(out2, ref2, atol=1e-2, rtol=1e-2)), \
        float(jnp.max(jnp.abs(out2 - ref2)))

    print("KERNEL_OK")
</pallas_src>

<mosaic_0001>
module attributes {stable_mosaic.version = 11 : i64} {
  func.func @mean_predict_kernel(%arg0: i32, %arg1: memref<2x128xf32, #tpu.memory_space<vmem>>, %arg2: memref<2x128xf32, #tpu.memory_space<vmem>>, %arg3: memref<2x8xf32, #tpu.memory_space<vmem>>, %arg4: memref<128x64xf32, #tpu.memory_space<vmem>>, %arg5: memref<128x64xf32, #tpu.memory_space<vmem>>, %arg6: memref<32x32xf32, #tpu.memory_space<vmem>>, %arg7: memref<32x32xf32, #tpu.memory_space<vmem>>, %arg8: memref<1x2xf32, #tpu.memory_space<vmem>>) attributes {dimension_semantics = [#tpu.dimension_semantics<parallel>], iteration_bounds = array<i64: 1>, scalar_prefetch = 0 : i64, scratch_operands = 0 : i64, tpu.core_type = #tpu.core_type<tc>, window_params = [{transform_indices = @transform_0, window_bounds = array<i64: 2, 128>}, {transform_indices = @transform_1, window_bounds = array<i64: 2, 128>}, {transform_indices = @transform_2, window_bounds = array<i64: 2, 8>}, {pipeline_mode = #tpu.pipeline_mode<synchronous>, transform_indices = @transform_3, window_bounds = array<i64: 128, 64>}, {pipeline_mode = #tpu.pipeline_mode<synchronous>, transform_indices = @transform_4, window_bounds = array<i64: 128, 64>}, {pipeline_mode = #tpu.pipeline_mode<synchronous>, transform_indices = @transform_5, window_bounds = array<i64: 32, 32>}, {pipeline_mode = #tpu.pipeline_mode<synchronous>, transform_indices = @transform_6, window_bounds = array<i64: 32, 32>}, {transform_indices = @transform_7, window_bounds = array<i64: 1, 2>}]} {
    %c0 = arith.constant 0 : index
    %c0_0 = arith.constant 0 : index
    %0 = vector.load %arg3[%c0, %c0_0] : memref<2x8xf32, #tpu.memory_space<vmem>>, vector<2x8xf32>
    %c0_1 = arith.constant 0 : index
    %c0_2 = arith.constant 0 : index
    %1 = vector.load %arg7[%c0_1, %c0_2] : memref<32x32xf32, #tpu.memory_space<vmem>>, vector<1x32xf32>
    %c1 = arith.constant 1 : index
    %c0_3 = arith.constant 0 : index
    %2 = vector.load %arg7[%c1, %c0_3] : memref<32x32xf32, #tpu.memory_space<vmem>>, vector<1x32xf32>
    %c8 = arith.constant 8 : index
    %c0_4 = arith.constant 0 : index
    %3 = vector.load %arg7[%c8, %c0_4] : memref<32x32xf32, #tpu.memory_space<vmem>>, vector<8x32xf32>
    %c16 = arith.constant 16 : index
    %c0_5 = arith.constant 0 : index
    %4 = vector.load %arg7[%c16, %c0_5] : memref<32x32xf32, #tpu.memory_space<vmem>>, vector<8x32xf32>
    %c24 = arith.constant 24 : index
    %c0_6 = arith.constant 0 : index
    %5 = vector.load %arg7[%c24, %c0_6] : memref<32x32xf32, #tpu.memory_space<vmem>>, vector<8x8xf32>
    %c0_7 = arith.constant 0 : index
    %c0_8 = arith.constant 0 : index
    %6 = vector.load %arg1[%c0_7, %c0_8] : memref<2x128xf32, #tpu.memory_space<vmem>>, vector<2x128xf32>
    %c0_9 = arith.constant 0 : index
    %c0_10 = arith.constant 0 : index
    %7 = vector.load %arg4[%c0_9, %c0_10] : memref<128x64xf32, #tpu.memory_space<vmem>>, vector<128x64xf32>
    %cst = arith.constant dense<0.000000e+00> : vector<2x64xf32>
    %8 = tpu.matmul %6, %7, %cst {dimension_numbers = #tpu.dot_dimension_numbers<[1], [0], [0], [1], [0, 0, 1, 1], [], []>, precision = #tpu.contract_precision<fp32>} : vector<2x128xf32>, vector<128x64xf32>, vector<2x64xf32> -> vector<2x64xf32>
    %c0_11 = arith.constant 0 : index
    %c0_12 = arith.constant 0 : index
    %9 = vector.load %arg2[%c0_11, %c0_12] : memref<2x128xf32, #tpu.memory_space<vmem>>, vector<2x128xf32>
    %c0_13 = arith.constant 0 : index
    %c0_14 = arith.constant 0 : index
    %10 = vector.load %arg5[%c0_13, %c0_14] : memref<128x64xf32, #tpu.memory_space<vmem>>, vector<128x64xf32>
    %cst_15 = arith.constant dense<0.000000e+00> : vector<2x64xf32>
    %11 = tpu.matmul %9, %10, %cst_15 {dimension_numbers = #tpu.dot_dimension_numbers<[1], [0], [0], [1], [0, 0, 1, 1], [], []>, precision = #tpu.contract_precision<fp32>} : vector<2x128xf32>, vector<128x64xf32>, vector<2x64xf32> -> vector<2x64xf32>
    %12 = vector.extract_strided_slice %8 {offsets = [0, 0], sizes = [2, 32], strides = [1, 1]} : vector<2x64xf32> to vector<2x32xf32>
    %13 = vector.broadcast %1 : vector<1x32xf32> to vector<2x32xf32>
    %14 = arith.addf %12, %13 : vector<2x32xf32>
    %15 = vector.extract_strided_slice %11 {offsets = [0, 0], sizes = [2, 32], strides = [1, 1]} : vector<2x64xf32> to vector<2x32xf32>
    %16 = vector.broadcast %2 : vector<1x32xf32> to vector<2x32xf32>
    %17 = arith.addf %15, %16 : vector<2x32xf32>
    %18 = vector.extract_strided_slice %8 {offsets = [0, 32], sizes = [2, 32], strides = [1, 1]} : vector<2x64xf32> to vector<2x32xf32>
    %19 = vector.extract_strided_slice %11 {offsets = [0, 32], sizes = [2, 32], strides = [1, 1]} : vector<2x64xf32> to vector<2x32xf32>
    %20 = arith.addf %18, %19 : vector<2x32xf32>
    %cst_16 = arith.constant dense<0.000000e+00> : vector<2x32xf32>
    %21 = tpu.matmul %0, %3, %cst_16 {dimension_numbers = #tpu.dot_dimension_numbers<[1], [0], [0], [1], [0, 0, 1, 1], [], []>, precision = #tpu.contract_precision<fp32>} : vector<2x8xf32>, vector<8x32xf32>, vector<2x32xf32> -> vector<2x32xf32>
    %22 = arith.addf %20, %21 : vector<2x32xf32>
    %23 = arith.mulf %17, %14 : vector<2x32xf32>
    %c0_17 = arith.constant 0 : index
    %c0_18 = arith.constant 0 : index
    %24 = vector.load %arg6[%c0_17, %c0_18] : memref<32x32xf32, #tpu.memory_space<vmem>>, vector<32x32xf32>
    %cst_19 = arith.constant dense<0.000000e+00> : vector<2x32xf32>
    %25 = tpu.matmul %23, %24, %cst_19 {dimension_numbers = #tpu.dot_dimension_numbers<[1], [0], [0], [1], [0, 0, 1, 1], [], []>, precision = #tpu.contract_precision<fp32>} : vector<2x32xf32>, vector<32x32xf32>, vector<2x32xf32> -> vector<2x32xf32>
    %26 = arith.addf %22, %25 : vector<2x32xf32>
    %cst_20 = arith.constant 0.000000e+00 : f32
    %27 = vector.broadcast %cst_20 : f32 to vector<2x32xf32>
    %28 = arith.maximumf %26, %27 : vector<2x32xf32>
    %cst_21 = arith.constant dense<0.000000e+00> : vector<8x2xf32>
    %29 = tpu.matmul %4, %28, %cst_21 {dimension_numbers = #tpu.dot_dimension_numbers<[1], [1], [0], [0], [0, 0, 1, 0], [], []>, precision = #tpu.contract_precision<fp32>} : vector<8x32xf32>, vector<2x32xf32>, vector<8x2xf32> -> vector<8x2xf32>
    %cst_22 = arith.constant dense<0.000000e+00> : vector<8x2xf32>
    %30 = tpu.matmul %5, %0, %cst_22 {dimension_numbers = #tpu.dot_dimension_numbers<[1], [1], [0], [0], [0, 0, 1, 0], [], []>, precision = #tpu.contract_precision<fp32>} : vector<8x8xf32>, vector<2x8xf32>, vector<8x2xf32> -> vector<8x2xf32>
    %31 = vector.extract_strided_slice %29 {offsets = [0, 0], sizes = [1, 2], strides = [1, 1]} : vector<8x2xf32> to vector<1x2xf32>
    %32 = vector.extract_strided_slice %30 {offsets = [0, 0], sizes = [1, 2], strides = [1, 1]} : vector<8x2xf32> to vector<1x2xf32>
    %33 = arith.addf %31, %32 : vector<1x2xf32>
    %c0_23 = arith.constant 0 : index
    %c0_24 = arith.constant 0 : index
    %34 = vector.load %arg8[%c0_23, %c0_24] : memref<1x2xf32, #tpu.memory_space<vmem>>, vector<1x2xf32>
    tpu.vector_store %arg8[%c0_23, %c0_24], %33 {strides = array<i32>} : memref<1x2xf32, #tpu.memory_space<vmem>>, vector<1x2xf32>,
    return
  }
  func.func @transform_0(%arg0: i32) -> (i32, i32) {
    %c0_i32 = arith.constant 0 : i32
    %c0_i32_0 = arith.constant 0 : i32
    return %arg0, %c0_i32 : i32, i32
  }
  func.func @transform_1(%arg0: i32) -> (i32, i32) {
    %c0_i32 = arith.constant 0 : i32
    %c0_i32_0 = arith.constant 0 : i32
    return %arg0, %c0_i32 : i32, i32
  }
  func.func @transform_2(%arg0: i32) -> (i32, i32) {
    %c0_i32 = arith.constant 0 : i32
    %c0_i32_0 = arith.constant 0 : i32
    return %arg0, %c0_i32 : i32, i32
  }
  func.func @transform_3(%arg0: i32) -> (i32, i32) {
    %c0_i32 = arith.constant 0 : i32
    %c0_i32_0 = arith.constant 0 : i32
    %c0_i32_1 = arith.constant 0 : i32
    return %c0_i32, %c0_i32_0 : i32, i32
  }
  func.func @transform_4(%arg0: i32) -> (i32, i32) {
    %c0_i32 = arith.constant 0 : i32
    %c0_i32_0 = arith.constant 0 : i32
    %c0_i32_1 = arith.constant 0 : i32
    return %c0_i32, %c0_i32_0 : i32, i32
  }
  func.func @transform_5(%arg0: i32) -> (i32, i32) {
    %c0_i32 = arith.constant 0 : i32
    %c0_i32_0 = arith.constant 0 : i32
    %c0_i32_1 = arith.constant 0 : i32
    return %c0_i32, %c0_i32_0 : i32, i32
  }
  func.func @transform_6(%arg0: i32) -> (i32, i32) {
    %c0_i32 = arith.constant 0 : i32
    %c0_i32_0 = arith.constant 0 : i32
    %c0_i32_1 = arith.constant 0 : i32
    return %c0_i32, %c0_i32_0 : i32, i32
  }
  func.func @transform_7(%arg0: i32) -> (i32, i32) {
    %c0_i32 = arith.constant 0 : i32
    %c0_i32_0 = arith.constant 0 : i32
    return %c0_i32, %arg0 : i32, i32
  }
}

</mosaic_0001>

<llo_original>
// kernel: mean_predict_net.1
$region0: #{mean_predict_net.1}
  #allocation0 [shape = 'u32[]', space=smem, size = 0x4, offset = 0x4, fixed_abs, tag = 'smem constant byte address 0x4 - core index']
  #allocation1 [shape = 'u32[144,128]{1,0:T(1,128)}', space=vmem, size = 0x12000, scoped, tag = 'internal scratch']
  %s0 = inlined_call_operand.vmem [shape: f32[2,128], index: 0, kind: input, shape index: {}]
  %s1 = inlined_call_operand.vmem [shape: f32[2,128], index: 1, kind: input, shape index: {}]
  %s2 = inlined_call_operand.vmem [shape: f32[2,8], index: 2, kind: input, shape index: {}]
  %s3 = inlined_call_operand.vmem [shape: f32[128,64], index: 3, kind: input, shape index: {}]
  %s4 = inlined_call_operand.vmem [shape: f32[128,64], index: 4, kind: input, shape index: {}]
  %s5 = inlined_call_operand.vmem [shape: f32[32,32], index: 5, kind: input, shape index: {}]
  %s6 = inlined_call_operand.vmem [shape: f32[32,32], index: 6, kind: input, shape index: {}]
  %s7 = inlined_call_operand.hbm [shape: f32[1,2], index: 7, kind: output, shape index: {}]
  %s8 = sld [smem:[#allocation0]]
  $region38: #{mean_predict_net.1} parent=0
    _
  %s10 = ssub.s32 1, %s8
  %s11 = scalar_select 0, %s10, %s8
  $region1: #{mean_predict_net.1} parent=0
    #allocation2 [shape = 'u8[512]{0}', space=vmem, size = 0x400, scoped, tag = 'output window, operand 0, single buffered']
    #allocation3 [shape = 's32[1]{0}', space=sflag, size = 0x4, scoped, tag = 'scoped memory for mean_predict_net.1']
    %12 = vsyncpa [#allocation3], 0
    // Predicated region
    $region2: #{mean_predict_net.1} parent=1 // pred_check
      _
    $region3: #{mean_predict_net.1} parent=1 // pred_check_branch
      %14 = sbr.rel (0) target = $region5
    $region4: #{mean_predict_net.1} parent=1 // pred_region
      _
    $region5: #{mean_predict_net.1} parent=1 // pred_fallthru
      _
    // Predicated region
    $region6: #{mean_predict_net.1} parent=1 // pred_check
      _
    $region7: #{mean_predict_net.1} parent=1 // pred_check_branch
      %16 = sbr.rel (0) target = $region9
    $region8: #{mean_predict_net.1} parent=1 // pred_region
      _
    $region9: #{mean_predict_net.1} parent=1 // pred_fallthru
      _
    // Predicated region
    $region10: #{mean_predict_net.1} parent=1 // pred_check
      _
    $region11: #{mean_predict_net.1} parent=1 // pred_check_branch
      %18 = sbr.rel (0) target = $region13
    $region12: #{mean_predict_net.1} parent=1 // pred_region
      _
    $region13: #{mean_predict_net.1} parent=1 // pred_fallthru
      _
    // Predicated region
    $region14: #{mean_predict_net.1} parent=1 // pred_check
      _
    $region15: #{mean_predict_net.1} parent=1 // pred_check_branch
      %20 = sbr.rel (0) target = $region17
    $region16: #{mean_predict_net.1} parent=1 // pred_region
      _
    $region17: #{mean_predict_net.1} parent=1 // pred_fallthru
      _
    // Predicated region
    $region18: #{mean_predict_net.1} parent=1 // pred_check
      _
    $region19: #{mean_predict_net.1} parent=1 // pred_check_branch
      %22 = sbr.rel (0) target = $region21
    $region20: #{mean_predict_net.1} parent=1 // pred_region
      _
    $region21: #{mean_predict_net.1} parent=1 // pred_fallthru
      _
    // Predicated region
    $region22: #{mean_predict_net.1} parent=1 // pred_check
      _
    $region23: #{mean_predict_net.1} parent=1 // pred_check_branch
      %24 = sbr.rel (0) target = $region25
    $region24: #{mean_predict_net.1} parent=1 // pred_region
      _
    $region25: #{mean_predict_net.1} parent=1 // pred_fallthru
      _
    // Predicated region
    $region26: #{mean_predict_net.1} parent=1 // pred_check
      _
    $region27: #{mean_predict_net.1} parent=1 // pred_check_branch
      %26 = sbr.rel (0) target = $region29
    $region28: #{mean_predict_net.1} parent=1 // pred_region
      _
    $region29: #{mean_predict_net.1} parent=1 // pred_fallthru
      _
    %v27 = vld [vmem:[%s2] sm:$0x3]
    %v28 = vld [vmem:[%s6] sm:$0x1]
    %v29 = vld [vmem:[%s6 + $0x1] sm:$0x1]
    %v30 = vld [vmem:[%s6 + $0x8] sm:$0xff]
    %v31 = vld [vmem:[%s6 + $0x10] sm:$0xff]
    %v32 = vld [vmem:[%s6 + $0x18] sm:$0xff]
    %v33 = vld [vmem:[%s0] sm:$0x3]
    %v34 = vld [vmem:[%s3] sm:$0xff]
    %v35 = vld [vmem:[%s3 + $0x8] sm:$0xff]
    %v36 = vld [vmem:[%s3 + $0x10] sm:$0xff]
    %v37 = vld [vmem:[%s3 + $0x18] sm:$0xff]
    %v38 = vld [vmem:[%s3 + $0x20] sm:$0xff]
    %v39 = vld [vmem:[%s3 + $0x28] sm:$0xff]
    %v40 = vld [vmem:[%s3 + $0x30] sm:$0xff]
    %v41 = vld [vmem:[%s3 + $0x38] sm:$0xff]
    %v42 = vld [vmem:[%s3 + $0x40] sm:$0xff]
    %v43 = vld [vmem:[%s3 + $0x48] sm:$0xff]
    %v44 = vld [vmem:[%s3 + $0x50] sm:$0xff]
    %v45 = vld [vmem:[%s3 + $0x58] sm:$0xff]
    %v46 = vld [vmem:[%s3 + $0x60] sm:$0xff]
    %v47 = vld [vmem:[%s3 + $0x68] sm:$0xff]
    %v48 = vld [vmem:[%s3 + $0x70] sm:$0xff]
    %v49 = vld [vmem:[%s3 + $0x78] sm:$0xff]
    %50 = vmatprep.subr.mxu0 0.0
    %v51 = vand.u32 %v34, 4294901760
    %52 = vmatpush1.msra.mxu0 %v51
    %53 = vmatprep.subr.mxu0 0.0
    %v54 = vand.u32 %v35, 4294901760
    %55 = vmatpush1.msra.mxu0 %v54
    %56 = vmatprep.subr.mxu0 0.0
    %v57 = vand.u32 %v36, 4294901760
    %58 = vmatpush1.msra.mxu0 %v57
    %59 = vmatprep.subr.mxu0 0.0
    %v60 = vand.u32 %v37, 4294901760
    %61 = vmatpush1.msra.mxu0 %v60
    %62 = vmatprep.subr.mxu0 0.0
    %v63 = vand.u32 %v38, 4294901760
    %64 = vmatpush1.msra.mxu0 %v63
    %65 = vmatprep.subr.mxu0 0.0
    %v66 = vand.u32 %v39, 4294901760
    %67 = vmatpush1.msra.mxu0 %v66
    %68 = vmatprep.subr.mxu0 0.0
    %v69 = vand.u32 %v40, 4294901760
    %70 = vmatpush1.msra.mxu0 %v69
    %71 = vmatprep.subr.mxu0 0.0
    %v72 = vand.u32 %v41, 4294901760
    %73 = vmatpush1.msra.mxu0 %v72
    %74 = vmatprep.subr.mxu0 0.0
    %v75 = vand.u32 %v42, 4294901760
    %76 = vmatpush1.msra.mxu0 %v75
    %77 = vmatprep.subr.mxu0 0.0
    %v78 = vand.u32 %v43, 4294901760
    %79 = vmatpush1.msra.mxu0 %v78
    %80 = vmatprep.subr.mxu0 0.0
    %v81 = vand.u32 %v44, 4294901760
    %82 = vmatpush1.msra.mxu0 %v81
    %83 = vmatprep.subr.mxu0 0.0
    %v84 = vand.u32 %v45, 4294901760
    %85 = vmatpush1.msra.mxu0 %v84
    %86 = vmatprep.subr.mxu0 0.0
    %v87 = vand.u32 %v46, 4294901760
    %88 = vmatpush1.msra.mxu0 %v87
    %89 = vmatprep.subr.mxu0 0.0
    %v90 = vand.u32 %v47, 4294901760
    %91 = vmatpush1.msra.mxu0 %v90
    %92 = vmatprep.subr.mxu0 0.0
    %v93 = vand.u32 %v48, 4294901760
    %94 = vmatpush1.msra.mxu0 %v93
    %95 = vmatprep.subr.mxu0 0.0
    %v96 = vand.u32 %v49, 4294901760
    %97 = vmatpush1.msra.mxu0 %v96
    %98 = vmatprep.subr.mxu0 0.0
    %99 = vmatpush1.msra.mxu0 0.0
    %100 = vmatprep.subr.mxu0 0.0
    %101 = vmatpush1.msra.mxu0 0.0
    %102 = vmatprep.subr.mxu0 0.0
    %103 = vmatpush1.msra.mxu0 0.0
    %104 = vmatprep.subr.mxu0 0.0
    %105 = vmatpush1.msra.mxu0 0.0
    %106 = vmatprep.subr.mxu0 0.0
    %107 = vmatpush1.msra.mxu0 0.0
    %108 = vmatprep.subr.mxu0 0.0
    %109 = vmatpush1.msra.mxu0 0.0
    %110 = vmatprep.subr.mxu0 0.0
    %111 = vmatpush1.msra.mxu0 0.0
    %112 = vmatprep.subr.mxu0 0.0
    %113 = vmatpush1.msra.mxu0 0.0
    %114 = vmatprep.subr.mxu0 0.0
    %115 = vmatpush1.msra.mxu0 0.0
    %116 = vmatprep.subr.mxu0 0.0
    %117 = vmatpush1.msra.mxu0 0.0
    %118 = vmatprep.subr.mxu0 0.0
    %119 = vmatpush1.msra.mxu0 0.0
    %120 = vmatprep.subr.mxu0 0.0
    %121 = vmatpush1.msra.mxu0 0.0
    %122 = vmatprep.subr.mxu0 0.0
    %123 = vmatpush1.msra.mxu0 0.0
    %124 = vmatprep.subr.mxu0 0.0
    %125 = vmatpush1.msra.mxu0 0.0
    %126 = vmatprep.subr.mxu0 0.0
    %127 = vmatpush1.msra.mxu0 0.0
    %128 = vmatprep.subr.mxu0 0.0
    %129 = vmatpush1.msra.mxu0 0.0
    %130 = vmatprep.mubr.f32.mxu0 0.0
    %v131 = vand.u32 %v33, 4294901760
    %v132 = vsub.f32 %v33, %v131
    %v133 = vand.u32 %v132, 4294901760
    %v134 = vsub.f32 %v132, %v133
    %v135 = vand.u32 %v134, 4294901760
    %136 = vmatmul.mubr.f32.gmra.mrb[0].mxu0 %v135
    %v137 = vpop.f32.mrb[0].mxu0
    %v138 = vadd.f32 0.0, %v137
    %v139 = vpop.f32.mrb[0].mxu0
    %140 = vdwg.mxu0
    %141 = vmatprep.subr.mxu0 0.0
    %v142 = vand.u32 %v34, 4294901760
    %v143 = vsub.f32 %v34, %v142
    %v144 = vand.u32 %v143, 4294901760
    %v145 = vsub.f32 %v143, %v144
    %v146 = vand.u32 %v145, 4294901760
    %147 = vmatpush1.msra.mxu0 %v146
    %148 = vmatprep.subr.mxu0 0.0
    %v149 = vand.u32 %v35, 4294901760
    %v150 = vsub.f32 %v35, %v149
    %v151 = vand.u32 %v150, 4294901760
    %v152 = vsub.f32 %v150, %v151
    %v153 = vand.u32 %v152, 4294901760
    %154 = vmatpush1.msra.mxu0 %v153
    %155 = vmatprep.subr.mxu0 0.0
    %v156 = vand.u32 %v36, 4294901760
    %v157 = vsub.f32 %v36, %v156
    %v158 = vand.u32 %v157, 4294901760
    %v159 = vsub.f32 %v157, %v158
    %v160 = vand.u32 %v159, 4294901760
    %161 = vmatpush1.msra.mxu0 %v160
    %162 = vmatprep.subr.mxu0 0.0
    %v163 = vand.u32 %v37, 4294901760
    %v164 = vsub.f32 %v37, %v163
    %v165 = vand.u32 %v164, 4294901760
    %v166 = vsub.f32 %v164, %v165
    %v167 = vand.u32 %v166, 4294901760
    %168 = vmatpush1.msra.mxu0 %v167
    %169 = vmatprep.subr.mxu0 0.0
    %v170 = vand.u32 %v38, 4294901760
    %v171 = vsub.f32 %v38, %v170
    %v172 = vand.u32 %v171, 4294901760
    %v173 = vsub.f32 %v171, %v172
    %v174 = vand.u32 %v173, 4294901760
    %175 = vmatpush1.msra.mxu0 %v174
    %176 = vmatprep.subr.mxu0 0.0
    %v177 = vand.u32 %v39, 4294901760
    %v178 = vsub.f32 %v39, %v177
    %v179 = vand.u32 %v178, 4294901760
    %v180 = vsub.f32 %v178, %v179
    %v181 = vand.u32 %v180, 4294901760
    %182 = vmatpush1.msra.mxu0 %v181
    %183 = vmatprep.subr.mxu0 0.0
    %v184 = vand.u32 %v40, 4294901760
    %v185 = vsub.f32 %v40, %v184
    %v186 = vand.u32 %v185, 4294901760
    %v187 = vsub.f32 %v185, %v186
    %v188 = vand.u32 %v187, 4294901760
    %189 = vmatpush1.msra.mxu0 %v188
    %190 = vmatprep.subr.mxu0 0.0
    %v191 = vand.u32 %v41, 4294901760
    %v192 = vsub.f32 %v41, %v191
    %v193 = vand.u32 %v192, 4294901760
    %v194 = vsub.f32 %v192, %v193
    %v195 = vand.u32 %v194, 4294901760
    %196 = vmatpush1.msra.mxu0 %v195
    %197 = vmatprep.subr.mxu0 0.0
    %v198 = vand.u32 %v42, 4294901760
    %v199 = vsub.f32 %v42, %v198
    %v200 = vand.u32 %v199, 4294901760
    %v201 = vsub.f32 %v199, %v200
    %v202 = vand.u32 %v201, 4294901760
    %203 = vmatpush1.msra.mxu0 %v202
    %204 = vmatprep.subr.mxu0 0.0
    %v205 = vand.u32 %v43, 4294901760
    %v206 = vsub.f32 %v43, %v205
    %v207 = vand.u32 %v206, 4294901760
    %v208 = vsub.f32 %v206, %v207
    %v209 = vand.u32 %v208, 4294901760
    %210 = vmatpush1.msra.mxu0 %v209
    %211 = vmatprep.subr.mxu0 0.0
    %v212 = vand.u32 %v44, 4294901760
    %v213 = vsub.f32 %v44, %v212
    %v214 = vand.u32 %v213, 4294901760
    %v215 = vsub.f32 %v213, %v214
    %v216 = vand.u32 %v215, 4294901760
    %217 = vmatpush1.msra.mxu0 %v216
    %218 = vmatprep.subr.mxu0 0.0
    %v219 = vand.u32 %v45, 4294901760
    %v220 = vsub.f32 %v45, %v219
    %v221 = vand.u32 %v220, 4294901760
    %v222 = vsub.f32 %v220, %v221
    %v223 = vand.u32 %v222, 4294901760
    %224 = vmatpush1.msra.mxu0 %v223
    %225 = vmatprep.subr.mxu0 0.0
    %v226 = vand.u32 %v46, 4294901760
    %v227 = vsub.f32 %v46, %v226
    %v228 = vand.u32 %v227, 4294901760
    %v229 = vsub.f32 %v227, %v228
    %v230 = vand.u32 %v229, 4294901760
    %231 = vmatpush1.msra.mxu0 %v230
    %232 = vmatprep.subr.mxu0 0.0
    %v233 = vand.u32 %v47, 4294901760
    %v234 = vsub.f32 %v47, %v233
    %v235 = vand.u32 %v234, 4294901760
    %v236 = vsub.f32 %v234, %v235
    %v237 = vand.u32 %v236, 4294901760
    %238 = vmatpush1.msra.mxu0 %v237
    %239 = vmatprep.subr.mxu0 0.0
    %v240 = vand.u32 %v48, 4294901760
    %v241 = vsub.f32 %v48, %v240
    %v242 = vand.u32 %v241, 4294901760
    %v243 = vsub.f32 %v241, %v242
    %v244 = vand.u32 %v243, 4294901760
    %245 = vmatpush1.msra.mxu0 %v244
    %246 = vmatprep.subr.mxu0 0.0
    %v247 = vand.u32 %v49, 4294901760
    %v248 = vsub.f32 %v49, %v247
    %v249 = vand.u32 %v248, 4294901760
    %v250 = vsub.f32 %v248, %v249
    %v251 = vand.u32 %v250, 4294901760
    %252 = vmatpush1.msra.mxu0 %v251
    %253 = vmatprep.subr.mxu0 0.0
    %254 = vmatpush1.msra.mxu0 0.0
    %255 = vmatprep.subr.mxu0 0.0
    %256 = vmatpush1.msra.mxu0 0.0
    %257 = vmatprep.subr.mxu0 0.0
    %258 = vmatpush1.msra.mxu0 0.0
    %259 = vmatprep.subr.mxu0 0.0
    %260 = vmatpush1.msra.mxu0 0.0
    %261 = vmatprep.subr.mxu0 0.0
    %262 = vmatpush1.msra.mxu0 0.0
    %263 = vmatprep.subr.mxu0 0.0
    %264 = vmatpush1.msra.mxu0 0.0
    %265 = vmatprep.subr.mxu0 0.0
    %266 = vmatpush1.msra.mxu0 0.0
    %267 = vmatprep.subr.mxu0 0.0
    %268 = vmatpush1.msra.mxu0 0.0
    %269 = vmatprep.subr.mxu0 0.0
    %270 = vmatpush1.msra.mxu0 0.0
    %271 = vmatprep.subr.mxu0 0.0
    %272 = vmatpush1.msra.mxu0 0.0
    %273 = vmatprep.subr.mxu0 0.0
    %274 = vmatpush1.msra.mxu0 0.0
    %275 = vmatprep.subr.mxu0 0.0
    %276 = vmatpush1.msra.mxu0 0.0
    %277 = vmatprep.subr.mxu0 0.0
    %278 = vmatpush1.msra.mxu0 0.0
    %279 = vmatprep.subr.mxu0 0.0
    %280 = vmatpush1.msra.mxu0 0.0
    %281 = vmatprep.subr.mxu0 0.0
    %282 = vmatpush1.msra.mxu0 0.0
    %283 = vmatprep.subr.mxu0 0.0
    %284 = vmatpush1.msra.mxu0 0.0
    %285 = vmatprep.mubr.f32.mxu0 0.0
    %v286 = vand.u32 %v33, 4294901760
    %287 = vmatmul.mubr.f32.gmra.mrb[0].mxu0 %v286
    %v288 = vpop.f32.mrb[0].mxu0
    %v289 = vadd.f32 %v138, %v288
    %v290 = vpop.f32.mrb[0].mxu0
    %291 = vdwg.mxu0
    %292 = vmatprep.subr.mxu0 0.0
    %v293 = vand.u32 %v34, 4294901760
    %v294 = vsub.f32 %v34, %v293
    %295 = vmatpush1.msra.mxu0 %v294
    %296 = vmatprep.subr.mxu0 0.0
    %v297 = vand.u32 %v35, 4294901760
    %v298 = vsub.f32 %v35, %v297
    %299 = vmatpush1.msra.mxu0 %v298
    %300 = vmatprep.subr.mxu0 0.0
    %v301 = vand.u32 %v36, 4294901760
    %v302 = vsub.f32 %v36, %v301
    %303 = vmatpush1.msra.mxu0 %v302
    %304 = vmatprep.subr.mxu0 0.0
    %v305 = vand.u32 %v37, 4294901760
    %v306 = vsub.f32 %v37, %v305
    %307 = vmatpush1.msra.mxu0 %v306
    %308 = vmatprep.subr.mxu0 0.0
    %v309 = vand.u32 %v38, 4294901760
    %v310 = vsub.f32 %v38, %v309
    %311 = vmatpush1.msra.mxu0 %v310
    %312 = vmatprep.subr.mxu0 0.0
    %v313 = vand.u32 %v39, 4294901760
    %v314 = vsub.f32 %v39, %v313
    %315 = vmatpush1.msra.mxu0 %v314
    %316 = vmatprep.subr.mxu0 0.0
    %v317 = vand.u32 %v40, 4294901760
    %v318 = vsub.f32 %v40, %v317
    %319 = vmatpush1.msra.mxu0 %v318
    %320 = vmatprep.subr.mxu0 0.0
    %v321 = vand.u32 %v41, 4294901760
    %v322 = vsub.f32 %v41, %v321
    %323 = vmatpush1.msra.mxu0 %v322
    %324 = vmatprep.subr.mxu0 0.0
    %v325 = vand.u32 %v42, 4294901760
    %v326 = vsub.f32 %v42, %v325
    %327 = vmatpush1.msra.mxu0 %v326
    %328 = vmatprep.subr.mxu0 0.0
    %v329 = vand.u32 %v43, 4294901760
    %v330 = vsub.f32 %v43, %v329
    %331 = vmatpush1.msra.mxu0 %v330
    %332 = vmatprep.subr.mxu0 0.0
    %v333 = vand.u32 %v44, 4294901760
    %v334 = vsub.f32 %v44, %v333
    %335 = vmatpush1.msra.mxu0 %v334
    %336 = vmatprep.subr.mxu0 0.0
    %v337 = vand.u32 %v45, 4294901760
    %v338 = vsub.f32 %v45, %v337
    %339 = vmatpush1.msra.mxu0 %v338
    %340 = vmatprep.subr.mxu0 0.0
    %v341 = vand.u32 %v46, 4294901760
    %v342 = vsub.f32 %v46, %v341
    %343 = vmatpush1.msra.mxu0 %v342
    %344 = vmatprep.subr.mxu0 0.0
    %v345 = vand.u32 %v47, 4294901760
    %v346 = vsub.f32 %v47, %v345
    %347 = vmatpush1.msra.mxu0 %v346
    %348 = vmatprep.subr.mxu0 0.0
    %v349 = vand.u32 %v48, 4294901760
    %v350 = vsub.f32 %v48, %v349
    %351 = vmatpush1.msra.mxu0 %v350
    %352 = vmatprep.subr.mxu0 0.0
    %v353 = vand.u32 %v49, 4294901760
    %v354 = vsub.f32 %v49, %v353
    %355 = vmatpush1.msra.mxu0 %v354
    %356 = vmatprep.subr.mxu0 0.0
    %357 = vmatpush1.msra.mxu0 0.0
    %358 = vmatprep.subr.mxu0 0.0
    %359 = vmatpush1.msra.mxu0 0.0
    %360 = vmatprep.subr.mxu0 0.0
    %361 = vmatpush1.msra.mxu0 0.0
    %362 = vmatprep.subr.mxu0 0.0
    %363 = vmatpush1.msra.mxu0 0.0
    %364 = vmatprep.subr.mxu0 0.0
    %365 = vmatpush1.msra.mxu0 0.0
    %366 = vmatprep.subr.mxu0 0.0
    %367 = vmatpush1.msra.mxu0 0.0
    %368 = vmatprep.subr.mxu0 0.0
    %369 = vmatpush1.msra.mxu0 0.0
    %370 = vmatprep.subr.mxu0 0.0
    %371 = vmatpush1.msra.mxu0 0.0
    %372 = vmatprep.subr.mxu0 0.0
    %373 = vmatpush1.msra.mxu0 0.0
    %374 = vmatprep.subr.mxu0 0.0
    %375 = vmatpush1.msra.mxu0 0.0
    %376 = vmatprep.subr.mxu0 0.0
    %377 = vmatpush1.msra.mxu0 0.0
    %378 = vmatprep.subr.mxu0 0.0
    %379 = vmatpush1.msra.mxu0 0.0
    %380 = vmatprep.subr.mxu0 0.0
    %381 = vmatpush1.msra.mxu0 0.0
    %382 = vmatprep.subr.mxu0 0.0
    %383 = vmatpush1.msra.mxu0 0.0
    %384 = vmatprep.subr.mxu0 0.0
    %385 = vmatpush1.msra.mxu0 0.0
    %386 = vmatprep.subr.mxu0 0.0
    %387 = vmatpush1.msra.mxu0 0.0
    %388 = vmatprep.mubr.f32.mxu0 0.0
    %v389 = vand.u32 %v33, 4294901760
    %v390 = vsub.f32 %v33, %v389
    %391 = vmatmul.mubr.f32.gmra.mrb[0].mxu0 %v390
    %v392 = vpop.f32.mrb[0].mxu0
    %v393 = vadd.f32 %v289, %v392
    %v394 = vpop.f32.mrb[0].mxu0
    %395 = vdwg.mxu0
    %396 = vmatprep.subr.mxu0 0.0
    %v397 = vand.u32 %v34, 4294901760
    %398 = vmatpush1.msra.mxu0 %v397
    %399 = vmatprep.subr.mxu0 0.0
    %v400 = vand.u32 %v35, 4294901760
    %401 = vmatpush1.msra.mxu0 %v400
    %402 = vmatprep.subr.mxu0 0.0
    %v403 = vand.u32 %v36, 4294901760
    %404 = vmatpush1.msra.mxu0 %v403
    %405 = vmatprep.subr.mxu0 0.0
    %v406 = vand.u32 %v37, 4294901760
    %407 = vmatpush1.msra.mxu0 %v406
    %408 = vmatprep.subr.mxu0 0.0
    %v409 = vand.u32 %v38, 4294901760
    %410 = vmatpush1.msra.mxu0 %v409
    %411 = vmatprep.subr.mxu0 0.0
    %v412 = vand.u32 %v39, 4294901760
    %413 = vmatpush1.msra.mxu0 %v412
    %414 = vmatprep.subr.mxu0 0.0
    %v415 = vand.u32 %v40, 4294901760
    %416 = vmatpush1.msra.mxu0 %v415
    %417 = vmatprep.subr.mxu0 0.0
    %v418 = vand.u32 %v41, 4294901760
    %419 = vmatpush1.msra.mxu0 %v418
    %420 = vmatprep.subr.mxu0 0.0
    %v421 = vand.u32 %v42, 4294901760
    %422 = vmatpush1.msra.mxu0 %v421
    %423 = vmatprep.subr.mxu0 0.0
    %v424 = vand.u32 %v43, 4294901760
    %425 = vmatpush1.msra.mxu0 %v424
    %426 = vmatprep.subr.mxu0 0.0
    %v427 = vand.u32 %v44, 4294901760
    %428 = vmatpush1.msra.mxu0 %v427
    %429 = vmatprep.subr.mxu0 0.0
    %v430 = vand.u32 %v45, 4294901760
    %431 = vmatpush1.msra.mxu0 %v430
    %432 = vmatprep.subr.mxu0 0.0
    %v433 = vand.u32 %v46, 4294901760
    %434 = vmatpush1.msra.mxu0 %v433
    %435 = vmatprep.subr.mxu0 0.0
    %v436 = vand.u32 %v47, 4294901760
    %437 = vmatpush1.msra.mxu0 %v436
    %438 = vmatprep.subr.mxu0 0.0
    %v439 = vand.u32 %v48, 4294901760
    %440 = vmatpush1.msra.mxu0 %v439
    %441 = vmatprep.subr.mxu0 0.0
    %v442 = vand.u32 %v49, 4294901760
    %443 = vmatpush1.msra.mxu0 %v442
    %444 = vmatprep.subr.mxu0 0.0
    %445 = vmatpush1.msra.mxu0 0.0
    %446 = vmatprep.subr.mxu0 0.0
    %447 = vmatpush1.msra.mxu0 0.0
    %448 = vmatprep.subr.mxu0 0.0
    %449 = vmatpush1.msra.mxu0 0.0
    %450 = vmatprep.subr.mxu0 0.0
    %451 = vmatpush1.msra.mxu0 0.0
    %452 = vmatprep.subr.mxu0 0.0
    %453 = vmatpush1.msra.mxu0 0.0
    %454 = vmatprep.subr.mxu0 0.0
    %455 = vmatpush1.msra.mxu0 0.0
    %456 = vmatprep.subr.mxu0 0.0
    %457 = vmatpush1.msra.mxu0 0.0
    %458 = vmatprep.subr.mxu0 0.0
    %459 = vmatpush1.msra.mxu0 0.0
    %460 = vmatprep.subr.mxu0 0.0
    %461 = vmatpush1.msra.mxu0 0.0
    %462 = vmatprep.subr.mxu0 0.0
    %463 = vmatpush1.msra.mxu0 0.0
    %464 = vmatprep.subr.mxu0 0.0
    %465 = vmatpush1.msra.mxu0 0.0
    %466 = vmatprep.subr.mxu0 0.0
    %467 = vmatpush1.msra.mxu0 0.0
    %468 = vmatprep.subr.mxu0 0.0
    %469 = vmatpush1.msra.mxu0 0.0
    %470 = vmatprep.subr.mxu0 0.0
    %471 = vmatpush1.msra.mxu0 0.0
    %472 = vmatprep.subr.mxu0 0.0
    %473 = vmatpush1.msra.mxu0 0.0
    %474 = vmatprep.subr.mxu0 0.0
    %475 = vmatpush1.msra.mxu0 0.0
    %476 = vmatprep.mubr.f32.mxu0 0.0
    %v477 = vand.u32 %v33, 4294901760
    %v478 = vsub.f32 %v33, %v477
    %v479 = vand.u32 %v478, 4294901760
    %480 = vmatmul.mubr.f32.gmra.mrb[0].mxu0 %v479
    %v481 = vpop.f32.mrb[0].mxu0
    %v482 = vadd.f32 %v393, %v481
    %v483 = vpop.f32.mrb[0].mxu0
    %484 = vdwg.mxu0
    %485 = vmatprep.subr.mxu0 0.0
    %v486 = vand.u32 %v34, 4294901760
    %v487 = vsub.f32 %v34, %v486
    %v488 = vand.u32 %v487, 4294901760
    %489 = vmatpush1.msra.mxu0 %v488
    %490 = vmatprep.subr.mxu0 0.0
    %v491 = vand.u32 %v35, 4294901760
    %v492 = vsub.f32 %v35, %v491
    %v493 = vand.u32 %v492, 4294901760
    %494 = vmatpush1.msra.mxu0 %v493
    %495 = vmatprep.subr.mxu0 0.0
    %v496 = vand.u32 %v36, 4294901760
    %v497 = vsub.f32 %v36, %v496
    %v498 = vand.u32 %v497, 4294901760
    %499 = vmatpush1.msra.mxu0 %v498
    %500 = vmatprep.subr.mxu0 0.0
    %v501 = vand.u32 %v37, 4294901760
    %v502 = vsub.f32 %v37, %v501
    %v503 = vand.u32 %v502, 4294901760
    %504 = vmatpush1.msra.mxu0 %v503
    %505 = vmatprep.subr.mxu0 0.0
    %v506 = vand.u32 %v38, 4294901760
    %v507 = vsub.f32 %v38, %v506
    %v508 = vand.u32 %v507, 4294901760
    %509 = vmatpush1.msra.mxu0 %v508
    %510 = vmatprep.subr.mxu0 0.0
    %v511 = vand.u32 %v39, 4294901760
    %v512 = vsub.f32 %v39, %v511
    %v513 = vand.u32 %v512, 4294901760
    %514 = vmatpush1.msra.mxu0 %v513
    %515 = vmatprep.subr.mxu0 0.0
    %v516 = vand.u32 %v40, 4294901760
    %v517 = vsub.f32 %v40, %v516
    %v518 = vand.u32 %v517, 4294901760
    %519 = vmatpush1.msra.mxu0 %v518
    %520 = vmatprep.subr.mxu0 0.0
    %v521 = vand.u32 %v41, 4294901760
    %v522 = vsub.f32 %v41, %v521
    %v523 = vand.u32 %v522, 4294901760
    %524 = vmatpush1.msra.mxu0 %v523
    %525 = vmatprep.subr.mxu0 0.0
    %v526 = vand.u32 %v42, 4294901760
    %v527 = vsub.f32 %v42, %v526
    %v528 = vand.u32 %v527, 4294901760
    %529 = vmatpush1.msra.mxu0 %v528
    %530 = vmatprep.subr.mxu0 0.0
    %v531 = vand.u32 %v43, 4294901760
    %v532 = vsub.f32 %v43, %v531
    %v533 = vand.u32 %v532, 4294901760
    %534 = vmatpush1.msra.mxu0 %v533
    %535 = vmatprep.subr.mxu0 0.0
    %v536 = vand.u32 %v44, 4294901760
    %v537 = vsub.f32 %v44, %v536
    %v538 = vand.u32 %v537, 4294901760
    %539 = vmatpush1.msra.mxu0 %v538
    %540 = vmatprep.subr.mxu0 0.0
    %v541 = vand.u32 %v45, 4294901760
    %v542 = vsub.f32 %v45, %v541
    %v543 = vand.u32 %v542, 4294901760
    %544 = vmatpush1.msra.mxu0 %v543
    %545 = vmatprep.subr.mxu0 0.0
    %v546 = vand.u32 %v46, 4294901760
    %v547 = vsub.f32 %v46, %v546
    %v548 = vand.u32 %v547, 4294901760
    %549 = vmatpush1.msra.mxu0 %v548
    %550 = vmatprep.subr.mxu0 0.0
    %v551 = vand.u32 %v47, 4294901760
    %v552 = vsub.f32 %v47, %v551
    %v553 = vand.u32 %v552, 4294901760
    %554 = vmatpush1.msra.mxu0 %v553
    %555 = vmatprep.subr.mxu0 0.0
    %v556 = vand.u32 %v48, 4294901760
    %v557 = vsub.f32 %v48, %v556
    %v558 = vand.u32 %v557, 4294901760
    %559 = vmatpush1.msra.mxu0 %v558
    %560 = vmatprep.subr.mxu0 0.0
    %v561 = vand.u32 %v49, 4294901760
    %v562 = vsub.f32 %v49, %v561
    %v563 = vand.u32 %v562, 4294901760
    %564 = vmatpush1.msra.mxu0 %v563
    %565 = vmatprep.subr.mxu0 0.0
    %566 = vmatpush1.msra.mxu0 0.0
    %567 = vmatprep.subr.mxu0 0.0
    %568 = vmatpush1.msra.mxu0 0.0
    %569 = vmatprep.subr.mxu0 0.0
    %570 = vmatpush1.msra.mxu0 0.0
    %571 = vmatprep.subr.mxu0 0.0
    %572 = vmatpush1.msra.mxu0 0.0
    %573 = vmatprep.subr.mxu0 0.0
    %574 = vmatpush1.msra.mxu0 0.0
    %575 = vmatprep.subr.mxu0 0.0
    %576 = vmatpush1.msra.mxu0 0.0
    %577 = vmatprep.subr.mxu0 0.0
    %578 = vmatpush1.msra.mxu0 0.0
    %579 = vmatprep.subr.mxu0 0.0
    %580 = vmatpush1.msra.mxu0 0.0
    %581 = vmatprep.subr.mxu0 0.0
    %582 = vmatpush1.msra.mxu0 0.0
    %583 = vmatprep.subr.mxu0 0.0
    %584 = vmatpush1.msra.mxu0 0.0
    %585 = vmatprep.subr.mxu0 0.0
    %586 = vmatpush1.msra.mxu0 0.0
    %587 = vmatprep.subr.mxu0 0.0
    %588 = vmatpush1.msra.mxu0 0.0
    %589 = vmatprep.subr.mxu0 0.0
    %590 = vmatpush1.msra.mxu0 0.0
    %591 = vmatprep.subr.mxu0 0.0
    %592 = vmatpush1.msra.mxu0 0.0
    %593 = vmatprep.subr.mxu0 0.0
    %594 = vmatpush1.msra.mxu0 0.0
    %595 = vmatprep.subr.mxu0 0.0
    %596 = vmatpush1.msra.mxu0 0.0
    %597 = vmatprep.mubr.f32.mxu0 0.0
    %v598 = vand.u32 %v33, 4294901760
    %599 = vmatmul.mubr.f32.gmra.mrb[0].mxu0 %v598
    %v600 = vpop.f32.mrb[0].mxu0
    %v601 = vadd.f32 %v482, %v600
    %v602 = vpop.f32.mrb[0].mxu0
    %603 = vdwg.mxu0
    %604 = vmatprep.subr.mxu0 0.0
    %v605 = vand.u32 %v34, 4294901760
    %606 = vmatpush1.msra.mxu0 %v605
    %607 = vmatprep.subr.mxu0 0.0
    %v608 = vand.u32 %v35, 4294901760
    %609 = vmatpush1.msra.mxu0 %v608
    %610 = vmatprep.subr.mxu0 0.0
    %v611 = vand.u32 %v36, 4294901760
    %612 = vmatpush1.msra.mxu0 %v611
    %613 = vmatprep.subr.mxu0 0.0
    %v614 = vand.u32 %v37, 4294901760
    %615 = vmatpush1.msra.mxu0 %v614
    %616 = vmatprep.subr.mxu0 0.0
    %v617 = vand.u32 %v38, 4294901760
    %618 = vmatpush1.msra.mxu0 %v617
    %619 = vmatprep.subr.mxu0 0.0
    %v620 = vand.u32 %v39, 4294901760
    %621 = vmatpush1.msra.mxu0 %v620
    %622 = vmatprep.subr.mxu0 0.0
    %v623 = vand.u32 %v40, 4294901760
    %624 = vmatpush1.msra.mxu0 %v623
    %625 = vmatprep.subr.mxu0 0.0
    %v626 = vand.u32 %v41, 4294901760
    %627 = vmatpush1.msra.mxu0 %v626
    %628 = vmatprep.subr.mxu0 0.0
    %v629 = vand.u32 %v42, 4294901760
    %630 = vmatpush1.msra.mxu0 %v629
    %631 = vmatprep.subr.mxu0 0.0
    %v632 = vand.u32 %v43, 4294901760
    %633 = vmatpush1.msra.mxu0 %v632
    %634 = vmatprep.subr.mxu0 0.0
    %v635 = vand.u32 %v44, 4294901760
    %636 = vmatpush1.msra.mxu0 %v635
    %637 = vmatprep.subr.mxu0 0.0
    %v638 = vand.u32 %v45, 4294901760
    %639 = vmatpush1.msra.mxu0 %v638
    %640 = vmatprep.subr.mxu0 0.0
    %v641 = vand.u32 %v46, 4294901760
    %642 = vmatpush1.msra.mxu0 %v641
    %643 = vmatprep.subr.mxu0 0.0
    %v644 = vand.u32 %v47, 4294901760
    %645 = vmatpush1.msra.mxu0 %v644
    %646 = vmatprep.subr.mxu0 0.0
    %v647 = vand.u32 %v48, 4294901760
    %648 = vmatpush1.msra.mxu0 %v647
    %649 = vmatprep.subr.mxu0 0.0
    %v650 = vand.u32 %v49, 4294901760
    %651 = vmatpush1.msra.mxu0 %v650
    %652 = vmatprep.subr.mxu0 0.0
    %653 = vmatpush1.msra.mxu0 0.0
    %654 = vmatprep.subr.mxu0 0.0
    %655 = vmatpush1.msra.mxu0 0.0
    %656 = vmatprep.subr.mxu0 0.0
    %657 = vmatpush1.msra.mxu0 0.0
    %658 = vmatprep.subr.mxu0 0.0
    %659 = vmatpush1.msra.mxu0 0.0
    %660 = vmatprep.subr.mxu0 0.0
    %661 = vmatpush1.msra.mxu0 0.0
    %662 = vmatprep.subr.mxu0 0.0
    %663 = vmatpush1.msra.mxu0 0.0
    %664 = vmatprep.subr.mxu0 0.0
    %665 = vmatpush1.msra.mxu0 0.0
    %666 = vmatprep.subr.mxu0 0.0
    %667 = vmatpush1.msra.mxu0 0.0
    %668 = vmatprep.subr.mxu0 0.0
    %669 = vmatpush1.msra.mxu0 0.0
    %670 = vmatprep.subr.mxu0 0.0
    %671 = vmatpush1.msra.mxu0 0.0
    %672 = vmatprep.subr.mxu0 0.0
    %673 = vmatpush1.msra.mxu0 0.0
    %674 = vmatprep.subr.mxu0 0.0
    %675 = vmatpush1.msra.mxu0 0.0
    %676 = vmatprep.subr.mxu0 0.0
    %677 = vmatpush1.msra.mxu0 0.0
    %678 = vmatprep.subr.mxu0 0.0
    %679 = vmatpush1.msra.mxu0 0.0
    %680 = vmatprep.subr.mxu0 0.0
    %681 = vmatpush1.msra.mxu0 0.0
    %682 = vmatprep.subr.mxu0 0.0
    %683 = vmatpush1.msra.mxu0 0.0
    %684 = vmatprep.mubr.f32.mxu0 0.0
    %v685 = vand.u32 %v33, 4294901760
    %686 = vmatmul.mubr.f32.gmra.mrb[0].mxu0 %v685
    %v687 = vpop.f32.mrb[0].mxu0
    %v688 = vadd.f32 %v601, %v687
    %v689 = vpop.f32.mrb[0].mxu0
    %690 = vdwg.mxu0
    %v691 = vld [vmem:[%s1] sm:$0x3]
    %v692 = vld [vmem:[%s4] sm:$0xff]
    %v693 = vld [vmem:[%s4 + $0x8] sm:$0xff]
    %v694 = vld [vmem:[%s4 + $0x10] sm:$0xff]
    %v695 = vld [vmem:[%s4 + $0x18] sm:$0xff]
    %v696 = vld [vmem:[%s4 + $0x20] sm:$0xff]
    %v697 = vld [vmem:[%s4 + $0x28] sm:$0xff]
    %v698 = vld [vmem:[%s4 + $0x30] sm:$0xff]
    %v699 = vld [vmem:[%s4 + $0x38] sm:$0xff]
    %v700 = vld [vmem:[%s4 + $0x40] sm:$0xff]
    %v701 = vld [vmem:[%s4 + $0x48] sm:$0xff]
    %v702 = vld [vmem:[%s4 + $0x50] sm:$0xff]
    %v703 = vld [vmem:[%s4 + $0x58] sm:$0xff]
    %v704 = vld [vmem:[%s4 + $0x60] sm:$0xff]
    %v705 = vld [vmem:[%s4 + $0x68] sm:$0xff]
    %v706 = vld [vmem:[%s4 + $0x70] sm:$0xff]
    %v707 = vld [vmem:[%s4 + $0x78] sm:$0xff]
    %708 = vmatprep.subr.mxu0 0.0
    %v709 = vand.u32 %v692, 4294901760
    %710 = vmatpush1.msra.mxu0 %v709
    %711 = vmatprep.subr.mxu0 0.0
    %v712 = vand.u32 %v693, 4294901760
    %713 = vmatpush1.msra.mxu0 %v712
    %714 = vmatprep.subr.mxu0 0.0
    %v715 = vand.u32 %v694, 4294901760
    %716 = vmatpush1.msra.mxu0 %v715
    %717 = vmatprep.subr.mxu0 0.0
    %v718 = vand.u32 %v695, 4294901760
    %719 = vmatpush1.msra.mxu0 %v718
    %720 = vmatprep.subr.mxu0 0.0
    %v721 = vand.u32 %v696, 4294901760
    %722 = vmatpush1.msra.mxu0 %v721
    %723 = vmatprep.subr.mxu0 0.0
    %v724 = vand.u32 %v697, 4294901760
    %725 = vmatpush1.msra.mxu0 %v724
    %726 = vmatprep.subr.mxu0 0.0
    %v727 = vand.u32 %v698, 4294901760
    %728 = vmatpush1.msra.mxu0 %v727
    %729 = vmatprep.subr.mxu0 0.0
    %v730 = vand.u32 %v699, 4294901760
    %731 = vmatpush1.msra.mxu0 %v730
    %732 = vmatprep.subr.mxu0 0.0
    %v733 = vand.u32 %v700, 4294901760
    %734 = vmatpush1.msra.mxu0 %v733
    %735 = vmatprep.subr.mxu0 0.0
    %v736 = vand.u32 %v701, 4294901760
    %737 = vmatpush1.msra.mxu0 %v736
    %738 = vmatprep.subr.mxu0 0.0
    %v739 = vand.u32 %v702, 4294901760
    %740 = vmatpush1.msra.mxu0 %v739
    %741 = vmatprep.subr.mxu0 0.0
    %v742 = vand.u32 %v703, 4294901760
    %743 = vmatpush1.msra.mxu0 %v742
    %744 = vmatprep.subr.mxu0 0.0
    %v745 = vand.u32 %v704, 4294901760
    %746 = vmatpush1.msra.mxu0 %v745
    %747 = vmatprep.subr.mxu0 0.0
    %v748 = vand.u32 %v705, 4294901760
    %749 = vmatpush1.msra.mxu0 %v748
    %750 = vmatprep.subr.mxu0 0.0
    %v751 = vand.u32 %v706, 4294901760
    %752 = vmatpush1.msra.mxu0 %v751
    %753 = vmatprep.subr.mxu0 0.0
    %v754 = vand.u32 %v707, 4294901760
    %755 = vmatpush1.msra.mxu0 %v754
    %756 = vmatprep.subr.mxu0 0.0
    %757 = vmatpush1.msra.mxu0 0.0
    %758 = vmatprep.subr.mxu0 0.0
    %759 = vmatpush1.msra.mxu0 0.0
    %760 = vmatprep.subr.mxu0 0.0
    %761 = vmatpush1.msra.mxu0 0.0
    %762 = vmatprep.subr.mxu0 0.0
    %763 = vmatpush1.msra.mxu0 0.0
    %764 = vmatprep.subr.mxu0 0.0
    %765 = vmatpush1.msra.mxu0 0.0
    %766 = vmatprep.subr.mxu0 0.0
    %767 = vmatpush1.msra.mxu0 0.0
    %768 = vmatprep.subr.mxu0 0.0
    %769 = vmatpush1.msra.mxu0 0.0
    %770 = vmatprep.subr.mxu0 0.0
    %771 = vmatpush1.msra.mxu0 0.0
    %772 = vmatprep.subr.mxu0 0.0
    %773 = vmatpush1.msra.mxu0 0.0
    %774 = vmatprep.subr.mxu0 0.0
    %775 = vmatpush1.msra.mxu0 0.0
    %776 = vmatprep.subr.mxu0 0.0
    %777 = vmatpush1.msra.mxu0 0.0
    %778 = vmatprep.subr.mxu0 0.0
    %779 = vmatpush1.msra.mxu0 0.0
    %780 = vmatprep.subr.mxu0 0.0
    %781 = vmatpush1.msra.mxu0 0.0
    %782 = vmatprep.subr.mxu0 0.0
    %783 = vmatpush1.msra.mxu0 0.0
    %784 = vmatprep.subr.mxu0 0.0
    %785 = vmatpush1.msra.mxu0 0.0
    %786 = vmatprep.subr.mxu0 0.0
    %787 = vmatpush1.msra.mxu0 0.0
    %788 = vmatprep.mubr.f32.mxu0 0.0
    %v789 = vand.u32 %v691, 4294901760
    %v790 = vsub.f32 %v691, %v789
    %v791 = vand.u32 %v790, 4294901760
    %v792 = vsub.f32 %v790, %v791
    %v793 = vand.u32 %v792, 4294901760
    %794 = vmatmul.mubr.f32.gmra.mrb[0].mxu0 %v793
    %v795 = vpop.f32.mrb[0].mxu0
    %v796 = vadd.f32 0.0, %v795
    %v797 = vpop.f32.mrb[0].mxu0
    %798 = vdwg.mxu0
    %799 = vmatprep.subr.mxu0 0.0
    %v800 = vand.u32 %v692, 4294901760
    %v801 = vsub.f32 %v692, %v800
    %v802 = vand.u32 %v801, 4294901760
    %v803 = vsub.f32 %v801, %v802
    %v804 = vand.u32 %v803, 4294901760
    %805 = vmatpush1.msra.mxu0 %v804
    %806 = vmatprep.subr.mxu0 0.0
    %v807 = vand.u32 %v693, 4294901760
    %v808 = vsub.f32 %v693, %v807
    %v809 = vand.u32 %v808, 4294901760
    %v810 = vsub.f32 %v808, %v809
    %v811 = vand.u32 %v810, 4294901760
    %812 = vmatpush1.msra.mxu0 %v811
    %813 = vmatprep.subr.mxu0 0.0
    %v814 = vand.u32 %v694, 4294901760
    %v815 = vsub.f32 %v694, %v814
    %v816 = vand.u32 %v815, 4294901760
    %v817 = vsub.f32 %v815, %v816
    %v818 = vand.u32 %v817, 4294901760
    %819 = vmatpush1.msra.mxu0 %v818
    %820 = vmatprep.subr.mxu0 0.0
    %v821 = vand.u32 %v695, 4294901760
    %v822 = vsub.f32 %v695, %v821
    %v823 = vand.u32 %v822, 4294901760
    %v824 = vsub.f32 %v822, %v823
    %v825 = vand.u32 %v824, 4294901760
    %826 = vmatpush1.msra.mxu0 %v825
    %827 = vmatprep.subr.mxu0 0.0
    %v828 = vand.u32 %v696, 4294901760
    %v829 = vsub.f32 %v696, %v828
    %v830 = vand.u32 %v829, 4294901760
    %v831 = vsub.f32 %v829, %v830
    %v832 = vand.u32 %v831, 4294901760
    %833 = vmatpush1.msra.mxu0 %v832
    %834 = vmatprep.subr.mxu0 0.0
    %v835 = vand.u32 %v697, 4294901760
    %v836 = vsub.f32 %v697, %v835
    %v837 = vand.u32 %v836, 4294901760
    %v838 = vsub.f32 %v836, %v837
    %v839 = vand.u32 %v838, 4294901760
    %840 = vmatpush1.msra.mxu0 %v839
    %841 = vmatprep.subr.mxu0 0.0
    %v842 = vand.u32 %v698, 4294901760
    %v843 = vsub.f32 %v698, %v842
    %v844 = vand.u32 %v843, 4294901760
    %v845 = vsub.f32 %v843, %v844
    %v846 = vand.u32 %v845, 4294901760
    %847 = vmatpush1.msra.mxu0 %v846
    %848 = vmatprep.subr.mxu0 0.0
    %v849 = vand.u32 %v699, 4294901760
    %v850 = vsub.f32 %v699, %v849
    %v851 = vand.u32 %v850, 4294901760
    %v852 = vsub.f32 %v850, %v851
    %v853 = vand.u32 %v852, 4294901760
    %854 = vmatpush1.msra.mxu0 %v853
    %855 = vmatprep.subr.mxu0 0.0
    %v856 = vand.u32 %v700, 4294901760
    %v857 = vsub.f32 %v700, %v856
    %v858 = vand.u32 %v857, 4294901760
    %v859 = vsub.f32 %v857, %v858
    %v860 = vand.u32 %v859, 4294901760
    %861 = vmatpush1.msra.mxu0 %v860
    %862 = vmatprep.subr.mxu0 0.0
    %v863 = vand.u32 %v701, 4294901760
    %v864 = vsub.f32 %v701, %v863
    %v865 = vand.u32 %v864, 4294901760
    %v866 = vsub.f32 %v864, %v865
    %v867 = vand.u32 %v866, 4294901760
    %868 = vmatpush1.msra.mxu0 %v867
    %869 = vmatprep.subr.mxu0 0.0
    %v870 = vand.u32 %v702, 4294901760
    %v871 = vsub.f32 %v702, %v870
    %v872 = vand.u32 %v871, 4294901760
    %v873 = vsub.f32 %v871, %v872
    %v874 = vand.u32 %v873, 4294901760
    %875 = vmatpush1.msra.mxu0 %v874
    %876 = vmatprep.subr.mxu0 0.0
    %v877 = vand.u32 %v703, 4294901760
    %v878 = vsub.f32 %v703, %v877
    %v879 = vand.u32 %v878, 4294901760
    %v880 = vsub.f32 %v878, %v879
    %v881 = vand.u32 %v880, 4294901760
    %882 = vmatpush1.msra.mxu0 %v881
    %883 = vmatprep.subr.mxu0 0.0
    %v884 = vand.u32 %v704, 4294901760
    %v885 = vsub.f32 %v704, %v884
    %v886 = vand.u32 %v885, 4294901760
    %v887 = vsub.f32 %v885, %v886
    %v888 = vand.u32 %v887, 4294901760
    %889 = vmatpush1.msra.mxu0 %v888
    %890 = vmatprep.subr.mxu0 0.0
    %v891 = vand.u32 %v705, 4294901760
    %v892 = vsub.f32 %v705, %v891
    %v893 = vand.u32 %v892, 4294901760
    %v894 = vsub.f32 %v892, %v893
    %v895 = vand.u32 %v894, 4294901760
    %896 = vmatpush1.msra.mxu0 %v895
    %897 = vmatprep.subr.mxu0 0.0
    %v898 = vand.u32 %v706, 4294901760
    %v899 = vsub.f32 %v706, %v898
    %v900 = vand.u32 %v899, 4294901760
    %v901 = vsub.f32 %v899, %v900
    %v902 = vand.u32 %v901, 4294901760
    %903 = vmatpush1.msra.mxu0 %v902
    %904 = vmatprep.subr.mxu0 0.0
    %v905 = vand.u32 %v707, 4294901760
    %v906 = vsub.f32 %v707, %v905
    %v907 = vand.u32 %v906, 4294901760
    %v908 = vsub.f32 %v906, %v907
    %v909 = vand.u32 %v908, 4294901760
    %910 = vmatpush1.msra.mxu0 %v909
    %911 = vmatprep.subr.mxu0 0.0
    %912 = vmatpush1.msra.mxu0 0.0
    %913 = vmatprep.subr.mxu0 0.0
    %914 = vmatpush1.msra.mxu0 0.0
    %915 = vmatprep.subr.mxu0 0.0
    %916 = vmatpush1.msra.mxu0 0.0
    %917 = vmatprep.subr.mxu0 0.0
    %918 = vmatpush1.msra.mxu0 0.0
    %919 = vmatprep.subr.mxu0 0.0
    %920 = vmatpush1.msra.mxu0 0.0
    %921 = vmatprep.subr.mxu0 0.0
    %922 = vmatpush1.msra.mxu0 0.0
    %923 = vmatprep.subr.mxu0 0.0
    %924 = vmatpush1.msra.mxu0 0.0
    %925 = vmatprep.subr.mxu0 0.0
    %926 = vmatpush1.msra.mxu0 0.0
    %927 = vmatprep.subr.mxu0 0.0
    %928 = vmatpush1.msra.mxu0 0.0
    %929 = vmatprep.subr.mxu0 0.0
    %930 = vmatpush1.msra.mxu0 0.0
    %931 = vmatprep.subr.mxu0 0.0
    %932 = vmatpush1.msra.mxu0 0.0
    %933 = vmatprep.subr.mxu0 0.0
    %934 = vmatpush1.msra.mxu0 0.0
    %935 = vmatprep.subr.mxu0 0.0
    %936 = vmatpush1.msra.mxu0 0.0
    %937 = vmatprep.subr.mxu0 0.0
    %938 = vmatpush1.msra.mxu0 0.0
    %939 = vmatprep.subr.mxu0 0.0
    %940 = vmatpush1.msra.mxu0 0.0
    %941 = vmatprep.subr.mxu0 0.0
    %942 = vmatpush1.msra.mxu0 0.0
    %943 = vmatprep.mubr.f32.mxu0 0.0
    %v944 = vand.u32 %v691, 4294901760
    %945 = vmatmul.mubr.f32.gmra.mrb[0].mxu0 %v944
    %v946 = vpop.f32.mrb[0].mxu0
    %v947 = vadd.f32 %v796, %v946
    %v948 = vpop.f32.mrb[0].mxu0
    %949 = vdwg.mxu0
    %950 = vmatprep.subr.mxu0 0.0
    %v951 = vand.u32 %v692, 4294901760
    %v952 = vsub.f32 %v692, %v951
    %953 = vmatpush1.msra.mxu0 %v952
    %954 = vmatprep.subr.mxu0 0.0
    %v955 = vand.u32 %v693, 4294901760
    %v956 = vsub.f32 %v693, %v955
    %957 = vmatpush1.msra.mxu0 %v956
    %958 = vmatprep.subr.mxu0 0.0
    %v959 = vand.u32 %v694, 4294901760
    %v960 = vsub.f32 %v694, %v959
    %961 = vmatpush1.msra.mxu0 %v960
    %962 = vmatprep.subr.mxu0 0.0
    %v963 = vand.u32 %v695, 4294901760
    %v964 = vsub.f32 %v695, %v963
    %965 = vmatpush1.msra.mxu0 %v964
    %966 = vmatprep.subr.mxu0 0.0
    %v967 = vand.u32 %v696, 4294901760
    %v968 = vsub.f32 %v696, %v967
    %969 = vmatpush1.msra.mxu0 %v968
    %970 = vmatprep.subr.mxu0 0.0
    %v971 = vand.u32 %v697, 4294901760
    %v972 = vsub.f32 %v697, %v971
    %973 = vmatpush1.msra.mxu0 %v972
    %974 = vmatprep.subr.mxu0 0.0
    %v975 = vand.u32 %v698, 4294901760
    %v976 = vsub.f32 %v698, %v975
    %977 = vmatpush1.msra.mxu0 %v976
    %978 = vmatprep.subr.mxu0 0.0
    %v979 = vand.u32 %v699, 4294901760
    %v980 = vsub.f32 %v699, %v979
    %981 = vmatpush1.msra.mxu0 %v980
    %982 = vmatprep.subr.mxu0 0.0
    %v983 = vand.u32 %v700, 4294901760
    %v984 = vsub.f32 %v700, %v983
    %985 = vmatpush1.msra.mxu0 %v984
    %986 = vmatprep.subr.mxu0 0.0
    %v987 = vand.u32 %v701, 4294901760
    %v988 = vsub.f32 %v701, %v987
    %989 = vmatpush1.msra.mxu0 %v988
    %990 = vmatprep.subr.mxu0 0.0
    %v991 = vand.u32 %v702, 4294901760
    %v992 = vsub.f32 %v702, %v991
    %993 = vmatpush1.msra.mxu0 %v992
    %994 = vmatprep.subr.mxu0 0.0
    %v995 = vand.u32 %v703, 4294901760
    %v996 = vsub.f32 %v703, %v995
    %997 = vmatpush1.msra.mxu0 %v996
    %998 = vmatprep.subr.mxu0 0.0
    %v999 = vand.u32 %v704, 4294901760
    %v1000 = vsub.f32 %v704, %v999
    %1001 = vmatpush1.msra.mxu0 %v1000
    %1002 = vmatprep.subr.mxu0 0.0
    %v1003 = vand.u32 %v705, 4294901760
    %v1004 = vsub.f32 %v705, %v1003
    %1005 = vmatpush1.msra.mxu0 %v1004
    %1006 = vmatprep.subr.mxu0 0.0
    %v1007 = vand.u32 %v706, 4294901760
    %v1008 = vsub.f32 %v706, %v1007
    %1009 = vmatpush1.msra.mxu0 %v1008
    %1010 = vmatprep.subr.mxu0 0.0
    %v1011 = vand.u32 %v707, 4294901760
    %v1012 = vsub.f32 %v707, %v1011
    %1013 = vmatpush1.msra.mxu0 %v1012
    %1014 = vmatprep.subr.mxu0 0.0
    %1015 = vmatpush1.msra.mxu0 0.0
    %1016 = vmatprep.subr.mxu0 0.0
    %1017 = vmatpush1.msra.mxu0 0.0
    %1018 = vmatprep.subr.mxu0 0.0
    %1019 = vmatpush1.msra.mxu0 0.0
    %1020 = vmatprep.subr.mxu0 0.0
    %1021 = vmatpush1.msra.mxu0 0.0
    %1022 = vmatprep.subr.mxu0 0.0
    %1023 = vmatpush1.msra.mxu0 0.0
    %1024 = vmatprep.subr.mxu0 0.0
    %1025 = vmatpush1.msra.mxu0 0.0
    %1026 = vmatprep.subr.mxu0 0.0
    %1027 = vmatpush1.msra.mxu0 0.0
    %1028 = vmatprep.subr.mxu0 0.0
    %1029 = vmatpush1.msra.mxu0 0.0
    %1030 = vmatprep.subr.mxu0 0.0
    %1031 = vmatpush1.msra.mxu0 0.0
    %1032 = vmatprep.subr.mxu0 0.0
    %1033 = vmatpush1.msra.mxu0 0.0
    %1034 = vmatprep.subr.mxu0 0.0
    %1035 = vmatpush1.msra.mxu0 0.0
    %1036 = vmatprep.subr.mxu0 0.0
    %1037 = vmatpush1.msra.mxu0 0.0
    %1038 = vmatprep.subr.mxu0 0.0
    %1039 = vmatpush1.msra.mxu0 0.0
    %1040 = vmatprep.subr.mxu0 0.0
    %1041 = vmatpush1.msra.mxu0 0.0
    %1042 = vmatprep.subr.mxu0 0.0
    %1043 = vmatpush1.msra.mxu0 0.0
    %1044 = vmatprep.subr.mxu0 0.0
    %1045 = vmatpush1.msra.mxu0 0.0
    %1046 = vmatprep.mubr.f32.mxu0 0.0
    %v1047 = vand.u32 %v691, 4294901760
    %v1048 = vsub.f32 %v691, %v1047
    %1049 = vmatmul.mubr.f32.gmra.mrb[0].mxu0 %v1048
    %v1050 = vpop.f32.mrb[0].mxu0
    %v1051 = vadd.f32 %v947, %v1050
    %v1052 = vpop.f32.mrb[0].mxu0
    %1053 = vdwg.mxu0
    %1054 = vmatprep.subr.mxu0 0.0
    %v1055 = vand.u32 %v692, 4294901760
    %1056 = vmatpush1.msra.mxu0 %v1055
    %1057 = vmatprep.subr.mxu0 0.0
    %v1058 = vand.u32 %v693, 4294901760
    %1059 = vmatpush1.msra.mxu0 %v1058
    %1060 = vmatprep.subr.mxu0 0.0
    %v1061 = vand.u32 %v694, 4294901760
    %1062 = vmatpush1.msra.mxu0 %v1061
    %1063 = vmatprep.subr.mxu0 0.0
    %v1064 = vand.u32 %v695, 4294901760
    %1065 = vmatpush1.msra.mxu0 %v1064
    %1066 = vmatprep.subr.mxu0 0.0
    %v1067 = vand.u32 %v696, 4294901760
    %1068 = vmatpush1.msra.mxu0 %v1067
    %1069 = vmatprep.subr.mxu0 0.0
    %v1070 = vand.u32 %v697, 4294901760
    %1071 = vmatpush1.msra.mxu0 %v1070
    %1072 = vmatprep.subr.mxu0 0.0
    %v1073 = vand.u32 %v698, 4294901760
    %1074 = vmatpush1.msra.mxu0 %v1073
    %1075 = vmatprep.subr.mxu0 0.0
    %v1076 = vand.u32 %v699, 4294901760
    %1077 = vmatpush1.msra.mxu0 %v1076
    %1078 = vmatprep.subr.mxu0 0.0
    %v1079 = vand.u32 %v700, 4294901760
    %1080 = vmatpush1.msra.mxu0 %v1079
    %1081 = vmatprep.subr.mxu0 0.0
    %v1082 = vand.u32 %v701, 4294901760
    %1083 = vmatpush1.msra.mxu0 %v1082
    %1084 = vmatprep.subr.mxu0 0.0
    %v1085 = vand.u32 %v702, 4294901760
    %1086 = vmatpush1.msra.mxu0 %v1085
    %1087 = vmatprep.subr.mxu0 0.0
    %v1088 = vand.u32 %v703, 4294901760
    %1089 = vmatpush1.msra.mxu0 %v1088
    %1090 = vmatprep.subr.mxu0 0.0
    %v1091 = vand.u32 %v704, 4294901760
    %1092 = vmatpush1.msra.mxu0 %v1091
    %1093 = vmatprep.subr.mxu0 0.0
    %v1094 = vand.u32 %v705, 4294901760
    %1095 = vmatpush1.msra.mxu0 %v1094
    %1096 = vmatprep.subr.mxu0 0.0
    %v1097 = vand.u32 %v706, 4294901760
    %1098 = vmatpush1.msra.mxu0 %v1097
    %1099 = vmatprep.subr.mxu0 0.0
    %v1100 = vand.u32 %v707, 4294901760
    %1101 = vmatpush1.msra.mxu0 %v1100
    %1102 = vmatprep.subr.mxu0 0.0
    %1103 = vmatpush1.msra.mxu0 0.0
    %1104 = vmatprep.subr.mxu0 0.0
    %1105 = vmatpush1.msra.mxu0 0.0
    %1106 = vmatprep.subr.mxu0 0.0
    %1107 = vmatpush1.msra.mxu0 0.0
    %1108 = vmatprep.subr.mxu0 0.0
    %1109 = vmatpush1.msra.mxu0 0.0
    %1110 = vmatprep.subr.mxu0 0.0
    %1111 = vmatpush1.msra.mxu0 0.0
    %1112 = vmatprep.subr.mxu0 0.0
    %1113 = vmatpush1.msra.mxu0 0.0
    %1114 = vmatprep.subr.mxu0 0.0
    %1115 = vmatpush1.msra.mxu0 0.0
    %1116 = vmatprep.subr.mxu0 0.0
    %1117 = vmatpush1.msra.mxu0 0.0
    %1118 = vmatprep.subr.mxu0 0.0
    %1119 = vmatpush1.msra.mxu0 0.0
    %1120 = vmatprep.subr.mxu0 0.0
    %1121 = vmatpush1.msra.mxu0 0.0
    %1122 = vmatprep.subr.mxu0 0.0
    %1123 = vmatpush1.msra.mxu0 0.0
    %1124 = vmatprep.subr.mxu0 0.0
    %1125 = vmatpush1.msra.mxu0 0.0
    %1126 = vmatprep.subr.mxu0 0.0
    %1127 = vmatpush1.msra.mxu0 0.0
    %1128 = vmatprep.subr.mxu0 0.0
    %1129 = vmatpush1.msra.mxu0 0.0
    %1130 = vmatprep.subr.mxu0 0.0
    %1131 = vmatpush1.msra.mxu0 0.0
    %1132 = vmatprep.subr.mxu0 0.0
    %1133 = vmatpush1.msra.mxu0 0.0
    %1134 = vmatprep.mubr.f32.mxu0 0.0
    %v1135 = vand.u32 %v691, 4294901760
    %v1136 = vsub.f32 %v691, %v1135
    %v1137 = vand.u32 %v1136, 4294901760
    %1138 = vmatmul.mubr.f32.gmra.mrb[0].mxu0 %v1137
    %v1139 = vpop.f32.mrb[0].mxu0
    %v1140 = vadd.f32 %v1051, %v1139
    %v1141 = vpop.f32.mrb[0].mxu0
    %1142 = vdwg.mxu0
    %1143 = vmatprep.subr.mxu0 0.0
    %v1144 = vand.u32 %v692, 4294901760
    %v1145 = vsub.f32 %v692, %v1144
    %v1146 = vand.u32 %v1145, 4294901760
    %1147 = vmatpush1.msra.mxu0 %v1146
    %1148 = vmatprep.subr.mxu0 0.0
    %v1149 = vand.u32 %v693, 4294901760
    %v1150 = vsub.f32 %v693, %v1149
    %v1151 = vand.u32 %v1150, 4294901760
    %1152 = vmatpush1.msra.mxu0 %v1151
    %1153 = vmatprep.subr.mxu0 0.0
    %v1154 = vand.u32 %v694, 4294901760
    %v1155 = vsub.f32 %v694, %v1154
    %v1156 = vand.u32 %v1155, 4294901760
    %1157 = vmatpush1.msra.mxu0 %v1156
    %1158 = vmatprep.subr.mxu0 0.0
    %v1159 = vand.u32 %v695, 4294901760
    %v1160 = vsub.f32 %v695, %v1159
    %v1161 = vand.u32 %v1160, 4294901760
    %1162 = vmatpush1.msra.mxu0 %v1161
    %1163 = vmatprep.subr.mxu0 0.0
    %v1164 = vand.u32 %v696, 4294901760
    %v1165 = vsub.f32 %v696, %v1164
    %v1166 = vand.u32 %v1165, 4294901760
    %1167 = vmatpush1.msra.mxu0 %v1166
    %1168 = vmatprep.subr.mxu0 0.0
    %v1169 = vand.u32 %v697, 4294901760
    %v1170 = vsub.f32 %v697, %v1169
    %v1171 = vand.u32 %v1170, 4294901760
    %1172 = vmatpush1.msra.mxu0 %v1171
    %1173 = vmatprep.subr.mxu0 0.0
    %v1174 = vand.u32 %v698, 4294901760
    %v1175 = vsub.f32 %v698, %v1174
    %v1176 = vand.u32 %v1175, 4294901760
    %1177 = vmatpush1.msra.mxu0 %v1176
    %1178 = vmatprep.subr.mxu0 0.0
    %v1179 = vand.u32 %v699, 4294901760
    %v1180 = vsub.f32 %v699, %v1179
    %v1181 = vand.u32 %v1180, 4294901760
    %1182 = vmatpush1.msra.mxu0 %v1181
    %1183 = vmatprep.subr.mxu0 0.0
    %v1184 = vand.u32 %v700, 4294901760
    %v1185 = vsub.f32 %v700, %v1184
    %v1186 = vand.u32 %v1185, 4294901760
    %1187 = vmatpush1.msra.mxu0 %v1186
    %1188 = vmatprep.subr.mxu0 0.0
    %v1189 = vand.u32 %v701, 4294901760
    %v1190 = vsub.f32 %v701, %v1189
    %v1191 = vand.u32 %v1190, 4294901760
    %1192 = vmatpush1.msra.mxu0 %v1191
    %1193 = vmatprep.subr.mxu0 0.0
    %v1194 = vand.u32 %v702, 4294901760
    %v1195 = vsub.f32 %v702, %v1194
    %v1196 = vand.u32 %v1195, 4294901760
    %1197 = vmatpush1.msra.mxu0 %v1196
    %1198 = vmatprep.subr.mxu0 0.0
    %v1199 = vand.u32 %v703, 4294901760
    %v1200 = vsub.f32 %v703, %v1199
    %v1201 = vand.u32 %v1200, 4294901760
    %1202 = vmatpush1.msra.mxu0 %v1201
    %1203 = vmatprep.subr.mxu0 0.0
    %v1204 = vand.u32 %v704, 4294901760
    %v1205 = vsub.f32 %v704, %v1204
    %v1206 = vand.u32 %v1205, 4294901760
    %1207 = vmatpush1.msra.mxu0 %v1206
    %1208 = vmatprep.subr.mxu0 0.0
    %v1209 = vand.u32 %v705, 4294901760
    %v1210 = vsub.f32 %v705, %v1209
    %v1211 = vand.u32 %v1210, 4294901760
    %1212 = vmatpush1.msra.mxu0 %v1211
    %1213 = vmatprep.subr.mxu0 0.0
    %v1214 = vand.u32 %v706, 4294901760
    %v1215 = vsub.f32 %v706, %v1214
    %v1216 = vand.u32 %v1215, 4294901760
    %1217 = vmatpush1.msra.mxu0 %v1216
    %1218 = vmatprep.subr.mxu0 0.0
    %v1219 = vand.u32 %v707, 4294901760
    %v1220 = vsub.f32 %v707, %v1219
    %v1221 = vand.u32 %v1220, 4294901760
    %1222 = vmatpush1.msra.mxu0 %v1221
    %1223 = vmatprep.subr.mxu0 0.0
    %1224 = vmatpush1.msra.mxu0 0.0
    %1225 = vmatprep.subr.mxu0 0.0
    %1226 = vmatpush1.msra.mxu0 0.0
    %1227 = vmatprep.subr.mxu0 0.0
    %1228 = vmatpush1.msra.mxu0 0.0
    %1229 = vmatprep.subr.mxu0 0.0
    %1230 = vmatpush1.msra.mxu0 0.0
    %1231 = vmatprep.subr.mxu0 0.0
    %1232 = vmatpush1.msra.mxu0 0.0
    %1233 = vmatprep.subr.mxu0 0.0
    %1234 = vmatpush1.msra.mxu0 0.0
    %1235 = vmatprep.subr.mxu0 0.0
    %1236 = vmatpush1.msra.mxu0 0.0
    %1237 = vmatprep.subr.mxu0 0.0
    %1238 = vmatpush1.msra.mxu0 0.0
    %1239 = vmatprep.subr.mxu0 0.0
    %1240 = vmatpush1.msra.mxu0 0.0
    %1241 = vmatprep.subr.mxu0 0.0
    %1242 = vmatpush1.msra.mxu0 0.0
    %1243 = vmatprep.subr.mxu0 0.0
    %1244 = vmatpush1.msra.mxu0 0.0
    %1245 = vmatprep.subr.mxu0 0.0
    %1246 = vmatpush1.msra.mxu0 0.0
    %1247 = vmatprep.subr.mxu0 0.0
    %1248 = vmatpush1.msra.mxu0 0.0
    %1249 = vmatprep.subr.mxu0 0.0
    %1250 = vmatpush1.msra.mxu0 0.0
    %1251 = vmatprep.subr.mxu0 0.0
    %1252 = vmatpush1.msra.mxu0 0.0
    %1253 = vmatprep.subr.mxu0 0.0
    %1254 = vmatpush1.msra.mxu0 0.0
    %1255 = vmatprep.mubr.f32.mxu0 0.0
    %v1256 = vand.u32 %v691, 4294901760
    %1257 = vmatmul.mubr.f32.gmra.mrb[0].mxu0 %v1256
    %v1258 = vpop.f32.mrb[0].mxu0
    %v1259 = vadd.f32 %v1140, %v1258
    %v1260 = vpop.f32.mrb[0].mxu0
    %1261 = vdwg.mxu0
    %1262 = vmatprep.subr.mxu0 0.0
    %v1263 = vand.u32 %v692, 4294901760
    %1264 = vmatpush1.msra.mxu0 %v1263
    %1265 = vmatprep.subr.mxu0 0.0
    %v1266 = vand.u32 %v693, 4294901760
    %1267 = vmatpush1.msra.mxu0 %v1266
    %1268 = vmatprep.subr.mxu0 0.0
    %v1269 = vand.u32 %v694, 4294901760
    %1270 = vmatpush1.msra.mxu0 %v1269
    %1271 = vmatprep.subr.mxu0 0.0
    %v1272 = vand.u32 %v695, 4294901760
    %1273 = vmatpush1.msra.mxu0 %v1272
    %1274 = vmatprep.subr.mxu0 0.0
    %v1275 = vand.u32 %v696, 4294901760
    %1276 = vmatpush1.msra.mxu0 %v1275
    %1277 = vmatprep.subr.mxu0 0.0
    %v1278 = vand.u32 %v697, 4294901760
    %1279 = vmatpush1.msra.mxu0 %v1278
    %1280 = vmatprep.subr.mxu0 0.0
    %v1281 = vand.u32 %v698, 4294901760
    %1282 = vmatpush1.msra.mxu0 %v1281
    %1283 = vmatprep.subr.mxu0 0.0
    %v1284 = vand.u32 %v699, 4294901760
    %1285 = vmatpush1.msra.mxu0 %v1284
    %1286 = vmatprep.subr.mxu0 0.0
    %v1287 = vand.u32 %v700, 4294901760
    %1288 = vmatpush1.msra.mxu0 %v1287
    %1289 = vmatprep.subr.mxu0 0.0
    %v1290 = vand.u32 %v701, 4294901760
    %1291 = vmatpush1.msra.mxu0 %v1290
    %1292 = vmatprep.subr.mxu0 0.0
    %v1293 = vand.u32 %v702, 4294901760
    %1294 = vmatpush1.msra.mxu0 %v1293
    %1295 = vmatprep.subr.mxu0 0.0
    %v1296 = vand.u32 %v703, 4294901760
    %1297 = vmatpush1.msra.mxu0 %v1296
    %1298 = vmatprep.subr.mxu0 0.0
    %v1299 = vand.u32 %v704, 4294901760
    %1300 = vmatpush1.msra.mxu0 %v1299
    %1301 = vmatprep.subr.mxu0 0.0
    %v1302 = vand.u32 %v705, 4294901760
    %1303 = vmatpush1.msra.mxu0 %v1302
    %1304 = vmatprep.subr.mxu0 0.0
    %v1305 = vand.u32 %v706, 4294901760
    %1306 = vmatpush1.msra.mxu0 %v1305
    %1307 = vmatprep.subr.mxu0 0.0
    %v1308 = vand.u32 %v707, 4294901760
    %1309 = vmatpush1.msra.mxu0 %v1308
    %1310 = vmatprep.subr.mxu0 0.0
    %1311 = vmatpush1.msra.mxu0 0.0
    %1312 = vmatprep.subr.mxu0 0.0
    %1313 = vmatpush1.msra.mxu0 0.0
    %1314 = vmatprep.subr.mxu0 0.0
    %1315 = vmatpush1.msra.mxu0 0.0
    %1316 = vmatprep.subr.mxu0 0.0
    %1317 = vmatpush1.msra.mxu0 0.0
    %1318 = vmatprep.subr.mxu0 0.0
    %1319 = vmatpush1.msra.mxu0 0.0
    %1320 = vmatprep.subr.mxu0 0.0
    %1321 = vmatpush1.msra.mxu0 0.0
    %1322 = vmatprep.subr.mxu0 0.0
    %1323 = vmatpush1.msra.mxu0 0.0
    %1324 = vmatprep.subr.mxu0 0.0
    %1325 = vmatpush1.msra.mxu0 0.0
    %1326 = vmatprep.subr.mxu0 0.0
    %1327 = vmatpush1.msra.mxu0 0.0
    %1328 = vmatprep.subr.mxu0 0.0
    %1329 = vmatpush1.msra.mxu0 0.0
    %1330 = vmatprep.subr.mxu0 0.0
    %1331 = vmatpush1.msra.mxu0 0.0
    %1332 = vmatprep.subr.mxu0 0.0
    %1333 = vmatpush1.msra.mxu0 0.0
    %1334 = vmatprep.subr.mxu0 0.0
    %1335 = vmatpush1.msra.mxu0 0.0
    %1336 = vmatprep.subr.mxu0 0.0
    %1337 = vmatpush1.msra.mxu0 0.0
    %1338 = vmatprep.subr.mxu0 0.0
    %1339 = vmatpush1.msra.mxu0 0.0
    %1340 = vmatprep.subr.mxu0 0.0
    %1341 = vmatpush1.msra.mxu0 0.0
    %1342 = vmatprep.mubr.f32.mxu0 0.0
    %v1343 = vand.u32 %v691, 4294901760
    %1344 = vmatmul.mubr.f32.gmra.mrb[0].mxu0 %v1343
    %v1345 = vpop.f32.mrb[0].mxu0
    %v1346 = vadd.f32 %v1259, %v1345
    %v1347 = vpop.f32.mrb[0].mxu0
    %1348 = vdwg.mxu0
    %v1349 = vlaneseq
    %v1350 = vshrl.u32 %v1349, 7
    %v1351 = vsub.s32 0, %v1350
    %v1352 = vrot.slane %v28, %v1351
    %v1353 = vadd.f32 %v688, %v1352
    %v1354 = vlaneseq
    %v1355 = vshrl.u32 %v1354, 7
    %v1356 = vsub.s32 0, %v1355
    %v1357 = vrot.slane %v29, %v1356
    %v1358 = vadd.f32 %v1346, %v1357
    %v1359 = vadd.f32 %v688, %v1346
    %vm1360 = vcmask 64512
    %v1362 = vsel %vm1360, %v27, 0
    %1364 = vmatprep.subr.mxu0 0.0
    %v1365 = vand.u32 %v30, 4294901760
    %1366 = vmatpush1.msra.mxu0 %v1365
    %1367 = vmatprep.subr.mxu0 0.0
    %1368 = vmatpush1.msra.mxu0 0.0
    %1369 = vmatprep.subr.mxu0 0.0
    %1370 = vmatpush1.msra.mxu0 0.0
    %1371 = vmatprep.subr.mxu0 0.0
    %1372 = vmatpush1.msra.mxu0 0.0
    %1373 = vmatprep.subr.mxu0 0.0
    %1374 = vmatpush1.msra.mxu0 0.0
    %1375 = vmatprep.subr.mxu0 0.0
    %1376 = vmatpush1.msra.mxu0 0.0
    %1377 = vmatprep.subr.mxu0 0.0
    %1378 = vmatpush1.msra.mxu0 0.0
    %1379 = vmatprep.subr.mxu0 0.0
    %1380 = vmatpush1.msra.mxu0 0.0
    %1381 = vmatprep.subr.mxu0 0.0
    %1382 = vmatpush1.msra.mxu0 0.0
    %1383 = vmatprep.subr.mxu0 0.0
    %1384 = vmatpush1.msra.mxu0 0.0
    %1385 = vmatprep.subr.mxu0 0.0
    %1386 = vmatpush1.msra.mxu0 0.0
    %1387 = vmatprep.subr.mxu0 0.0
    %1388 = vmatpush1.msra.mxu0 0.0
    %1389 = vmatprep.subr.mxu0 0.0
    %1390 = vmatpush1.msra.mxu0 0.0
    %1391 = vmatprep.subr.mxu0 0.0
    %1392 = vmatpush1.msra.mxu0 0.0
    %1393 = vmatprep.subr.mxu0 0.0
    %1394 = vmatpush1.msra.mxu0 0.0
    %1395 = vmatprep.subr.mxu0 0.0
    %1396 = vmatpush1.msra.mxu0 0.0
    %1397 = vmatprep.subr.mxu0 0.0
    %1398 = vmatpush1.msra.mxu0 0.0
    %1399 = vmatprep.subr.mxu0 0.0
    %1400 = vmatpush1.msra.mxu0 0.0
    %1401 = vmatprep.subr.mxu0 0.0
    %1402 = vmatpush1.msra.mxu0 0.0
    %1403 = vmatprep.subr.mxu0 0.0
    %1404 = vmatpush1.msra.mxu0 0.0
    %1405 = vmatprep.subr.mxu0 0.0
    %1406 = vmatpush1.msra.mxu0 0.0
    %1407 = vmatprep.subr.mxu0 0.0
    %1408 = vmatpush1.msra.mxu0 0.0
    %1409 = vmatprep.subr.mxu0 0.0
    %1410 = vmatpush1.msra.mxu0 0.0
    %1411 = vmatprep.subr.mxu0 0.0
    %1412 = vmatpush1.msra.mxu0 0.0
    %1413 = vmatprep.subr.mxu0 0.0
    %1414 = vmatpush1.msra.mxu0 0.0
    %1415 = vmatprep.subr.mxu0 0.0
    %1416 = vmatpush1.msra.mxu0 0.0
    %1417 = vmatprep.subr.mxu0 0.0
    %1418 = vmatpush1.msra.mxu0 0.0
    %1419 = vmatprep.subr.mxu0 0.0
    %1420 = vmatpush1.msra.mxu0 0.0
    %1421 = vmatprep.subr.mxu0 0.0
    %1422 = vmatpush1.msra.mxu0 0.0
    %1423 = vmatprep.subr.mxu0 0.0
    %1424 = vmatpush1.msra.mxu0 0.0
    %1425 = vmatprep.subr.mxu0 0.0
    %1426 = vmatpush1.msra.mxu0 0.0
    %1427 = vmatprep.subr.mxu0 0.0
    %1428 = vmatpush1.msra.mxu0 0.0
    %1429 = vmatprep.mubr.f32.mxu0 0.0
    %v1430 = vand.u32 %v1362, 4294901760
    %v1431 = vsub.f32 %v1362, %v1430
    %v1432 = vand.u32 %v1431, 4294901760
    %v1433 = vsub.f32 %v1431, %v1432
    %v1434 = vand.u32 %v1433, 4294901760
    %1435 = vmatmul.mubr.f32.gmra.mrb[0].mxu0 %v1434
    %v1436 = vpop.f32.mrb[0].mxu0
    %v1437 = vadd.f32 0.0, %v1436
    %v1438 = vpop.f32.mrb[0].mxu0
    %1439 = vdwg.mxu0
    %1440 = vmatprep.subr.mxu0 0.0
    %v1441 = vand.u32 %v30, 4294901760
    %v1442 = vsub.f32 %v30, %v1441
    %v1443 = vand.u32 %v1442, 4294901760
    %v1444 = vsub.f32 %v1442, %v1443
    %v1445 = vand.u32 %v1444, 4294901760
    %1446 = vmatpush1.msra.mxu0 %v1445
    %1447 = vmatprep.subr.mxu0 0.0
    %1448 = vmatpush1.msra.mxu0 0.0
    %1449 = vmatprep.subr.mxu0 0.0
    %1450 = vmatpush1.msra.mxu0 0.0
    %1451 = vmatprep.subr.mxu0 0.0
    %1452 = vmatpush1.msra.mxu0 0.0
    %1453 = vmatprep.subr.mxu0 0.0
    %1454 = vmatpush1.msra.mxu0 0.0
    %1455 = vmatprep.subr.mxu0 0.0
    %1456 = vmatpush1.msra.mxu0 0.0
    %1457 = vmatprep.subr.mxu0 0.0
    %1458 = vmatpush1.msra.mxu0 0.0
    %1459 = vmatprep.subr.mxu0 0.0
    %1460 = vmatpush1.msra.mxu0 0.0
    %1461 = vmatprep.subr.mxu0 0.0
    %1462 = vmatpush1.msra.mxu0 0.0
    %1463 = vmatprep.subr.mxu0 0.0
    %1464 = vmatpush1.msra.mxu0 0.0
    %1465 = vmatprep.subr.mxu0 0.0
    %1466 = vmatpush1.msra.mxu0 0.0
    %1467 = vmatprep.subr.mxu0 0.0
    %1468 = vmatpush1.msra.mxu0 0.0
    %1469 = vmatprep.subr.mxu0 0.0
    %1470 = vmatpush1.msra.mxu0 0.0
    %1471 = vmatprep.subr.mxu0 0.0
    %1472 = vmatpush1.msra.mxu0 0.0
    %1473 = vmatprep.subr.mxu0 0.0
    %1474 = vmatpush1.msra.mxu0 0.0
    %1475 = vmatprep.subr.mxu0 0.0
    %1476 = vmatpush1.msra.mxu0 0.0
    %1477 = vmatprep.subr.mxu0 0.0
    %1478 = vmatpush1.msra.mxu0 0.0
    %1479 = vmatprep.subr.mxu0 0.0
    %1480 = vmatpush1.msra.mxu0 0.0
    %1481 = vmatprep.subr.mxu0 0.0
    %1482 = vmatpush1.msra.mxu0 0.0
    %1483 = vmatprep.subr.mxu0 0.0
    %1484 = vmatpush1.msra.mxu0 0.0
    %1485 = vmatprep.subr.mxu0 0.0
    %1486 = vmatpush1.msra.mxu0 0.0
    %1487 = vmatprep.subr.mxu0 0.0
    %1488 = vmatpush1.msra.mxu0 0.0
    %1489 = vmatprep.subr.mxu0 0.0
    %1490 = vmatpush1.msra.mxu0 0.0
    %1491 = vmatprep.subr.mxu0 0.0
    %1492 = vmatpush1.msra.mxu0 0.0
    %1493 = vmatprep.subr.mxu0 0.0
    %1494 = vmatpush1.msra.mxu0 0.0
    %1495 = vmatprep.subr.mxu0 0.0
    %1496 = vmatpush1.msra.mxu0 0.0
    %1497 = vmatprep.subr.mxu0 0.0
    %1498 = vmatpush1.msra.mxu0 0.0
    %1499 = vmatprep.subr.mxu0 0.0
    %1500 = vmatpush1.msra.mxu0 0.0
    %1501 = vmatprep.subr.mxu0 0.0
    %1502 = vmatpush1.msra.mxu0 0.0
    %1503 = vmatprep.subr.mxu0 0.0
    %1504 = vmatpush1.msra.mxu0 0.0
    %1505 = vmatprep.subr.mxu0 0.0
    %1506 = vmatpush1.msra.mxu0 0.0
    %1507 = vmatprep.subr.mxu0 0.0
    %1508 = vmatpush1.msra.mxu0 0.0
    %1509 = vmatprep.mubr.f32.mxu0 0.0
    %v1510 = vand.u32 %v1362, 4294901760
    %1511 = vmatmul.mubr.f32.gmra.mrb[0].mxu0 %v1510
    %v1512 = vpop.f32.mrb[0].mxu0
    %v1513 = vadd.f32 %v1437, %v1512
    %v1514 = vpop.f32.mrb[0].mxu0
    %1515 = vdwg.mxu0
    %1516 = vmatprep.subr.mxu0 0.0
    %v1517 = vand.u32 %v30, 4294901760
    %v1518 = vsub.f32 %v30, %v1517
    %1519 = vmatpush1.msra.mxu0 %v1518
    %1520 = vmatprep.subr.mxu0 0.0
    %1521 = vmatpush1.msra.mxu0 0.0
    %1522 = vmatprep.subr.mxu0 0.0
    %1523 = vmatpush1.msra.mxu0 0.0
    %1524 = vmatprep.subr.mxu0 0.0
    %1525 = vmatpush1.msra.mxu0 0.0
    %1526 = vmatprep.subr.mxu0 0.0
    %1527 = vmatpush1.msra.mxu0 0.0
    %1528 = vmatprep.subr.mxu0 0.0
    %1529 = vmatpush1.msra.mxu0 0.0
    %1530 = vmatprep.subr.mxu0 0.0
    %1531 = vmatpush1.msra.mxu0 0.0
    %1532 = vmatprep.subr.mxu0 0.0
    %1533 = vmatpush1.msra.mxu0 0.0
    %1534 = vmatprep.subr.mxu0 0.0
    %1535 = vmatpush1.msra.mxu0 0.0
    %1536 = vmatprep.subr.mxu0 0.0
    %1537 = vmatpush1.msra.mxu0 0.0
    %1538 = vmatprep.subr.mxu0 0.0
    %1539 = vmatpush1.msra.mxu0 0.0
    %1540 = vmatprep.subr.mxu0 0.0
    %1541 = vmatpush1.msra.mxu0 0.0
    %1542 = vmatprep.subr.mxu0 0.0
    %1543 = vmatpush1.msra.mxu0 0.0
    %1544 = vmatprep.subr.mxu0 0.0
    %1545 = vmatpush1.msra.mxu0 0.0
    %1546 = vmatprep.subr.mxu0 0.0
    %1547 = vmatpush1.msra.mxu0 0.0
    %1548 = vmatprep.subr.mxu0 0.0
    %1549 = vmatpush1.msra.mxu0 0.0
    %1550 = vmatprep.subr.mxu0 0.0
    %1551 = vmatpush1.msra.mxu0 0.0
    %1552 = vmatprep.subr.mxu0 0.0
    %1553 = vmatpush1.msra.mxu0 0.0
    %1554 = vmatprep.subr.mxu0 0.0
    %1555 = vmatpush1.msra.mxu0 0.0
    %1556 = vmatprep.subr.mxu0 0.0
    %1557 = vmatpush1.msra.mxu0 0.0
    %1558 = vmatprep.subr.mxu0 0.0
    %1559 = vmatpush1.msra.mxu0 0.0
    %1560 = vmatprep.subr.mxu0 0.0
    %1561 = vmatpush1.msra.mxu0 0.0
    %1562 = vmatprep.subr.mxu0 0.0
    %1563 = vmatpush1.msra.mxu0 0.0
    %1564 = vmatprep.subr.mxu0 0.0
    %1565 = vmatpush1.msra.mxu0 0.0
    %1566 = vmatprep.subr.mxu0 0.0
    %1567 = vmatpush1.msra.mxu0 0.0
    %1568 = vmatprep.subr.mxu0 0.0
    %1569 = vmatpush1.msra.mxu0 0.0
    %1570 = vmatprep.subr.mxu0 0.0
    %1571 = vmatpush1.msra.mxu0 0.0
    %1572 = vmatprep.subr.mxu0 0.0
    %1573 = vmatpush1.msra.mxu0 0.0
    %1574 = vmatprep.subr.mxu0 0.0
    %1575 = vmatpush1.msra.mxu0 0.0
    %1576 = vmatprep.subr.mxu0 0.0
    %1577 = vmatpush1.msra.mxu0 0.0
    %1578 = vmatprep.subr.mxu0 0.0
    %1579 = vmatpush1.msra.mxu0 0.0
    %1580 = vmatprep.subr.mxu0 0.0
    %1581 = vmatpush1.msra.mxu0 0.0
    %1582 = vmatprep.mubr.f32.mxu0 0.0
    %v1583 = vand.u32 %v1362, 4294901760
    %v1584 = vsub.f32 %v1362, %v1583
    %1585 = vmatmul.mubr.f32.gmra.mrb[0].mxu0 %v1584
    %v1586 = vpop.f32.mrb[0].mxu0
    %v1587 = vadd.f32 %v1513, %v1586
    %v1588 = vpop.f32.mrb[0].mxu0
    %1589 = vdwg.mxu0
    %1590 = vmatprep.subr.mxu0 0.0
    %v1591 = vand.u32 %v30, 4294901760
    %1592 = vmatpush1.msra.mxu0 %v1591
    %1593 = vmatprep.subr.mxu0 0.0
    %1594 = vmatpush1.msra.mxu0 0.0
    %1595 = vmatprep.subr.mxu0 0.0
    %1596 = vmatpush1.msra.mxu0 0.0
    %1597 = vmatprep.subr.mxu0 0.0
    %1598 = vmatpush1.msra.mxu0 0.0
    %1599 = vmatprep.subr.mxu0 0.0
    %1600 = vmatpush1.msra.mxu0 0.0
    %1601 = vmatprep.subr.mxu0 0.0
    %1602 = vmatpush1.msra.mxu0 0.0
    %1603 = vmatprep.subr.mxu0 0.0
    %1604 = vmatpush1.msra.mxu0 0.0
    %1605 = vmatprep.subr.mxu0 0.0
    %1606 = vmatpush1.msra.mxu0 0.0
    %1607 = vmatprep.subr.mxu0 0.0
    %1608 = vmatpush1.msra.mxu0 0.0
    %1609 = vmatprep.subr.mxu0 0.0
    %1610 = vmatpush1.msra.mxu0 0.0
    %1611 = vmatprep.subr.mxu0 0.0
    %1612 = vmatpush1.msra.mxu0 0.0
    %1613 = vmatprep.subr.mxu0 0.0
    %1614 = vmatpush1.msra.mxu0 0.0
    %1615 = vmatprep.subr.mxu0 0.0
    %1616 = vmatpush1.msra.mxu0 0.0
    %1617 = vmatprep.subr.mxu0 0.0
    %1618 = vmatpush1.msra.mxu0 0.0
    %1619 = vmatprep.subr.mxu0 0.0
    %1620 = vmatpush1.msra.mxu0 0.0
    %1621 = vmatprep.subr.mxu0 0.0
    %1622 = vmatpush1.msra.mxu0 0.0
    %1623 = vmatprep.subr.mxu0 0.0
    %1624 = vmatpush1.msra.mxu0 0.0
    %1625 = vmatprep.subr.mxu0 0.0
    %1626 = vmatpush1.msra.mxu0 0.0
    %1627 = vmatprep.subr.mxu0 0.0
    %1628 = vmatpush1.msra.mxu0 0.0
    %1629 = vmatprep.subr.mxu0 0.0
    %1630 = vmatpush1.msra.mxu0 0.0
    %1631 = vmatprep.subr.mxu0 0.0
    %1632 = vmatpush1.msra.mxu0 0.0
    %1633 = vmatprep.subr.mxu0 0.0
    %1634 = vmatpush1.msra.mxu0 0.0
    %1635 = vmatprep.subr.mxu0 0.0
    %1636 = vmatpush1.msra.mxu0 0.0
    %1637 = vmatprep.subr.mxu0 0.0
    %1638 = vmatpush1.msra.mxu0 0.0
    %1639 = vmatprep.subr.mxu0 0.0
    %1640 = vmatpush1.msra.mxu0 0.0
    %1641 = vmatprep.subr.mxu0 0.0
    %1642 = vmatpush1.msra.mxu0 0.0
    %1643 = vmatprep.subr.mxu0 0.0
    %1644 = vmatpush1.msra.mxu0 0.0
    %1645 = vmatprep.subr.mxu0 0.0
    %1646 = vmatpush1.msra.mxu0 0.0
    %1647 = vmatprep.subr.mxu0 0.0
    %1648 = vmatpush1.msra.mxu0 0.0
    %1649 = vmatprep.subr.mxu0 0.0
    %1650 = vmatpush1.msra.mxu0 0.0
    %1651 = vmatprep.subr.mxu0 0.0
    %1652 = vmatpush1.msra.mxu0 0.0
    %1653 = vmatprep.subr.mxu0 0.0
    %1654 = vmatpush1.msra.mxu0 0.0
    %1655 = vmatprep.mubr.f32.mxu0 0.0
    %v1656 = vand.u32 %v1362, 4294901760
    %v1657 = vsub.f32 %v1362, %v1656
    %v1658 = vand.u32 %v1657, 4294901760
    %1659 = vmatmul.mubr.f32.gmra.mrb[0].mxu0 %v1658
    %v1660 = vpop.f32.mrb[0].mxu0
    %v1661 = vadd.f32 %v1587, %v1660
    %v1662 = vpop.f32.mrb[0].mxu0
    %1663 = vdwg.mxu0
    %1664 = vmatprep.subr.mxu0 0.0
    %v1665 = vand.u32 %v30, 4294901760
    %v1666 = vsub.f32 %v30, %v1665
    %v1667 = vand.u32 %v1666, 4294901760
    %1668 = vmatpush1.msra.mxu0 %v1667
    %1669 = vmatprep.subr.mxu0 0.0
    %1670 = vmatpush1.msra.mxu0 0.0
    %1671 = vmatprep.subr.mxu0 0.0
    %1672 = vmatpush1.msra.mxu0 0.0
    %1673 = vmatprep.subr.mxu0 0.0
    %1674 = vmatpush1.msra.mxu0 0.0
    %1675 = vmatprep.subr.mxu0 0.0
    %1676 = vmatpush1.msra.mxu0 0.0
    %1677 = vmatprep.subr.mxu0 0.0
    %1678 = vmatpush1.msra.mxu0 0.0
    %1679 = vmatprep.subr.mxu0 0.0
    %1680 = vmatpush1.msra.mxu0 0.0
    %1681 = vmatprep.subr.mxu0 0.0
    %1682 = vmatpush1.msra.mxu0 0.0
    %1683 = vmatprep.subr.mxu0 0.0
    %1684 = vmatpush1.msra.mxu0 0.0
    %1685 = vmatprep.subr.mxu0 0.0
    %1686 = vmatpush1.msra.mxu0 0.0
    %1687 = vmatprep.subr.mxu0 0.0
    %1688 = vmatpush1.msra.mxu0 0.0
    %1689 = vmatprep.subr.mxu0 0.0
    %1690 = vmatpush1.msra.mxu0 0.0
    %1691 = vmatprep.subr.mxu0 0.0
    %1692 = vmatpush1.msra.mxu0 0.0
    %1693 = vmatprep.subr.mxu0 0.0
    %1694 = vmatpush1.msra.mxu0 0.0
    %1695 = vmatprep.subr.mxu0 0.0
    %1696 = vmatpush1.msra.mxu0 0.0
    %1697 = vmatprep.subr.mxu0 0.0
    %1698 = vmatpush1.msra.mxu0 0.0
    %1699 = vmatprep.subr.mxu0 0.0
    %1700 = vmatpush1.msra.mxu0 0.0
    %1701 = vmatprep.subr.mxu0 0.0
    %1702 = vmatpush1.msra.mxu0 0.0
    %1703 = vmatprep.subr.mxu0 0.0
    %1704 = vmatpush1.msra.mxu0 0.0
    %1705 = vmatprep.subr.mxu0 0.0
    %1706 = vmatpush1.msra.mxu0 0.0
    %1707 = vmatprep.subr.mxu0 0.0
    %1708 = vmatpush1.msra.mxu0 0.0
    %1709 = vmatprep.subr.mxu0 0.0
    %1710 = vmatpush1.msra.mxu0 0.0
    %1711 = vmatprep.subr.mxu0 0.0
    %1712 = vmatpush1.msra.mxu0 0.0
    %1713 = vmatprep.subr.mxu0 0.0
    %1714 = vmatpush1.msra.mxu0 0.0
    %1715 = vmatprep.subr.mxu0 0.0
    %1716 = vmatpush1.msra.mxu0 0.0
    %1717 = vmatprep.subr.mxu0 0.0
    %1718 = vmatpush1.msra.mxu0 0.0
    %1719 = vmatprep.subr.mxu0 0.0
    %1720 = vmatpush1.msra.mxu0 0.0
    %1721 = vmatprep.subr.mxu0 0.0
    %1722 = vmatpush1.msra.mxu0 0.0
    %1723 = vmatprep.subr.mxu0 0.0
    %1724 = vmatpush1.msra.mxu0 0.0
    %1725 = vmatprep.subr.mxu0 0.0
    %1726 = vmatpush1.msra.mxu0 0.0
    %1727 = vmatprep.subr.mxu0 0.0
    %1728 = vmatpush1.msra.mxu0 0.0
    %1729 = vmatprep.subr.mxu0 0.0
    %1730 = vmatpush1.msra.mxu0 0.0
    %1731 = vmatprep.mubr.f32.mxu0 0.0
    %v1732 = vand.u32 %v1362, 4294901760
    %1733 = vmatmul.mubr.f32.gmra.mrb[0].mxu0 %v1732
    %v1734 = vpop.f32.mrb[0].mxu0
    %v1735 = vadd.f32 %v1661, %v1734
    %v1736 = vpop.f32.mrb[0].mxu0
    %1737 = vdwg.mxu0
    %1738 = vmatprep.subr.mxu0 0.0
    %v1739 = vand.u32 %v30, 4294901760
    %1740 = vmatpush1.msra.mxu0 %v1739
    %1741 = vmatprep.subr.mxu0 0.0
    %1742 = vmatpush1.msra.mxu0 0.0
    %1743 = vmatprep.subr.mxu0 0.0
    %1744 = vmatpush1.msra.mxu0 0.0
    %1745 = vmatprep.subr.mxu0 0.0
    %1746 = vmatpush1.msra.mxu0 0.0
    %1747 = vmatprep.subr.mxu0 0.0
    %1748 = vmatpush1.msra.mxu0 0.0
    %1749 = vmatprep.subr.mxu0 0.0
    %1750 = vmatpush1.msra.mxu0 0.0
    %1751 = vmatprep.subr.mxu0 0.0
    %1752 = vmatpush1.msra.mxu0 0.0
    %1753 = vmatprep.subr.mxu0 0.0
    %1754 = vmatpush1.msra.mxu0 0.0
    %1755 = vmatprep.subr.mxu0 0.0
    %1756 = vmatpush1.msra.mxu0 0.0
    %1757 = vmatprep.subr.mxu0 0.0
    %1758 = vmatpush1.msra.mxu0 0.0
    %1759 = vmatprep.subr.mxu0 0.0
    %1760 = vmatpush1.msra.mxu0 0.0
    %1761 = vmatprep.subr.mxu0 0.0
    %1762 = vmatpush1.msra.mxu0 0.0
    %1763 = vmatprep.subr.mxu0 0.0
    %1764 = vmatpush1.msra.mxu0 0.0
    %1765 = vmatprep.subr.mxu0 0.0
    %1766 = vmatpush1.msra.mxu0 0.0
    %1767 = vmatprep.subr.mxu0 0.0
    %1768 = vmatpush1.msra.mxu0 0.0
    %1769 = vmatprep.subr.mxu0 0.0
    %1770 = vmatpush1.msra.mxu0 0.0
    %1771 = vmatprep.subr.mxu0 0.0
    %1772 = vmatpush1.msra.mxu0 0.0
    %1773 = vmatprep.subr.mxu0 0.0
    %1774 = vmatpush1.msra.mxu0 0.0
    %1775 = vmatprep.subr.mxu0 0.0
    %1776 = vmatpush1.msra.mxu0 0.0
    %1777 = vmatprep.subr.mxu0 0.0
    %1778 = vmatpush1.msra.mxu0 0.0
    %1779 = vmatprep.subr.mxu0 0.0
    %1780 = vmatpush1.msra.mxu0 0.0
    %1781 = vmatprep.subr.mxu0 0.0
    %1782 = vmatpush1.msra.mxu0 0.0
    %1783 = vmatprep.subr.mxu0 0.0
    %1784 = vmatpush1.msra.mxu0 0.0
    %1785 = vmatprep.subr.mxu0 0.0
    %1786 = vmatpush1.msra.mxu0 0.0
    %1787 = vmatprep.subr.mxu0 0.0
    %1788 = vmatpush1.msra.mxu0 0.0
    %1789 = vmatprep.subr.mxu0 0.0
    %1790 = vmatpush1.msra.mxu0 0.0
    %1791 = vmatprep.subr.mxu0 0.0
    %1792 = vmatpush1.msra.mxu0 0.0
    %1793 = vmatprep.subr.mxu0 0.0
    %1794 = vmatpush1.msra.mxu0 0.0
    %1795 = vmatprep.subr.mxu0 0.0
    %1796 = vmatpush1.msra.mxu0 0.0
    %1797 = vmatprep.subr.mxu0 0.0
    %1798 = vmatpush1.msra.mxu0 0.0
    %1799 = vmatprep.subr.mxu0 0.0
    %1800 = vmatpush1.msra.mxu0 0.0
    %1801 = vmatprep.subr.mxu0 0.0
    %1802 = vmatpush1.msra.mxu0 0.0
    %1803 = vmatprep.mubr.f32.mxu0 0.0
    %v1804 = vand.u32 %v1362, 4294901760
    %1805 = vmatmul.mubr.f32.gmra.mrb[0].mxu0 %v1804
    %v1806 = vpop.f32.mrb[0].mxu0
    %v1807 = vadd.f32 %v1735, %v1806
    %v1808 = vpop.f32.mrb[0].mxu0
    %1809 = vdwg.mxu0
    %1811 = vrot.lane.b32.xlu0 %v1807, 32
    %v1812 = vpop.permute.xlu0 %1811
    %v1814 = vadd.f32 %v1359, %v1812
    %v1815 = vmul.f32 %v1358, %v1353
    %v1816 = vld [vmem:[%s5] sm:$0xff]
    %v1817 = vld [vmem:[%s5 + $0x8] sm:$0xff]
    %v1818 = vld [vmem:[%s5 + $0x10] sm:$0xff]
    %v1819 = vld [vmem:[%s5 + $0x18] sm:$0xff]
    %vm1820 = vcmask 261120
    %v1822 = vsel %vm1820, %v1815, 0
    %1824 = vmatprep.subr.mxu0 0.0
    %v1825 = vand.u32 %v1816, 4294901760
    %1826 = vmatpush1.msra.mxu0 %v1825
    %1827 = vmatprep.subr.mxu0 0.0
    %v1828 = vand.u32 %v1817, 4294901760
    %1829 = vmatpush1.msra.mxu0 %v1828
    %1830 = vmatprep.subr.mxu0 0.0
    %v1831 = vand.u32 %v1818, 4294901760
    %1832 = vmatpush1.msra.mxu0 %v1831
    %1833 = vmatprep.subr.mxu0 0.0
    %v1834 = vand.u32 %v1819, 4294901760
    %1835 = vmatpush1.msra.mxu0 %v1834
    %1836 = vmatprep.subr.mxu0 0.0
    %1837 = vmatpush1.msra.mxu0 0.0
    %1838 = vmatprep.subr.mxu0 0.0
    %1839 = vmatpush1.msra.mxu0 0.0
    %1840 = vmatprep.subr.mxu0 0.0
    %1841 = vmatpush1.msra.mxu0 0.0
    %1842 = vmatprep.subr.mxu0 0.0
    %1843 = vmatpush1.msra.mxu0 0.0
    %1844 = vmatprep.subr.mxu0 0.0
    %1845 = vmatpush1.msra.mxu0 0.0
    %1846 = vmatprep.subr.mxu0 0.0
    %1847 = vmatpush1.msra.mxu0 0.0
    %1848 = vmatprep.subr.mxu0 0.0
    %1849 = vmatpush1.msra.mxu0 0.0
    %1850 = vmatprep.subr.mxu0 0.0
    %1851 = vmatpush1.msra.mxu0 0.0
    %1852 = vmatprep.subr.mxu0 0.0
    %1853 = vmatpush1.msra.mxu0 0.0
    %1854 = vmatprep.subr.mxu0 0.0
    %1855 = vmatpush1.msra.mxu0 0.0
    %1856 = vmatprep.subr.mxu0 0.0
    %1857 = vmatpush1.msra.mxu0 0.0
    %1858 = vmatprep.subr.mxu0 0.0
    %1859 = vmatpush1.msra.mxu0 0.0
    %1860 = vmatprep.subr.mxu0 0.0
    %1861 = vmatpush1.msra.mxu0 0.0
    %1862 = vmatprep.subr.mxu0 0.0
    %1863 = vmatpush1.msra.mxu0 0.0
    %1864 = vmatprep.subr.mxu0 0.0
    %1865 = vmatpush1.msra.mxu0 0.0
    %1866 = vmatprep.subr.mxu0 0.0
    %1867 = vmatpush1.msra.mxu0 0.0
    %1868 = vmatprep.subr.mxu0 0.0
    %1869 = vmatpush1.msra.mxu0 0.0
    %1870 = vmatprep.subr.mxu0 0.0
    %1871 = vmatpush1.msra.mxu0 0.0
    %1872 = vmatprep.subr.mxu0 0.0
    %1873 = vmatpush1.msra.mxu0 0.0
    %1874 = vmatprep.subr.mxu0 0.0
    %1875 = vmatpush1.msra.mxu0 0.0
    %1876 = vmatprep.subr.mxu0 0.0
    %1877 = vmatpush1.msra.mxu0 0.0
    %1878 = vmatprep.subr.mxu0 0.0
    %1879 = vmatpush1.msra.mxu0 0.0
    %1880 = vmatprep.subr.mxu0 0.0
    %1881 = vmatpush1.msra.mxu0 0.0
    %1882 = vmatprep.subr.mxu0 0.0
    %1883 = vmatpush1.msra.mxu0 0.0
    %1884 = vmatprep.subr.mxu0 0.0
    %1885 = vmatpush1.msra.mxu0 0.0
    %1886 = vmatprep.subr.mxu0 0.0
    %1887 = vmatpush1.msra.mxu0 0.0
    %1888 = vmatprep.subr.mxu0 0.0
    %1889 = vmatpush1.msra.mxu0 0.0
    %1890 = vmatprep.subr.mxu0 0.0
    %1891 = vmatpush1.msra.mxu0 0.0
    %1892 = vmatprep.mubr.f32.mxu0 0.0
    %v1893 = vand.u32 %v1822, 4294901760
    %v1894 = vsub.f32 %v1822, %v1893
    %v1895 = vand.u32 %v1894, 4294901760
    %v1896 = vsub.f32 %v1894, %v1895
    %v1897 = vand.u32 %v1896, 4294901760
    %1898 = vmatmul.mubr.f32.gmra.mrb[0].mxu0 %v1897
    %v1899 = vpop.f32.mrb[0].mxu0
    %v1900 = vadd.f32 0.0, %v1899
    %v1901 = vpop.f32.mrb[0].mxu0
    %1902 = vdwg.mxu0
    %1903 = vmatprep.subr.mxu0 0.0
    %v1904 = vand.u32 %v1816, 4294901760
    %v1905 = vsub.f32 %v1816, %v1904
    %v1906 = vand.u32 %v1905, 4294901760
    %v1907 = vsub.f32 %v1905, %v1906
    %v1908 = vand.u32 %v1907, 4294901760
    %1909 = vmatpush1.msra.mxu0 %v1908
    %1910 = vmatprep.subr.mxu0 0.0
    %v1911 = vand.u32 %v1817, 4294901760
    %v1912 = vsub.f32 %v1817, %v1911
    %v1913 = vand.u32 %v1912, 4294901760
    %v1914 = vsub.f32 %v1912, %v1913
    %v1915 = vand.u32 %v1914, 4294901760
    %1916 = vmatpush1.msra.mxu0 %v1915
    %1917 = vmatprep.subr.mxu0 0.0
    %v1918 = vand.u32 %v1818, 4294901760
    %v1919 = vsub.f32 %v1818, %v1918
    %v1920 = vand.u32 %v1919, 4294901760
    %v1921 = vsub.f32 %v1919, %v1920
    %v1922 = vand.u32 %v1921, 4294901760
    %1923 = vmatpush1.msra.mxu0 %v1922
    %1924 = vmatprep.subr.mxu0 0.0
    %v1925 = vand.u32 %v1819, 4294901760
    %v1926 = vsub.f32 %v1819, %v1925
    %v1927 = vand.u32 %v1926, 4294901760
    %v1928 = vsub.f32 %v1926, %v1927
    %v1929 = vand.u32 %v1928, 4294901760
    %1930 = vmatpush1.msra.mxu0 %v1929
    %1931 = vmatprep.subr.mxu0 0.0
    %1932 = vmatpush1.msra.mxu0 0.0
    %1933 = vmatprep.subr.mxu0 0.0
    %1934 = vmatpush1.msra.mxu0 0.0
    %1935 = vmatprep.subr.mxu0 0.0
    %1936 = vmatpush1.msra.mxu0 0.0
    %1937 = vmatprep.subr.mxu0 0.0
    %1938 = vmatpush1.msra.mxu0 0.0
    %1939 = vmatprep.subr.mxu0 0.0
    %1940 = vmatpush1.msra.mxu0 0.0
    %1941 = vmatprep.subr.mxu0 0.0
    %1942 = vmatpush1.msra.mxu0 0.0
    %1943 = vmatprep.subr.mxu0 0.0
    %1944 = vmatpush1.msra.mxu0 0.0
    %1945 = vmatprep.subr.mxu0 0.0
    %1946 = vmatpush1.msra.mxu0 0.0
    %1947 = vmatprep.subr.mxu0 0.0
    %1948 = vmatpush1.msra.mxu0 0.0
    %1949 = vmatprep.subr.mxu0 0.0
    %1950 = vmatpush1.msra.mxu0 0.0
    %1951 = vmatprep.subr.mxu0 0.0
    %1952 = vmatpush1.msra.mxu0 0.0
    %1953 = vmatprep.subr.mxu0 0.0
    %1954 = vmatpush1.msra.mxu0 0.0
    %1955 = vmatprep.subr.mxu0 0.0
    %1956 = vmatpush1.msra.mxu0 0.0
    %1957 = vmatprep.subr.mxu0 0.0
    %1958 = vmatpush1.msra.mxu0 0.0
    %1959 = vmatprep.subr.mxu0 0.0
    %1960 = vmatpush1.msra.mxu0 0.0
    %1961 = vmatprep.subr.mxu0 0.0
    %1962 = vmatpush1.msra.mxu0 0.0
    %1963 = vmatprep.subr.mxu0 0.0
    %1964 = vmatpush1.msra.mxu0 0.0
    %1965 = vmatprep.subr.mxu0 0.0
    %1966 = vmatpush1.msra.mxu0 0.0
    %1967 = vmatprep.subr.mxu0 0.0
    %1968 = vmatpush1.msra.mxu0 0.0
    %1969 = vmatprep.subr.mxu0 0.0
    %1970 = vmatpush1.msra.mxu0 0.0
    %1971 = vmatprep.subr.mxu0 0.0
    %1972 = vmatpush1.msra.mxu0 0.0
    %1973 = vmatprep.subr.mxu0 0.0
    %1974 = vmatpush1.msra.mxu0 0.0
    %1975 = vmatprep.subr.mxu0 0.0
    %1976 = vmatpush1.msra.mxu0 0.0
    %1977 = vmatprep.subr.mxu0 0.0
    %1978 = vmatpush1.msra.mxu0 0.0
    %1979 = vmatprep.subr.mxu0 0.0
    %1980 = vmatpush1.msra.mxu0 0.0
    %1981 = vmatprep.subr.mxu0 0.0
    %1982 = vmatpush1.msra.mxu0 0.0
    %1983 = vmatprep.subr.mxu0 0.0
    %1984 = vmatpush1.msra.mxu0 0.0
    %1985 = vmatprep.subr.mxu0 0.0
    %1986 = vmatpush1.msra.mxu0 0.0
    %1987 = vmatprep.mubr.f32.mxu0 0.0
    %v1988 = vand.u32 %v1822, 4294901760
    %1989 = vmatmul.mubr.f32.gmra.mrb[0].mxu0 %v1988
    %v1990 = vpop.f32.mrb[0].mxu0
    %v1991 = vadd.f32 %v1900, %v1990
    %v1992 = vpop.f32.mrb[0].mxu0
    %1993 = vdwg.mxu0
    %1994 = vmatprep.subr.mxu0 0.0
    %v1995 = vand.u32 %v1816, 4294901760
    %v1996 = vsub.f32 %v1816, %v1995
    %1997 = vmatpush1.msra.mxu0 %v1996
    %1998 = vmatprep.subr.mxu0 0.0
    %v1999 = vand.u32 %v1817, 4294901760
    %v2000 = vsub.f32 %v1817, %v1999
    %2001 = vmatpush1.msra.mxu0 %v2000
    %2002 = vmatprep.subr.mxu0 0.0
    %v2003 = vand.u32 %v1818, 4294901760
    %v2004 = vsub.f32 %v1818, %v2003
    %2005 = vmatpush1.msra.mxu0 %v2004
    %2006 = vmatprep.subr.mxu0 0.0
    %v2007 = vand.u32 %v1819, 4294901760
    %v2008 = vsub.f32 %v1819, %v2007
    %2009 = vmatpush1.msra.mxu0 %v2008
    %2010 = vmatprep.subr.mxu0 0.0
    %2011 = vmatpush1.msra.mxu0 0.0
    %2012 = vmatprep.subr.mxu0 0.0
    %2013 = vmatpush1.msra.mxu0 0.0
    %2014 = vmatprep.subr.mxu0 0.0
    %2015 = vmatpush1.msra.mxu0 0.0
    %2016 = vmatprep.subr.mxu0 0.0
    %2017 = vmatpush1.msra.mxu0 0.0
    %2018 = vmatprep.subr.mxu0 0.0
    %2019 = vmatpush1.msra.mxu0 0.0
    %2020 = vmatprep.subr.mxu0 0.0
    %2021 = vmatpush1.msra.mxu0 0.0
    %2022 = vmatprep.subr.mxu0 0.0
    %2023 = vmatpush1.msra.mxu0 0.0
    %2024 = vmatprep.subr.mxu0 0.0
    %2025 = vmatpush1.msra.mxu0 0.0
    %2026 = vmatprep.subr.mxu0 0.0
    %2027 = vmatpush1.msra.mxu0 0.0
    %2028 = vmatprep.subr.mxu0 0.0
    %2029 = vmatpush1.msra.mxu0 0.0
    %2030 = vmatprep.subr.mxu0 0.0
    %2031 = vmatpush1.msra.mxu0 0.0
    %2032 = vmatprep.subr.mxu0 0.0
    %2033 = vmatpush1.msra.mxu0 0.0
    %2034 = vmatprep.subr.mxu0 0.0
    %2035 = vmatpush1.msra.mxu0 0.0
    %2036 = vmatprep.subr.mxu0 0.0
    %2037 = vmatpush1.msra.mxu0 0.0
    %2038 = vmatprep.subr.mxu0 0.0
    %2039 = vmatpush1.msra.mxu0 0.0
    %2040 = vmatprep.subr.mxu0 0.0
    %2041 = vmatpush1.msra.mxu0 0.0
    %2042 = vmatprep.subr.mxu0 0.0
    %2043 = vmatpush1.msra.mxu0 0.0
    %2044 = vmatprep.subr.mxu0 0.0
    %2045 = vmatpush1.msra.mxu0 0.0
    %2046 = vmatprep.subr.mxu0 0.0
    %2047 = vmatpush1.msra.mxu0 0.0
    %2048 = vmatprep.subr.mxu0 0.0
    %2049 = vmatpush1.msra.mxu0 0.0
    %2050 = vmatprep.subr.mxu0 0.0
    %2051 = vmatpush1.msra.mxu0 0.0
    %2052 = vmatprep.subr.mxu0 0.0
    %2053 = vmatpush1.msra.mxu0 0.0
    %2054 = vmatprep.subr.mxu0 0.0
    %2055 = vmatpush1.msra.mxu0 0.0
    %2056 = vmatprep.subr.mxu0 0.0
    %2057 = vmatpush1.msra.mxu0 0.0
    %2058 = vmatprep.subr.mxu0 0.0
    %2059 = vmatpush1.msra.mxu0 0.0
    %2060 = vmatprep.subr.mxu0 0.0
    %2061 = vmatpush1.msra.mxu0 0.0
    %2062 = vmatprep.subr.mxu0 0.0
    %2063 = vmatpush1.msra.mxu0 0.0
    %2064 = vmatprep.subr.mxu0 0.0
    %2065 = vmatpush1.msra.mxu0 0.0
    %2066 = vmatprep.mubr.f32.mxu0 0.0
    %v2067 = vand.u32 %v1822, 4294901760
    %v2068 = vsub.f32 %v1822, %v2067
    %2069 = vmatmul.mubr.f32.gmra.mrb[0].mxu0 %v2068
    %v2070 = vpop.f32.mrb[0].mxu0
    %v2071 = vadd.f32 %v1991, %v2070
    %v2072 = vpop.f32.mrb[0].mxu0
    %2073 = vdwg.mxu0
    %2074 = vmatprep.subr.mxu0 0.0
    %v2075 = vand.u32 %v1816, 4294901760
    %2076 = vmatpush1.msra.mxu0 %v2075
    %2077 = vmatprep.subr.mxu0 0.0
    %v2078 = vand.u32 %v1817, 4294901760
    %2079 = vmatpush1.msra.mxu0 %v2078
    %2080 = vmatprep.subr.mxu0 0.0
    %v2081 = vand.u32 %v1818, 4294901760
    %2082 = vmatpush1.msra.mxu0 %v2081
    %2083 = vmatprep.subr.mxu0 0.0
    %v2084 = vand.u32 %v1819, 4294901760
    %2085 = vmatpush1.msra.mxu0 %v2084
    %2086 = vmatprep.subr.mxu0 0.0
    %2087 = vmatpush1.msra.mxu0 0.0
    %2088 = vmatprep.subr.mxu0 0.0
    %2089 = vmatpush1.msra.mxu0 0.0
    %2090 = vmatprep.subr.mxu0 0.0
    %2091 = vmatpush1.msra.mxu0 0.0
    %2092 = vmatprep.subr.mxu0 0.0
    %2093 = vmatpush1.msra.mxu0 0.0
    %2094 = vmatprep.subr.mxu0 0.0
    %2095 = vmatpush1.msra.mxu0 0.0
    %2096 = vmatprep.subr.mxu0 0.0
    %2097 = vmatpush1.msra.mxu0 0.0
    %2098 = vmatprep.subr.mxu0 0.0
    %2099 = vmatpush1.msra.mxu0 0.0
    %2100 = vmatprep.subr.mxu0 0.0
    %2101 = vmatpush1.msra.mxu0 0.0
    %2102 = vmatprep.subr.mxu0 0.0
    %2103 = vmatpush1.msra.mxu0 0.0
    %2104 = vmatprep.subr.mxu0 0.0
    %2105 = vmatpush1.msra.mxu0 0.0
    %2106 = vmatprep.subr.mxu0 0.0
    %2107 = vmatpush1.msra.mxu0 0.0
    %2108 = vmatprep.subr.mxu0 0.0
    %2109 = vmatpush1.msra.mxu0 0.0
    %2110 = vmatprep.subr.mxu0 0.0
    %2111 = vmatpush1.msra.mxu0 0.0
    %2112 = vmatprep.subr.mxu0 0.0
    %2113 = vmatpush1.msra.mxu0 0.0
    %2114 = vmatprep.subr.mxu0 0.0
    %2115 = vmatpush1.msra.mxu0 0.0
    %2116 = vmatprep.subr.mxu0 0.0
    %2117 = vmatpush1.msra.mxu0 0.0
    %2118 = vmatprep.subr.mxu0 0.0
    %2119 = vmatpush1.msra.mxu0 0.0
    %2120 = vmatprep.subr.mxu0 0.0
    %2121 = vmatpush1.msra.mxu0 0.0
    %2122 = vmatprep.subr.mxu0 0.0
    %2123 = vmatpush1.msra.mxu0 0.0
    %2124 = vmatprep.subr.mxu0 0.0
    %2125 = vmatpush1.msra.mxu0 0.0
    %2126 = vmatprep.subr.mxu0 0.0
    %2127 = vmatpush1.msra.mxu0 0.0
    %2128 = vmatprep.subr.mxu0 0.0
    %2129 = vmatpush1.msra.mxu0 0.0
    %2130 = vmatprep.subr.mxu0 0.0
    %2131 = vmatpush1.msra.mxu0 0.0
    %2132 = vmatprep.subr.mxu0 0.0
    %2133 = vmatpush1.msra.mxu0 0.0
    %2134 = vmatprep.subr.mxu0 0.0
    %2135 = vmatpush1.msra.mxu0 0.0
    %2136 = vmatprep.subr.mxu0 0.0
    %2137 = vmatpush1.msra.mxu0 0.0
    %2138 = vmatprep.subr.mxu0 0.0
    %2139 = vmatpush1.msra.mxu0 0.0
    %2140 = vmatprep.subr.mxu0 0.0
    %2141 = vmatpush1.msra.mxu0 0.0
    %2142 = vmatprep.mubr.f32.mxu0 0.0
    %v2143 = vand.u32 %v1822, 4294901760
    %v2144 = vsub.f32 %v1822, %v2143
    %v2145 = vand.u32 %v2144, 4294901760
    %2146 = vmatmul.mubr.f32.gmra.mrb[0].mxu0 %v2145
    %v2147 = vpop.f32.mrb[0].mxu0
    %v2148 = vadd.f32 %v2071, %v2147
    %v2149 = vpop.f32.mrb[0].mxu0
    %2150 = vdwg.mxu0
    %2151 = vmatprep.subr.mxu0 0.0
    %v2152 = vand.u32 %v1816, 4294901760
    %v2153 = vsub.f32 %v1816, %v2152
    %v2154 = vand.u32 %v2153, 4294901760
    %2155 = vmatpush1.msra.mxu0 %v2154
    %2156 = vmatprep.subr.mxu0 0.0
    %v2157 = vand.u32 %v1817, 4294901760
    %v2158 = vsub.f32 %v1817, %v2157
    %v2159 = vand.u32 %v2158, 4294901760
    %2160 = vmatpush1.msra.mxu0 %v2159
    %2161 = vmatprep.subr.mxu0 0.0
    %v2162 = vand.u32 %v1818, 4294901760
    %v2163 = vsub.f32 %v1818, %v2162
    %v2164 = vand.u32 %v2163, 4294901760
    %2165 = vmatpush1.msra.mxu0 %v2164
    %2166 = vmatprep.subr.mxu0 0.0
    %v2167 = vand.u32 %v1819, 4294901760
    %v2168 = vsub.f32 %v1819, %v2167
    %v2169 = vand.u32 %v2168, 4294901760
    %2170 = vmatpush1.msra.mxu0 %v2169
    %2171 = vmatprep.subr.mxu0 0.0
    %2172 = vmatpush1.msra.mxu0 0.0
    %2173 = vmatprep.subr.mxu0 0.0
    %2174 = vmatpush1.msra.mxu0 0.0
    %2175 = vmatprep.subr.mxu0 0.0
    %2176 = vmatpush1.msra.mxu0 0.0
    %2177 = vmatprep.subr.mxu0 0.0
    %2178 = vmatpush1.msra.mxu0 0.0
    %2179 = vmatprep.subr.mxu0 0.0
    %2180 = vmatpush1.msra.mxu0 0.0
    %2181 = vmatprep.subr.mxu0 0.0
    %2182 = vmatpush1.msra.mxu0 0.0
    %2183 = vmatprep.subr.mxu0 0.0
    %2184 = vmatpush1.msra.mxu0 0.0
    %2185 = vmatprep.subr.mxu0 0.0
    %2186 = vmatpush1.msra.mxu0 0.0
    %2187 = vmatprep.subr.mxu0 0.0
    %2188 = vmatpush1.msra.mxu0 0.0
    %2189 = vmatprep.subr.mxu0 0.0
    %2190 = vmatpush1.msra.mxu0 0.0
    %2191 = vmatprep.subr.mxu0 0.0
    %2192 = vmatpush1.msra.mxu0 0.0
    %2193 = vmatprep.subr.mxu0 0.0
    %2194 = vmatpush1.msra.mxu0 0.0
    %2195 = vmatprep.subr.mxu0 0.0
    %2196 = vmatpush1.msra.mxu0 0.0
    %2197 = vmatprep.subr.mxu0 0.0
    %2198 = vmatpush1.msra.mxu0 0.0
    %2199 = vmatprep.subr.mxu0 0.0
    %2200 = vmatpush1.msra.mxu0 0.0
    %2201 = vmatprep.subr.mxu0 0.0
    %2202 = vmatpush1.msra.mxu0 0.0
    %2203 = vmatprep.subr.mxu0 0.0
    %2204 = vmatpush1.msra.mxu0 0.0
    %2205 = vmatprep.subr.mxu0 0.0
    %2206 = vmatpush1.msra.mxu0 0.0
    %2207 = vmatprep.subr.mxu0 0.0
    %2208 = vmatpush1.msra.mxu0 0.0
    %2209 = vmatprep.subr.mxu0 0.0
    %2210 = vmatpush1.msra.mxu0 0.0
    %2211 = vmatprep.subr.mxu0 0.0
    %2212 = vmatpush1.msra.mxu0 0.0
    %2213 = vmatprep.subr.mxu0 0.0
    %2214 = vmatpush1.msra.mxu0 0.0
    %2215 = vmatprep.subr.mxu0 0.0
    %2216 = vmatpush1.msra.mxu0 0.0
    %2217 = vmatprep.subr.mxu0 0.0
    %2218 = vmatpush1.msra.mxu0 0.0
    %2219 = vmatprep.subr.mxu0 0.0
    %2220 = vmatpush1.msra.mxu0 0.0
    %2221 = vmatprep.subr.mxu0 0.0
    %2222 = vmatpush1.msra.mxu0 0.0
    %2223 = vmatprep.subr.mxu0 0.0
    %2224 = vmatpush1.msra.mxu0 0.0
    %2225 = vmatprep.subr.mxu0 0.0
    %2226 = vmatpush1.msra.mxu0 0.0
    %2227 = vmatprep.mubr.f32.mxu0 0.0
    %v2228 = vand.u32 %v1822, 4294901760
    %2229 = vmatmul.mubr.f32.gmra.mrb[0].mxu0 %v2228
    %v2230 = vpop.f32.mrb[0].mxu0
    %v2231 = vadd.f32 %v2148, %v2230
    %v2232 = vpop.f32.mrb[0].mxu0
    %2233 = vdwg.mxu0
    %2234 = vmatprep.subr.mxu0 0.0
    %v2235 = vand.u32 %v1816, 4294901760
    %2236 = vmatpush1.msra.mxu0 %v2235
    %2237 = vmatprep.subr.mxu0 0.0
    %v2238 = vand.u32 %v1817, 4294901760
    %2239 = vmatpush1.msra.mxu0 %v2238
    %2240 = vmatprep.subr.mxu0 0.0
    %v2241 = vand.u32 %v1818, 4294901760
    %2242 = vmatpush1.msra.mxu0 %v2241
    %2243 = vmatprep.subr.mxu0 0.0
    %v2244 = vand.u32 %v1819, 4294901760
    %2245 = vmatpush1.msra.mxu0 %v2244
    %2246 = vmatprep.subr.mxu0 0.0
    %2247 = vmatpush1.msra.mxu0 0.0
    %2248 = vmatprep.subr.mxu0 0.0
    %2249 = vmatpush1.msra.mxu0 0.0
    %2250 = vmatprep.subr.mxu0 0.0
    %2251 = vmatpush1.msra.mxu0 0.0
    %2252 = vmatprep.subr.mxu0 0.0
    %2253 = vmatpush1.msra.mxu0 0.0
    %2254 = vmatprep.subr.mxu0 0.0
    %2255 = vmatpush1.msra.mxu0 0.0
    %2256 = vmatprep.subr.mxu0 0.0
    %2257 = vmatpush1.msra.mxu0 0.0
    %2258 = vmatprep.subr.mxu0 0.0
    %2259 = vmatpush1.msra.mxu0 0.0
    %2260 = vmatprep.subr.mxu0 0.0
    %2261 = vmatpush1.msra.mxu0 0.0
    %2262 = vmatprep.subr.mxu0 0.0
    %2263 = vmatpush1.msra.mxu0 0.0
    %2264 = vmatprep.subr.mxu0 0.0
    %2265 = vmatpush1.msra.mxu0 0.0
    %2266 = vmatprep.subr.mxu0 0.0
    %2267 = vmatpush1.msra.mxu0 0.0
    %2268 = vmatprep.subr.mxu0 0.0
    %2269 = vmatpush1.msra.mxu0 0.0
    %2270 = vmatprep.subr.mxu0 0.0
    %2271 = vmatpush1.msra.mxu0 0.0
    %2272 = vmatprep.subr.mxu0 0.0
    %2273 = vmatpush1.msra.mxu0 0.0
    %2274 = vmatprep.subr.mxu0 0.0
    %2275 = vmatpush1.msra.mxu0 0.0
    %2276 = vmatprep.subr.mxu0 0.0
    %2277 = vmatpush1.msra.mxu0 0.0
    %2278 = vmatprep.subr.mxu0 0.0
    %2279 = vmatpush1.msra.mxu0 0.0
    %2280 = vmatprep.subr.mxu0 0.0
    %2281 = vmatpush1.msra.mxu0 0.0
    %2282 = vmatprep.subr.mxu0 0.0
    %2283 = vmatpush1.msra.mxu0 0.0
    %2284 = vmatprep.subr.mxu0 0.0
    %2285 = vmatpush1.msra.mxu0 0.0
    %2286 = vmatprep.subr.mxu0 0.0
    %2287 = vmatpush1.msra.mxu0 0.0
    %2288 = vmatprep.subr.mxu0 0.0
    %2289 = vmatpush1.msra.mxu0 0.0
    %2290 = vmatprep.subr.mxu0 0.0
    %2291 = vmatpush1.msra.mxu0 0.0
    %2292 = vmatprep.subr.mxu0 0.0
    %2293 = vmatpush1.msra.mxu0 0.0
    %2294 = vmatprep.subr.mxu0 0.0
    %2295 = vmatpush1.msra.mxu0 0.0
    %2296 = vmatprep.subr.mxu0 0.0
    %2297 = vmatpush1.msra.mxu0 0.0
    %2298 = vmatprep.subr.mxu0 0.0
    %2299 = vmatpush1.msra.mxu0 0.0
    %2300 = vmatprep.subr.mxu0 0.0
    %2301 = vmatpush1.msra.mxu0 0.0
    %2302 = vmatprep.mubr.f32.mxu0 0.0
    %v2303 = vand.u32 %v1822, 4294901760
    %2304 = vmatmul.mubr.f32.gmra.mrb[0].mxu0 %v2303
    %v2305 = vpop.f32.mrb[0].mxu0
    %v2306 = vadd.f32 %v2231, %v2305
    %v2307 = vpop.f32.mrb[0].mxu0
    %2308 = vdwg.mxu0
    %2310 = vrot.lane.b32.xlu0 %v2306, 32
    %v2311 = vpop.permute.xlu0 %2310
    %v2313 = vadd.f32 %v1814, %v2311
    %v2314 = vmax.f32 %v2313, 0.0
    %2316 = vrot.lane.b32.xlu0 %v2314, 96
    %v2317 = vpop.permute.xlu0 %2316
    %v2319 = vsel %vm1820, %v31, 0
    %v2321 = vsel %vm1820, %v2317, 0
    %2323 = vmatprep.subr.mxu0 0.0
    %v2324 = vand.u32 %v2321, 4294901760
    %2325 = vmatpush1.xpose.msra.mxu0 %v2324
    %2326 = vmatprep.subr.mxu0 0.0
    %2327 = vmatpush1.xpose.msra.mxu0 0.0
    %2328 = vmatprep.subr.mxu0 0.0
    %2329 = vmatpush1.xpose.msra.mxu0 0.0
    %2330 = vmatprep.subr.mxu0 0.0
    %2331 = vmatpush1.xpose.msra.mxu0 0.0
    %2332 = vmatprep.subr.mxu0 0.0
    %2333 = vmatpush1.xpose.msra.mxu0 0.0
    %2334 = vmatprep.subr.mxu0 0.0
    %2335 = vmatpush1.xpose.msra.mxu0 0.0
    %2336 = vmatprep.subr.mxu0 0.0
    %2337 = vmatpush1.xpose.msra.mxu0 0.0
    %2338 = vmatprep.subr.mxu0 0.0
    %2339 = vmatpush1.xpose.msra.mxu0 0.0
    %2340 = vmatprep.subr.mxu0 0.0
    %2341 = vmatpush1.xpose.msra.mxu0 0.0
    %2342 = vmatprep.subr.mxu0 0.0
    %2343 = vmatpush1.xpose.msra.mxu0 0.0
    %2344 = vmatprep.subr.mxu0 0.0
    %2345 = vmatpush1.xpose.msra.mxu0 0.0
    %2346 = vmatprep.subr.mxu0 0.0
    %2347 = vmatpush1.xpose.msra.mxu0 0.0
    %2348 = vmatprep.subr.mxu0 0.0
    %2349 = vmatpush1.xpose.msra.mxu0 0.0
    %2350 = vmatprep.subr.mxu0 0.0
    %2351 = vmatpush1.xpose.msra.mxu0 0.0
    %2352 = vmatprep.subr.mxu0 0.0
    %2353 = vmatpush1.xpose.msra.mxu0 0.0
    %2354 = vmatprep.subr.mxu0 0.0
    %2355 = vmatpush1.xpose.msra.mxu0 0.0
    %2356 = vmatprep.subr.mxu0 0.0
    %2357 = vmatpush1.xpose.msra.mxu0 0.0
    %2358 = vmatprep.subr.mxu0 0.0
    %2359 = vmatpush1.xpose.msra.mxu0 0.0
    %2360 = vmatprep.subr.mxu0 0.0
    %2361 = vmatpush1.xpose.msra.mxu0 0.0
    %2362 = vmatprep.subr.mxu0 0.0
    %2363 = vmatpush1.xpose.msra.mxu0 0.0
    %2364 = vmatprep.subr.mxu0 0.0
    %2365 = vmatpush1.xpose.msra.mxu0 0.0
    %2366 = vmatprep.subr.mxu0 0.0
    %2367 = vmatpush1.xpose.msra.mxu0 0.0
    %2368 = vmatprep.subr.mxu0 0.0
    %2369 = vmatpush1.xpose.msra.mxu0 0.0
    %2370 = vmatprep.subr.mxu0 0.0
    %2371 = vmatpush1.xpose.msra.mxu0 0.0
    %2372 = vmatprep.subr.mxu0 0.0
    %2373 = vmatpush1.xpose.msra.mxu0 0.0
    %2374 = vmatprep.subr.mxu0 0.0
    %2375 = vmatpush1.xpose.msra.mxu0 0.0
    %2376 = vmatprep.subr.mxu0 0.0
    %2377 = vmatpush1.xpose.msra.mxu0 0.0
    %2378 = vmatprep.subr.mxu0 0.0
    %2379 = vmatpush1.xpose.msra.mxu0 0.0
    %2380 = vmatprep.subr.mxu0 0.0
    %2381 = vmatpush1.xpose.msra.mxu0 0.0
    %2382 = vmatprep.subr.mxu0 0.0
    %2383 = vmatpush1.xpose.msra.mxu0 0.0
    %2384 = vmatprep.subr.mxu0 0.0
    %2385 = vmatpush1.xpose.msra.mxu0 0.0
    %2386 = vmatprep.subr.mxu0 0.0
    %2387 = vmatpush1.xpose.msra.mxu0 0.0
    %2388 = vmatprep.mubr.f32.mxu0 0.0
    %v2389 = vand.u32 %v2319, 4294901760
    %v2390 = vsub.f32 %v2319, %v2389
    %v2391 = vand.u32 %v2390, 4294901760
    %v2392 = vsub.f32 %v2390, %v2391
    %v2393 = vand.u32 %v2392, 4294901760
    %2394 = vmatmul.mubr.f32.gmra.mrb[0].mxu0 %v2393
    %v2395 = vpop.f32.mrb[0].mxu0
    %v2396 = vadd.f32 0.0, %v2395
    %v2397 = vpop.f32.mrb[0].mxu0
    %2398 = vdwg.mxu0
    %2399 = vmatprep.subr.mxu0 0.0
    %v2400 = vand.u32 %v2321, 4294901760
    %v2401 = vsub.f32 %v2321, %v2400
    %v2402 = vand.u32 %v2401, 4294901760
    %v2403 = vsub.f32 %v2401, %v2402
    %v2404 = vand.u32 %v2403, 4294901760
    %2405 = vmatpush1.xpose.msra.mxu0 %v2404
    %2406 = vmatprep.subr.mxu0 0.0
    %2407 = vmatpush1.xpose.msra.mxu0 0.0
    %2408 = vmatprep.subr.mxu0 0.0
    %2409 = vmatpush1.xpose.msra.mxu0 0.0
    %2410 = vmatprep.subr.mxu0 0.0
    %2411 = vmatpush1.xpose.msra.mxu0 0.0
    %2412 = vmatprep.subr.mxu0 0.0
    %2413 = vmatpush1.xpose.msra.mxu0 0.0
    %2414 = vmatprep.subr.mxu0 0.0
    %2415 = vmatpush1.xpose.msra.mxu0 0.0
    %2416 = vmatprep.subr.mxu0 0.0
    %2417 = vmatpush1.xpose.msra.mxu0 0.0
    %2418 = vmatprep.subr.mxu0 0.0
    %2419 = vmatpush1.xpose.msra.mxu0 0.0
    %2420 = vmatprep.subr.mxu0 0.0
    %2421 = vmatpush1.xpose.msra.mxu0 0.0
    %2422 = vmatprep.subr.mxu0 0.0
    %2423 = vmatpush1.xpose.msra.mxu0 0.0
    %2424 = vmatprep.subr.mxu0 0.0
    %2425 = vmatpush1.xpose.msra.mxu0 0.0
    %2426 = vmatprep.subr.mxu0 0.0
    %2427 = vmatpush1.xpose.msra.mxu0 0.0
    %2428 = vmatprep.subr.mxu0 0.0
    %2429 = vmatpush1.xpose.msra.mxu0 0.0
    %2430 = vmatprep.subr.mxu0 0.0
    %2431 = vmatpush1.xpose.msra.mxu0 0.0
    %2432 = vmatprep.subr.mxu0 0.0
    %2433 = vmatpush1.xpose.msra.mxu0 0.0
    %2434 = vmatprep.subr.mxu0 0.0
    %2435 = vmatpush1.xpose.msra.mxu0 0.0
    %2436 = vmatprep.subr.mxu0 0.0
    %2437 = vmatpush1.xpose.msra.mxu0 0.0
    %2438 = vmatprep.subr.mxu0 0.0
    %2439 = vmatpush1.xpose.msra.mxu0 0.0
    %2440 = vmatprep.subr.mxu0 0.0
    %2441 = vmatpush1.xpose.msra.mxu0 0.0
    %2442 = vmatprep.subr.mxu0 0.0
    %2443 = vmatpush1.xpose.msra.mxu0 0.0
    %2444 = vmatprep.subr.mxu0 0.0
    %2445 = vmatpush1.xpose.msra.mxu0 0.0
    %2446 = vmatprep.subr.mxu0 0.0
    %2447 = vmatpush1.xpose.msra.mxu0 0.0
    %2448 = vmatprep.subr.mxu0 0.0
    %2449 = vmatpush1.xpose.msra.mxu0 0.0
    %2450 = vmatprep.subr.mxu0 0.0
    %2451 = vmatpush1.xpose.msra.mxu0 0.0
    %2452 = vmatprep.subr.mxu0 0.0
    %2453 = vmatpush1.xpose.msra.mxu0 0.0
    %2454 = vmatprep.subr.mxu0 0.0
    %2455 = vmatpush1.xpose.msra.mxu0 0.0
    %2456 = vmatprep.subr.mxu0 0.0
    %2457 = vmatpush1.xpose.msra.mxu0 0.0
    %2458 = vmatprep.subr.mxu0 0.0
    %2459 = vmatpush1.xpose.msra.mxu0 0.0
    %2460 = vmatprep.subr.mxu0 0.0
    %2461 = vmatpush1.xpose.msra.mxu0 0.0
    %2462 = vmatprep.subr.mxu0 0.0
    %2463 = vmatpush1.xpose.msra.mxu0 0.0
    %2464 = vmatprep.subr.mxu0 0.0
    %2465 = vmatpush1.xpose.msra.mxu0 0.0
    %2466 = vmatprep.subr.mxu0 0.0
    %2467 = vmatpush1.xpose.msra.mxu0 0.0
    %2468 = vmatprep.mubr.f32.mxu0 0.0
    %v2469 = vand.u32 %v2319, 4294901760
    %2470 = vmatmul.mubr.f32.gmra.mrb[0].mxu0 %v2469
    %v2471 = vpop.f32.mrb[0].mxu0
    %v2472 = vadd.f32 %v2396, %v2471
    %v2473 = vpop.f32.mrb[0].mxu0
    %2474 = vdwg.mxu0
    %2475 = vmatprep.subr.mxu0 0.0
    %v2476 = vand.u32 %v2321, 4294901760
    %v2477 = vsub.f32 %v2321, %v2476
    %2478 = vmatpush1.xpose.msra.mxu0 %v2477
    %2479 = vmatprep.subr.mxu0 0.0
    %2480 = vmatpush1.xpose.msra.mxu0 0.0
    %2481 = vmatprep.subr.mxu0 0.0
    %2482 = vmatpush1.xpose.msra.mxu0 0.0
    %2483 = vmatprep.subr.mxu0 0.0
    %2484 = vmatpush1.xpose.msra.mxu0 0.0
    %2485 = vmatprep.subr.mxu0 0.0
    %2486 = vmatpush1.xpose.msra.mxu0 0.0
    %2487 = vmatprep.subr.mxu0 0.0
    %2488 = vmatpush1.xpose.msra.mxu0 0.0
    %2489 = vmatprep.subr.mxu0 0.0
    %2490 = vmatpush1.xpose.msra.mxu0 0.0
    %2491 = vmatprep.subr.mxu0 0.0
    %2492 = vmatpush1.xpose.msra.mxu0 0.0
    %2493 = vmatprep.subr.mxu0 0.0
    %2494 = vmatpush1.xpose.msra.mxu0 0.0
    %2495 = vmatprep.subr.mxu0 0.0
    %2496 = vmatpush1.xpose.msra.mxu0 0.0
    %2497 = vmatprep.subr.mxu0 0.0
    %2498 = vmatpush1.xpose.msra.mxu0 0.0
    %2499 = vmatprep.subr.mxu0 0.0
    %2500 = vmatpush1.xpose.msra.mxu0 0.0
    %2501 = vmatprep.subr.mxu0 0.0
    %2502 = vmatpush1.xpose.msra.mxu0 0.0
    %2503 = vmatprep.subr.mxu0 0.0
    %2504 = vmatpush1.xpose.msra.mxu0 0.0
    %2505 = vmatprep.subr.mxu0 0.0
    %2506 = vmatpush1.xpose.msra.mxu0 0.0
    %2507 = vmatprep.subr.mxu0 0.0
    %2508 = vmatpush1.xpose.msra.mxu0 0.0
    %2509 = vmatprep.subr.mxu0 0.0
    %2510 = vmatpush1.xpose.msra.mxu0 0.0
    %2511 = vmatprep.subr.mxu0 0.0
    %2512 = vmatpush1.xpose.msra.mxu0 0.0
    %2513 = vmatprep.subr.mxu0 0.0
    %2514 = vmatpush1.xpose.msra.mxu0 0.0
    %2515 = vmatprep.subr.mxu0 0.0
    %2516 = vmatpush1.xpose.msra.mxu0 0.0
    %2517 = vmatprep.subr.mxu0 0.0
    %2518 = vmatpush1.xpose.msra.mxu0 0.0
    %2519 = vmatprep.subr.mxu0 0.0
    %2520 = vmatpush1.xpose.msra.mxu0 0.0
    %2521 = vmatprep.subr.mxu0 0.0
    %2522 = vmatpush1.xpose.msra.mxu0 0.0
    %2523 = vmatprep.subr.mxu0 0.0
    %2524 = vmatpush1.xpose.msra.mxu0 0.0
    %2525 = vmatprep.subr.mxu0 0.0
    %2526 = vmatpush1.xpose.msra.mxu0 0.0
    %2527 = vmatprep.subr.mxu0 0.0
    %2528 = vmatpush1.xpose.msra.mxu0 0.0
    %2529 = vmatprep.subr.mxu0 0.0
    %2530 = vmatpush1.xpose.msra.mxu0 0.0
    %2531 = vmatprep.subr.mxu0 0.0
    %2532 = vmatpush1.xpose.msra.mxu0 0.0
    %2533 = vmatprep.subr.mxu0 0.0
    %2534 = vmatpush1.xpose.msra.mxu0 0.0
    %2535 = vmatprep.subr.mxu0 0.0
    %2536 = vmatpush1.xpose.msra.mxu0 0.0
    %2537 = vmatprep.subr.mxu0 0.0
    %2538 = vmatpush1.xpose.msra.mxu0 0.0
    %2539 = vmatprep.subr.mxu0 0.0
    %2540 = vmatpush1.xpose.msra.mxu0 0.0
    %2541 = vmatprep.mubr.f32.mxu0 0.0
    %v2542 = vand.u32 %v2319, 4294901760
    %v2543 = vsub.f32 %v2319, %v2542
    %2544 = vmatmul.mubr.f32.gmra.mrb[0].mxu0 %v2543
    %v2545 = vpop.f32.mrb[0].mxu0
    %v2546 = vadd.f32 %v2472, %v2545
    %v2547 = vpop.f32.mrb[0].mxu0
    %2548 = vdwg.mxu0
    %2549 = vmatprep.subr.mxu0 0.0
    %v2550 = vand.u32 %v2321, 4294901760
    %2551 = vmatpush1.xpose.msra.mxu0 %v2550
    %2552 = vmatprep.subr.mxu0 0.0
    %2553 = vmatpush1.xpose.msra.mxu0 0.0
    %2554 = vmatprep.subr.mxu0 0.0
    %2555 = vmatpush1.xpose.msra.mxu0 0.0
    %2556 = vmatprep.subr.mxu0 0.0
    %2557 = vmatpush1.xpose.msra.mxu0 0.0
    %2558 = vmatprep.subr.mxu0 0.0
    %2559 = vmatpush1.xpose.msra.mxu0 0.0
    %2560 = vmatprep.subr.mxu0 0.0
    %2561 = vmatpush1.xpose.msra.mxu0 0.0
    %2562 = vmatprep.subr.mxu0 0.0
    %2563 = vmatpush1.xpose.msra.mxu0 0.0
    %2564 = vmatprep.subr.mxu0 0.0
    %2565 = vmatpush1.xpose.msra.mxu0 0.0
    %2566 = vmatprep.subr.mxu0 0.0
    %2567 = vmatpush1.xpose.msra.mxu0 0.0
    %2568 = vmatprep.subr.mxu0 0.0
    %2569 = vmatpush1.xpose.msra.mxu0 0.0
    %2570 = vmatprep.subr.mxu0 0.0
    %2571 = vmatpush1.xpose.msra.mxu0 0.0
    %2572 = vmatprep.subr.mxu0 0.0
    %2573 = vmatpush1.xpose.msra.mxu0 0.0
    %2574 = vmatprep.subr.mxu0 0.0
    %2575 = vmatpush1.xpose.msra.mxu0 0.0
    %2576 = vmatprep.subr.mxu0 0.0
    %2577 = vmatpush1.xpose.msra.mxu0 0.0
    %2578 = vmatprep.subr.mxu0 0.0
    %2579 = vmatpush1.xpose.msra.mxu0 0.0
    %2580 = vmatprep.subr.mxu0 0.0
    %2581 = vmatpush1.xpose.msra.mxu0 0.0
    %2582 = vmatprep.subr.mxu0 0.0
    %2583 = vmatpush1.xpose.msra.mxu0 0.0
    %2584 = vmatprep.subr.mxu0 0.0
    %2585 = vmatpush1.xpose.msra.mxu0 0.0
    %2586 = vmatprep.subr.mxu0 0.0
    %2587 = vmatpush1.xpose.msra.mxu0 0.0
    %2588 = vmatprep.subr.mxu0 0.0
    %2589 = vmatpush1.xpose.msra.mxu0 0.0
    %2590 = vmatprep.subr.mxu0 0.0
    %2591 = vmatpush1.xpose.msra.mxu0 0.0
    %2592 = vmatprep.subr.mxu0 0.0
    %2593 = vmatpush1.xpose.msra.mxu0 0.0
    %2594 = vmatprep.subr.mxu0 0.0
    %2595 = vmatpush1.xpose.msra.mxu0 0.0
    %2596 = vmatprep.subr.mxu0 0.0
    %2597 = vmatpush1.xpose.msra.mxu0 0.0
    %2598 = vmatprep.subr.mxu0 0.0
    %2599 = vmatpush1.xpose.msra.mxu0 0.0
    %2600 = vmatprep.subr.mxu0 0.0
    %2601 = vmatpush1.xpose.msra.mxu0 0.0
    %2602 = vmatprep.subr.mxu0 0.0
    %2603 = vmatpush1.xpose.msra.mxu0 0.0
    %2604 = vmatprep.subr.mxu0 0.0
    %2605 = vmatpush1.xpose.msra.mxu0 0.0
    %2606 = vmatprep.subr.mxu0 0.0
    %2607 = vmatpush1.xpose.msra.mxu0 0.0
    %2608 = vmatprep.subr.mxu0 0.0
    %2609 = vmatpush1.xpose.msra.mxu0 0.0
    %2610 = vmatprep.subr.mxu0 0.0
    %2611 = vmatpush1.xpose.msra.mxu0 0.0
    %2612 = vmatprep.subr.mxu0 0.0
    %2613 = vmatpush1.xpose.msra.mxu0 0.0
    %2614 = vmatprep.mubr.f32.mxu0 0.0
    %v2615 = vand.u32 %v2319, 4294901760
    %v2616 = vsub.f32 %v2319, %v2615
    %v2617 = vand.u32 %v2616, 4294901760
    %2618 = vmatmul.mubr.f32.gmra.mrb[0].mxu0 %v2617
    %v2619 = vpop.f32.mrb[0].mxu0
    %v2620 = vadd.f32 %v2546, %v2619
    %v2621 = vpop.f32.mrb[0].mxu0
    %2622 = vdwg.mxu0
    %2623 = vmatprep.subr.mxu0 0.0
    %v2624 = vand.u32 %v2321, 4294901760
    %v2625 = vsub.f32 %v2321, %v2624
    %v2626 = vand.u32 %v2625, 4294901760
    %2627 = vmatpush1.xpose.msra.mxu0 %v2626
    %2628 = vmatprep.subr.mxu0 0.0
    %2629 = vmatpush1.xpose.msra.mxu0 0.0
    %2630 = vmatprep.subr.mxu0 0.0
    %2631 = vmatpush1.xpose.msra.mxu0 0.0
    %2632 = vmatprep.subr.mxu0 0.0
    %2633 = vmatpush1.xpose.msra.mxu0 0.0
    %2634 = vmatprep.subr.mxu0 0.0
    %2635 = vmatpush1.xpose.msra.mxu0 0.0
    %2636 = vmatprep.subr.mxu0 0.0
    %2637 = vmatpush1.xpose.msra.mxu0 0.0
    %2638 = vmatprep.subr.mxu0 0.0
    %2639 = vmatpush1.xpose.msra.mxu0 0.0
    %2640 = vmatprep.subr.mxu0 0.0
    %2641 = vmatpush1.xpose.msra.mxu0 0.0
    %2642 = vmatprep.subr.mxu0 0.0
    %2643 = vmatpush1.xpose.msra.mxu0 0.0
    %2644 = vmatprep.subr.mxu0 0.0
    %2645 = vmatpush1.xpose.msra.mxu0 0.0
    %2646 = vmatprep.subr.mxu0 0.0
    %2647 = vmatpush1.xpose.msra.mxu0 0.0
    %2648 = vmatprep.subr.mxu0 0.0
    %2649 = vmatpush1.xpose.msra.mxu0 0.0
    %2650 = vmatprep.subr.mxu0 0.0
    %2651 = vmatpush1.xpose.msra.mxu0 0.0
    %2652 = vmatprep.subr.mxu0 0.0
    %2653 = vmatpush1.xpose.msra.mxu0 0.0
    %2654 = vmatprep.subr.mxu0 0.0
    %2655 = vmatpush1.xpose.msra.mxu0 0.0
    %2656 = vmatprep.subr.mxu0 0.0
    %2657 = vmatpush1.xpose.msra.mxu0 0.0
    %2658 = vmatprep.subr.mxu0 0.0
    %2659 = vmatpush1.xpose.msra.mxu0 0.0
    %2660 = vmatprep.subr.mxu0 0.0
    %2661 = vmatpush1.xpose.msra.mxu0 0.0
    %2662 = vmatprep.subr.mxu0 0.0
    %2663 = vmatpush1.xpose.msra.mxu0 0.0
    %2664 = vmatprep.subr.mxu0 0.0
    %2665 = vmatpush1.xpose.msra.mxu0 0.0
    %2666 = vmatprep.subr.mxu0 0.0
    %2667 = vmatpush1.xpose.msra.mxu0 0.0
    %2668 = vmatprep.subr.mxu0 0.0
    %2669 = vmatpush1.xpose.msra.mxu0 0.0
    %2670 = vmatprep.subr.mxu0 0.0
    %2671 = vmatpush1.xpose.msra.mxu0 0.0
    %2672 = vmatprep.subr.mxu0 0.0
    %2673 = vmatpush1.xpose.msra.mxu0 0.0
    %2674 = vmatprep.subr.mxu0 0.0
    %2675 = vmatpush1.xpose.msra.mxu0 0.0
    %2676 = vmatprep.subr.mxu0 0.0
    %2677 = vmatpush1.xpose.msra.mxu0 0.0
    %2678 = vmatprep.subr.mxu0 0.0
    %2679 = vmatpush1.xpose.msra.mxu0 0.0
    %2680 = vmatprep.subr.mxu0 0.0
    %2681 = vmatpush1.xpose.msra.mxu0 0.0
    %2682 = vmatprep.subr.mxu0 0.0
    %2683 = vmatpush1.xpose.msra.mxu0 0.0
    %2684 = vmatprep.subr.mxu0 0.0
    %2685 = vmatpush1.xpose.msra.mxu0 0.0
    %2686 = vmatprep.subr.mxu0 0.0
    %2687 = vmatpush1.xpose.msra.mxu0 0.0
    %2688 = vmatprep.subr.mxu0 0.0
    %2689 = vmatpush1.xpose.msra.mxu0 0.0
    %2690 = vmatprep.mubr.f32.mxu0 0.0
    %v2691 = vand.u32 %v2319, 4294901760
    %2692 = vmatmul.mubr.f32.gmra.mrb[0].mxu0 %v2691
    %v2693 = vpop.f32.mrb[0].mxu0
    %v2694 = vadd.f32 %v2620, %v2693
    %v2695 = vpop.f32.mrb[0].mxu0
    %2696 = vdwg.mxu0
    %2697 = vmatprep.subr.mxu0 0.0
    %v2698 = vand.u32 %v2321, 4294901760
    %2699 = vmatpush1.xpose.msra.mxu0 %v2698
    %2700 = vmatprep.subr.mxu0 0.0
    %2701 = vmatpush1.xpose.msra.mxu0 0.0
    %2702 = vmatprep.subr.mxu0 0.0
    %2703 = vmatpush1.xpose.msra.mxu0 0.0
    %2704 = vmatprep.subr.mxu0 0.0
    %2705 = vmatpush1.xpose.msra.mxu0 0.0
    %2706 = vmatprep.subr.mxu0 0.0
    %2707 = vmatpush1.xpose.msra.mxu0 0.0
    %2708 = vmatprep.subr.mxu0 0.0
    %2709 = vmatpush1.xpose.msra.mxu0 0.0
    %2710 = vmatprep.subr.mxu0 0.0
    %2711 = vmatpush1.xpose.msra.mxu0 0.0
    %2712 = vmatprep.subr.mxu0 0.0
    %2713 = vmatpush1.xpose.msra.mxu0 0.0
    %2714 = vmatprep.subr.mxu0 0.0
    %2715 = vmatpush1.xpose.msra.mxu0 0.0
    %2716 = vmatprep.subr.mxu0 0.0
    %2717 = vmatpush1.xpose.msra.mxu0 0.0
    %2718 = vmatprep.subr.mxu0 0.0
    %2719 = vmatpush1.xpose.msra.mxu0 0.0
    %2720 = vmatprep.subr.mxu0 0.0
    %2721 = vmatpush1.xpose.msra.mxu0 0.0
    %2722 = vmatprep.subr.mxu0 0.0
    %2723 = vmatpush1.xpose.msra.mxu0 0.0
    %2724 = vmatprep.subr.mxu0 0.0
    %2725 = vmatpush1.xpose.msra.mxu0 0.0
    %2726 = vmatprep.subr.mxu0 0.0
    %2727 = vmatpush1.xpose.msra.mxu0 0.0
    %2728 = vmatprep.subr.mxu0 0.0
    %2729 = vmatpush1.xpose.msra.mxu0 0.0
    %2730 = vmatprep.subr.mxu0 0.0
    %2731 = vmatpush1.xpose.msra.mxu0 0.0
    %2732 = vmatprep.subr.mxu0 0.0
    %2733 = vmatpush1.xpose.msra.mxu0 0.0
    %2734 = vmatprep.subr.mxu0 0.0
    %2735 = vmatpush1.xpose.msra.mxu0 0.0
    %2736 = vmatprep.subr.mxu0 0.0
    %2737 = vmatpush1.xpose.msra.mxu0 0.0
    %2738 = vmatprep.subr.mxu0 0.0
    %2739 = vmatpush1.xpose.msra.mxu0 0.0
    %2740 = vmatprep.subr.mxu0 0.0
    %2741 = vmatpush1.xpose.msra.mxu0 0.0
    %2742 = vmatprep.subr.mxu0 0.0
    %2743 = vmatpush1.xpose.msra.mxu0 0.0
    %2744 = vmatprep.subr.mxu0 0.0
    %2745 = vmatpush1.xpose.msra.mxu0 0.0
    %2746 = vmatprep.subr.mxu0 0.0
    %2747 = vmatpush1.xpose.msra.mxu0 0.0
    %2748 = vmatprep.subr.mxu0 0.0
    %2749 = vmatpush1.xpose.msra.mxu0 0.0
    %2750 = vmatprep.subr.mxu0 0.0
    %2751 = vmatpush1.xpose.msra.mxu0 0.0
    %2752 = vmatprep.subr.mxu0 0.0
    %2753 = vmatpush1.xpose.msra.mxu0 0.0
    %2754 = vmatprep.subr.mxu0 0.0
    %2755 = vmatpush1.xpose.msra.mxu0 0.0
    %2756 = vmatprep.subr.mxu0 0.0
    %2757 = vmatpush1.xpose.msra.mxu0 0.0
    %2758 = vmatprep.subr.mxu0 0.0
    %2759 = vmatpush1.xpose.msra.mxu0 0.0
    %2760 = vmatprep.subr.mxu0 0.0
    %2761 = vmatpush1.xpose.msra.mxu0 0.0
    %2762 = vmatprep.mubr.f32.mxu0 0.0
    %v2763 = vand.u32 %v2319, 4294901760
    %2764 = vmatmul.mubr.f32.gmra.mrb[0].mxu0 %v2763
    %v2765 = vpop.f32.mrb[0].mxu0
    %v2766 = vadd.f32 %v2694, %v2765
    %v2767 = vpop.f32.mrb[0].mxu0
    %2768 = vdwg.mxu0
    %v2770 = vsel %vm1360, %v32, 0
    %2772 = vmatprep.subr.mxu0 0.0
    %v2773 = vand.u32 %v1362, 4294901760
    %2774 = vmatpush1.xpose.msra.mxu0 %v2773
    %2775 = vmatprep.subr.mxu0 0.0
    %2776 = vmatpush1.xpose.msra.mxu0 0.0
    %2777 = vmatprep.subr.mxu0 0.0
    %2778 = vmatpush1.xpose.msra.mxu0 0.0
    %2779 = vmatprep.subr.mxu0 0.0
    %2780 = vmatpush1.xpose.msra.mxu0 0.0
    %2781 = vmatprep.subr.mxu0 0.0
    %2782 = vmatpush1.xpose.msra.mxu0 0.0
    %2783 = vmatprep.subr.mxu0 0.0
    %2784 = vmatpush1.xpose.msra.mxu0 0.0
    %2785 = vmatprep.subr.mxu0 0.0
    %2786 = vmatpush1.xpose.msra.mxu0 0.0
    %2787 = vmatprep.subr.mxu0 0.0
    %2788 = vmatpush1.xpose.msra.mxu0 0.0
    %2789 = vmatprep.subr.mxu0 0.0
    %2790 = vmatpush1.xpose.msra.mxu0 0.0
    %2791 = vmatprep.subr.mxu0 0.0
    %2792 = vmatpush1.xpose.msra.mxu0 0.0
    %2793 = vmatprep.subr.mxu0 0.0
    %2794 = vmatpush1.xpose.msra.mxu0 0.0
    %2795 = vmatprep.subr.mxu0 0.0
    %2796 = vmatpush1.xpose.msra.mxu0 0.0
    %2797 = vmatprep.subr.mxu0 0.0
    %2798 = vmatpush1.xpose.msra.mxu0 0.0
    %2799 = vmatprep.subr.mxu0 0.0
    %2800 = vmatpush1.xpose.msra.mxu0 0.0
    %2801 = vmatprep.subr.mxu0 0.0
    %2802 = vmatpush1.xpose.msra.mxu0 0.0
    %2803 = vmatprep.subr.mxu0 0.0
    %2804 = vmatpush1.xpose.msra.mxu0 0.0
    %2805 = vmatprep.subr.mxu0 0.0
    %2806 = vmatpush1.xpose.msra.mxu0 0.0
    %2807 = vmatprep.subr.mxu0 0.0
    %2808 = vmatpush1.xpose.msra.mxu0 0.0
    %2809 = vmatprep.subr.mxu0 0.0
    %2810 = vmatpush1.xpose.msra.mxu0 0.0
    %2811 = vmatprep.subr.mxu0 0.0
    %2812 = vmatpush1.xpose.msra.mxu0 0.0
    %2813 = vmatprep.subr.mxu0 0.0
    %2814 = vmatpush1.xpose.msra.mxu0 0.0
    %2815 = vmatprep.subr.mxu0 0.0
    %2816 = vmatpush1.xpose.msra.mxu0 0.0
    %2817 = vmatprep.subr.mxu0 0.0
    %2818 = vmatpush1.xpose.msra.mxu0 0.0
    %2819 = vmatprep.subr.mxu0 0.0
    %2820 = vmatpush1.xpose.msra.mxu0 0.0
    %2821 = vmatprep.subr.mxu0 0.0
    %2822 = vmatpush1.xpose.msra.mxu0 0.0
    %2823 = vmatprep.subr.mxu0 0.0
    %2824 = vmatpush1.xpose.msra.mxu0 0.0
    %2825 = vmatprep.subr.mxu0 0.0
    %2826 = vmatpush1.xpose.msra.mxu0 0.0
    %2827 = vmatprep.subr.mxu0 0.0
    %2828 = vmatpush1.xpose.msra.mxu0 0.0
    %2829 = vmatprep.subr.mxu0 0.0
    %2830 = vmatpush1.xpose.msra.mxu0 0.0
    %2831 = vmatprep.subr.mxu0 0.0
    %2832 = vmatpush1.xpose.msra.mxu0 0.0
    %2833 = vmatprep.subr.mxu0 0.0
    %2834 = vmatpush1.xpose.msra.mxu0 0.0
    %2835 = vmatprep.subr.mxu0 0.0
    %2836 = vmatpush1.xpose.msra.mxu0 0.0
    %2837 = vmatprep.mubr.f32.mxu0 0.0
    %v2838 = vand.u32 %v2770, 4294901760
    %v2839 = vsub.f32 %v2770, %v2838
    %v2840 = vand.u32 %v2839, 4294901760
    %v2841 = vsub.f32 %v2839, %v2840
    %v2842 = vand.u32 %v2841, 4294901760
    %2843 = vmatmul.mubr.f32.gmra.mrb[0].mxu0 %v2842
    %v2844 = vpop.f32.mrb[0].mxu0
    %v2845 = vadd.f32 0.0, %v2844
    %v2846 = vpop.f32.mrb[0].mxu0
    %2847 = vdwg.mxu0
    %2848 = vmatprep.subr.mxu0 0.0
    %v2849 = vand.u32 %v1362, 4294901760
    %v2850 = vsub.f32 %v1362, %v2849
    %v2851 = vand.u32 %v2850, 4294901760
    %v2852 = vsub.f32 %v2850, %v2851
    %v2853 = vand.u32 %v2852, 4294901760
    %2854 = vmatpush1.xpose.msra.mxu0 %v2853
    %2855 = vmatprep.subr.mxu0 0.0
    %2856 = vmatpush1.xpose.msra.mxu0 0.0
    %2857 = vmatprep.subr.mxu0 0.0
    %2858 = vmatpush1.xpose.msra.mxu0 0.0
    %2859 = vmatprep.subr.mxu0 0.0
    %2860 = vmatpush1.xpose.msra.mxu0 0.0
    %2861 = vmatprep.subr.mxu0 0.0
    %2862 = vmatpush1.xpose.msra.mxu0 0.0
    %2863 = vmatprep.subr.mxu0 0.0
    %2864 = vmatpush1.xpose.msra.mxu0 0.0
    %2865 = vmatprep.subr.mxu0 0.0
    %2866 = vmatpush1.xpose.msra.mxu0 0.0
    %2867 = vmatprep.subr.mxu0 0.0
    %2868 = vmatpush1.xpose.msra.mxu0 0.0
    %2869 = vmatprep.subr.mxu0 0.0
    %2870 = vmatpush1.xpose.msra.mxu0 0.0
    %2871 = vmatprep.subr.mxu0 0.0
    %2872 = vmatpush1.xpose.msra.mxu0 0.0
    %2873 = vmatprep.subr.mxu0 0.0
    %2874 = vmatpush1.xpose.msra.mxu0 0.0
    %2875 = vmatprep.subr.mxu0 0.0
    %2876 = vmatpush1.xpose.msra.mxu0 0.0
    %2877 = vmatprep.subr.mxu0 0.0
    %2878 = vmatpush1.xpose.msra.mxu0 0.0
    %2879 = vmatprep.subr.mxu0 0.0
    %2880 = vmatpush1.xpose.msra.mxu0 0.0
    %2881 = vmatprep.subr.mxu0 0.0
    %2882 = vmatpush1.xpose.msra.mxu0 0.0
    %2883 = vmatprep.subr.mxu0 0.0
    %2884 = vmatpush1.xpose.msra.mxu0 0.0
    %2885 = vmatprep.subr.mxu0 0.0
    %2886 = vmatpush1.xpose.msra.mxu0 0.0
    %2887 = vmatprep.subr.mxu0 0.0
    %2888 = vmatpush1.xpose.msra.mxu0 0.0
    %2889 = vmatprep.subr.mxu0 0.0
    %2890 = vmatpush1.xpose.msra.mxu0 0.0
    %2891 = vmatprep.subr.mxu0 0.0
    %2892 = vmatpush1.xpose.msra.mxu0 0.0
    %2893 = vmatprep.subr.mxu0 0.0
    %2894 = vmatpush1.xpose.msra.mxu0 0.0
    %2895 = vmatprep.subr.mxu0 0.0
    %2896 = vmatpush1.xpose.msra.mxu0 0.0
    %2897 = vmatprep.subr.mxu0 0.0
    %2898 = vmatpush1.xpose.msra.mxu0 0.0
    %2899 = vmatprep.subr.mxu0 0.0
    %2900 = vmatpush1.xpose.msra.mxu0 0.0
    %2901 = vmatprep.subr.mxu0 0.0
    %2902 = vmatpush1.xpose.msra.mxu0 0.0
    %2903 = vmatprep.subr.mxu0 0.0
    %2904 = vmatpush1.xpose.msra.mxu0 0.0
    %2905 = vmatprep.subr.mxu0 0.0
    %2906 = vmatpush1.xpose.msra.mxu0 0.0
    %2907 = vmatprep.subr.mxu0 0.0
    %2908 = vmatpush1.xpose.msra.mxu0 0.0
    %2909 = vmatprep.subr.mxu0 0.0
    %2910 = vmatpush1.xpose.msra.mxu0 0.0
    %2911 = vmatprep.subr.mxu0 0.0
    %2912 = vmatpush1.xpose.msra.mxu0 0.0
    %2913 = vmatprep.subr.mxu0 0.0
    %2914 = vmatpush1.xpose.msra.mxu0 0.0
    %2915 = vmatprep.subr.mxu0 0.0
    %2916 = vmatpush1.xpose.msra.mxu0 0.0
    %2917 = vmatprep.mubr.f32.mxu0 0.0
    %v2918 = vand.u32 %v2770, 4294901760
    %2919 = vmatmul.mubr.f32.gmra.mrb[0].mxu0 %v2918
    %v2920 = vpop.f32.mrb[0].mxu0
    %v2921 = vadd.f32 %v2845, %v2920
    %v2922 = vpop.f32.mrb[0].mxu0
    %2923 = vdwg.mxu0
    %2924 = vmatprep.subr.mxu0 0.0
    %v2925 = vand.u32 %v1362, 4294901760
    %v2926 = vsub.f32 %v1362, %v2925
    %2927 = vmatpush1.xpose.msra.mxu0 %v2926
    %2928 = vmatprep.subr.mxu0 0.0
    %2929 = vmatpush1.xpose.msra.mxu0 0.0
    %2930 = vmatprep.subr.mxu0 0.0
    %2931 = vmatpush1.xpose.msra.mxu0 0.0
    %2932 = vmatprep.subr.mxu0 0.0
    %2933 = vmatpush1.xpose.msra.mxu0 0.0
    %2934 = vmatprep.subr.mxu0 0.0
    %2935 = vmatpush1.xpose.msra.mxu0 0.0
    %2936 = vmatprep.subr.mxu0 0.0
    %2937 = vmatpush1.xpose.msra.mxu0 0.0
    %2938 = vmatprep.subr.mxu0 0.0
    %2939 = vmatpush1.xpose.msra.mxu0 0.0
    %2940 = vmatprep.subr.mxu0 0.0
    %2941 = vmatpush1.xpose.msra.mxu0 0.0
    %2942 = vmatprep.subr.mxu0 0.0
    %2943 = vmatpush1.xpose.msra.mxu0 0.0
    %2944 = vmatprep.subr.mxu0 0.0
    %2945 = vmatpush1.xpose.msra.mxu0 0.0
    %2946 = vmatprep.subr.mxu0 0.0
    %2947 = vmatpush1.xpose.msra.mxu0 0.0
    %2948 = vmatprep.subr.mxu0 0.0
    %2949 = vmatpush1.xpose.msra.mxu0 0.0
    %2950 = vmatprep.subr.mxu0 0.0
    %2951 = vmatpush1.xpose.msra.mxu0 0.0
    %2952 = vmatprep.subr.mxu0 0.0
    %2953 = vmatpush1.xpose.msra.mxu0 0.0
    %2954 = vmatprep.subr.mxu0 0.0
    %2955 = vmatpush1.xpose.msra.mxu0 0.0
    %2956 = vmatprep.subr.mxu0 0.0
    %2957 = vmatpush1.xpose.msra.mxu0 0.0
    %2958 = vmatprep.subr.mxu0 0.0
    %2959 = vmatpush1.xpose.msra.mxu0 0.0
    %2960 = vmatprep.subr.mxu0 0.0
    %2961 = vmatpush1.xpose.msra.mxu0 0.0
    %2962 = vmatprep.subr.mxu0 0.0
    %2963 = vmatpush1.xpose.msra.mxu0 0.0
    %2964 = vmatprep.subr.mxu0 0.0
    %2965 = vmatpush1.xpose.msra.mxu0 0.0
    %2966 = vmatprep.subr.mxu0 0.0
    %2967 = vmatpush1.xpose.msra.mxu0 0.0
    %2968 = vmatprep.subr.mxu0 0.0
    %2969 = vmatpush1.xpose.msra.mxu0 0.0
    %2970 = vmatprep.subr.mxu0 0.0
    %2971 = vmatpush1.xpose.msra.mxu0 0.0
    %2972 = vmatprep.subr.mxu0 0.0
    %2973 = vmatpush1.xpose.msra.mxu0 0.0
    %2974 = vmatprep.subr.mxu0 0.0
    %2975 = vmatpush1.xpose.msra.mxu0 0.0
    %2976 = vmatprep.subr.mxu0 0.0
    %2977 = vmatpush1.xpose.msra.mxu0 0.0
    %2978 = vmatprep.subr.mxu0 0.0
    %2979 = vmatpush1.xpose.msra.mxu0 0.0
    %2980 = vmatprep.subr.mxu0 0.0
    %2981 = vmatpush1.xpose.msra.mxu0 0.0
    %2982 = vmatprep.subr.mxu0 0.0
    %2983 = vmatpush1.xpose.msra.mxu0 0.0
    %2984 = vmatprep.subr.mxu0 0.0
    %2985 = vmatpush1.xpose.msra.mxu0 0.0
    %2986 = vmatprep.subr.mxu0 0.0
    %2987 = vmatpush1.xpose.msra.mxu0 0.0
    %2988 = vmatprep.subr.mxu0 0.0
    %2989 = vmatpush1.xpose.msra.mxu0 0.0
    %2990 = vmatprep.mubr.f32.mxu0 0.0
    %v2991 = vand.u32 %v2770, 4294901760
    %v2992 = vsub.f32 %v2770, %v2991
    %2993 = vmatmul.mubr.f32.gmra.mrb[0].mxu0 %v2992
    %v2994 = vpop.f32.mrb[0].mxu0
    %v2995 = vadd.f32 %v2921, %v2994
    %v2996 = vpop.f32.mrb[0].mxu0
    %2997 = vdwg.mxu0
    %2998 = vmatprep.subr.mxu0 0.0
    %v2999 = vand.u32 %v1362, 4294901760
    %3000 = vmatpush1.xpose.msra.mxu0 %v2999
    %3001 = vmatprep.subr.mxu0 0.0
    %3002 = vmatpush1.xpose.msra.mxu0 0.0
    %3003 = vmatprep.subr.mxu0 0.0
    %3004 = vmatpush1.xpose.msra.mxu0 0.0
    %3005 = vmatprep.subr.mxu0 0.0
    %3006 = vmatpush1.xpose.msra.mxu0 0.0
    %3007 = vmatprep.subr.mxu0 0.0
    %3008 = vmatpush1.xpose.msra.mxu0 0.0
    %3009 = vmatprep.subr.mxu0 0.0
    %3010 = vmatpush1.xpose.msra.mxu0 0.0
    %3011 = vmatprep.subr.mxu0 0.0
    %3012 = vmatpush1.xpose.msra.mxu0 0.0
    %3013 = vmatprep.subr.mxu0 0.0
    %3014 = vmatpush1.xpose.msra.mxu0 0.0
    %3015 = vmatprep.subr.mxu0 0.0
    %3016 = vmatpush1.xpose.msra.mxu0 0.0
    %3017 = vmatprep.subr.mxu0 0.0
    %3018 = vmatpush1.xpose.msra.mxu0 0.0
    %3019 = vmatprep.subr.mxu0 0.0
    %3020 = vmatpush1.xpose.msra.mxu0 0.0
    %3021 = vmatprep.subr.mxu0 0.0
    %3022 = vmatpush1.xpose.msra.mxu0 0.0
    %3023 = vmatprep.subr.mxu0 0.0
    %3024 = vmatpush1.xpose.msra.mxu0 0.0
    %3025 = vmatprep.subr.mxu0 0.0
    %3026 = vmatpush1.xpose.msra.mxu0 0.0
    %3027 = vmatprep.subr.mxu0 0.0
    %3028 = vmatpush1.xpose.msra.mxu0 0.0
    %3029 = vmatprep.subr.mxu0 0.0
    %3030 = vmatpush1.xpose.msra.mxu0 0.0
    %3031 = vmatprep.subr.mxu0 0.0
    %3032 = vmatpush1.xpose.msra.mxu0 0.0
    %3033 = vmatprep.subr.mxu0 0.0
    %3034 = vmatpush1.xpose.msra.mxu0 0.0
    %3035 = vmatprep.subr.mxu0 0.0
    %3036 = vmatpush1.xpose.msra.mxu0 0.0
    %3037 = vmatprep.subr.mxu0 0.0
    %3038 = vmatpush1.xpose.msra.mxu0 0.0
    %3039 = vmatprep.subr.mxu0 0.0
    %3040 = vmatpush1.xpose.msra.mxu0 0.0
    %3041 = vmatprep.subr.mxu0 0.0
    %3042 = vmatpush1.xpose.msra.mxu0 0.0
    %3043 = vmatprep.subr.mxu0 0.0
    %3044 = vmatpush1.xpose.msra.mxu0 0.0
    %3045 = vmatprep.subr.mxu0 0.0
    %3046 = vmatpush1.xpose.msra.mxu0 0.0
    %3047 = vmatprep.subr.mxu0 0.0
    %3048 = vmatpush1.xpose.msra.mxu0 0.0
    %3049 = vmatprep.subr.mxu0 0.0
    %3050 = vmatpush1.xpose.msra.mxu0 0.0
    %3051 = vmatprep.subr.mxu0 0.0
    %3052 = vmatpush1.xpose.msra.mxu0 0.0
    %3053 = vmatprep.subr.mxu0 0.0
    %3054 = vmatpush1.xpose.msra.mxu0 0.0
    %3055 = vmatprep.subr.mxu0 0.0
    %3056 = vmatpush1.xpose.msra.mxu0 0.0
    %3057 = vmatprep.subr.mxu0 0.0
    %3058 = vmatpush1.xpose.msra.mxu0 0.0
    %3059 = vmatprep.subr.mxu0 0.0
    %3060 = vmatpush1.xpose.msra.mxu0 0.0
    %3061 = vmatprep.subr.mxu0 0.0
    %3062 = vmatpush1.xpose.msra.mxu0 0.0
    %3063 = vmatprep.mubr.f32.mxu0 0.0
    %v3064 = vand.u32 %v2770, 4294901760
    %v3065 = vsub.f32 %v2770, %v3064
    %v3066 = vand.u32 %v3065, 4294901760
    %3067 = vmatmul.mubr.f32.gmra.mrb[0].mxu0 %v3066
    %v3068 = vpop.f32.mrb[0].mxu0
    %v3069 = vadd.f32 %v2995, %v3068
    %v3070 = vpop.f32.mrb[0].mxu0
    %3071 = vdwg.mxu0
    %3072 = vmatprep.subr.mxu0 0.0
    %v3073 = vand.u32 %v1362, 4294901760
    %v3074 = vsub.f32 %v1362, %v3073
    %v3075 = vand.u32 %v3074, 4294901760
    %3076 = vmatpush1.xpose.msra.mxu0 %v3075
    %3077 = vmatprep.subr.mxu0 0.0
    %3078 = vmatpush1.xpose.msra.mxu0 0.0
    %3079 = vmatprep.subr.mxu0 0.0
    %3080 = vmatpush1.xpose.msra.mxu0 0.0
    %3081 = vmatprep.subr.mxu0 0.0
    %3082 = vmatpush1.xpose.msra.mxu0 0.0
    %3083 = vmatprep.subr.mxu0 0.0
    %3084 = vmatpush1.xpose.msra.mxu0 0.0
    %3085 = vmatprep.subr.mxu0 0.0
    %3086 = vmatpush1.xpose.msra.mxu0 0.0
    %3087 = vmatprep.subr.mxu0 0.0
    %3088 = vmatpush1.xpose.msra.mxu0 0.0
    %3089 = vmatprep.subr.mxu0 0.0
    %3090 = vmatpush1.xpose.msra.mxu0 0.0
    %3091 = vmatprep.subr.mxu0 0.0
    %3092 = vmatpush1.xpose.msra.mxu0 0.0
    %3093 = vmatprep.subr.mxu0 0.0
    %3094 = vmatpush1.xpose.msra.mxu0 0.0
    %3095 = vmatprep.subr.mxu0 0.0
    %3096 = vmatpush1.xpose.msra.mxu0 0.0
    %3097 = vmatprep.subr.mxu0 0.0
    %3098 = vmatpush1.xpose.msra.mxu0 0.0
    %3099 = vmatprep.subr.mxu0 0.0
    %3100 = vmatpush1.xpose.msra.mxu0 0.0
    %3101 = vmatprep.subr.mxu0 0.0
    %3102 = vmatpush1.xpose.msra.mxu0 0.0
    %3103 = vmatprep.subr.mxu0 0.0
    %3104 = vmatpush1.xpose.msra.mxu0 0.0
    %3105 = vmatprep.subr.mxu0 0.0
    %3106 = vmatpush1.xpose.msra.mxu0 0.0
    %3107 = vmatprep.subr.mxu0 0.0
    %3108 = vmatpush1.xpose.msra.mxu0 0.0
    %3109 = vmatprep.subr.mxu0 0.0
    %3110 = vmatpush1.xpose.msra.mxu0 0.0
    %3111 = vmatprep.subr.mxu0 0.0
    %3112 = vmatpush1.xpose.msra.mxu0 0.0
    %3113 = vmatprep.subr.mxu0 0.0
    %3114 = vmatpush1.xpose.msra.mxu0 0.0
    %3115 = vmatprep.subr.mxu0 0.0
    %3116 = vmatpush1.xpose.msra.mxu0 0.0
    %3117 = vmatprep.subr.mxu0 0.0
    %3118 = vmatpush1.xpose.msra.mxu0 0.0
    %3119 = vmatprep.subr.mxu0 0.0
    %3120 = vmatpush1.xpose.msra.mxu0 0.0
    %3121 = vmatprep.subr.mxu0 0.0
    %3122 = vmatpush1.xpose.msra.mxu0 0.0
    %3123 = vmatprep.subr.mxu0 0.0
    %3124 = vmatpush1.xpose.msra.mxu0 0.0
    %3125 = vmatprep.subr.mxu0 0.0
    %3126 = vmatpush1.xpose.msra.mxu0 0.0
    %3127 = vmatprep.subr.mxu0 0.0
    %3128 = vmatpush1.xpose.msra.mxu0 0.0
    %3129 = vmatprep.subr.mxu0 0.0
    %3130 = vmatpush1.xpose.msra.mxu0 0.0
    %3131 = vmatprep.subr.mxu0 0.0
    %3132 = vmatpush1.xpose.msra.mxu0 0.0
    %3133 = vmatprep.subr.mxu0 0.0
    %3134 = vmatpush1.xpose.msra.mxu0 0.0
    %3135 = vmatprep.subr.mxu0 0.0
    %3136 = vmatpush1.xpose.msra.mxu0 0.0
    %3137 = vmatprep.subr.mxu0 0.0
    %3138 = vmatpush1.xpose.msra.mxu0 0.0
    %3139 = vmatprep.mubr.f32.mxu0 0.0
    %v3140 = vand.u32 %v2770, 4294901760
    %3141 = vmatmul.mubr.f32.gmra.mrb[0].mxu0 %v3140
    %v3142 = vpop.f32.mrb[0].mxu0
    %v3143 = vadd.f32 %v3069, %v3142
    %v3144 = vpop.f32.mrb[0].mxu0
    %3145 = vdwg.mxu0
    %3146 = vmatprep.subr.mxu0 0.0
    %v3147 = vand.u32 %v1362, 4294901760
    %3148 = vmatpush1.xpose.msra.mxu0 %v3147
    %3149 = vmatprep.subr.mxu0 0.0
    %3150 = vmatpush1.xpose.msra.mxu0 0.0
    %3151 = vmatprep.subr.mxu0 0.0
    %3152 = vmatpush1.xpose.msra.mxu0 0.0
    %3153 = vmatprep.subr.mxu0 0.0
    %3154 = vmatpush1.xpose.msra.mxu0 0.0
    %3155 = vmatprep.subr.mxu0 0.0
    %3156 = vmatpush1.xpose.msra.mxu0 0.0
    %3157 = vmatprep.subr.mxu0 0.0
    %3158 = vmatpush1.xpose.msra.mxu0 0.0
    %3159 = vmatprep.subr.mxu0 0.0
    %3160 = vmatpush1.xpose.msra.mxu0 0.0
    %3161 = vmatprep.subr.mxu0 0.0
    %3162 = vmatpush1.xpose.msra.mxu0 0.0
    %3163 = vmatprep.subr.mxu0 0.0
    %3164 = vmatpush1.xpose.msra.mxu0 0.0
    %3165 = vmatprep.subr.mxu0 0.0
    %3166 = vmatpush1.xpose.msra.mxu0 0.0
    %3167 = vmatprep.subr.mxu0 0.0
    %3168 = vmatpush1.xpose.msra.mxu0 0.0
    %3169 = vmatprep.subr.mxu0 0.0
    %3170 = vmatpush1.xpose.msra.mxu0 0.0
    %3171 = vmatprep.subr.mxu0 0.0
    %3172 = vmatpush1.xpose.msra.mxu0 0.0
    %3173 = vmatprep.subr.mxu0 0.0
    %3174 = vmatpush1.xpose.msra.mxu0 0.0
    %3175 = vmatprep.subr.mxu0 0.0
    %3176 = vmatpush1.xpose.msra.mxu0 0.0
    %3177 = vmatprep.subr.mxu0 0.0
    %3178 = vmatpush1.xpose.msra.mxu0 0.0
    %3179 = vmatprep.subr.mxu0 0.0
    %3180 = vmatpush1.xpose.msra.mxu0 0.0
    %3181 = vmatprep.subr.mxu0 0.0
    %3182 = vmatpush1.xpose.msra.mxu0 0.0
    %3183 = vmatprep.subr.mxu0 0.0
    %3184 = vmatpush1.xpose.msra.mxu0 0.0
    %3185 = vmatprep.subr.mxu0 0.0
    %3186 = vmatpush1.xpose.msra.mxu0 0.0
    %3187 = vmatprep.subr.mxu0 0.0
    %3188 = vmatpush1.xpose.msra.mxu0 0.0
    %3189 = vmatprep.subr.mxu0 0.0
    %3190 = vmatpush1.xpose.msra.mxu0 0.0
    %3191 = vmatprep.subr.mxu0 0.0
    %3192 = vmatpush1.xpose.msra.mxu0 0.0
    %3193 = vmatprep.subr.mxu0 0.0
    %3194 = vmatpush1.xpose.msra.mxu0 0.0
    %3195 = vmatprep.subr.mxu0 0.0
    %3196 = vmatpush1.xpose.msra.mxu0 0.0
    %3197 = vmatprep.subr.mxu0 0.0
    %3198 = vmatpush1.xpose.msra.mxu0 0.0
    %3199 = vmatprep.subr.mxu0 0.0
    %3200 = vmatpush1.xpose.msra.mxu0 0.0
    %3201 = vmatprep.subr.mxu0 0.0
    %3202 = vmatpush1.xpose.msra.mxu0 0.0
    %3203 = vmatprep.subr.mxu0 0.0
    %3204 = vmatpush1.xpose.msra.mxu0 0.0
    %3205 = vmatprep.subr.mxu0 0.0
    %3206 = vmatpush1.xpose.msra.mxu0 0.0
    %3207 = vmatprep.subr.mxu0 0.0
    %3208 = vmatpush1.xpose.msra.mxu0 0.0
    %3209 = vmatprep.subr.mxu0 0.0
    %3210 = vmatpush1.xpose.msra.mxu0 0.0
    %3211 = vmatprep.mubr.f32.mxu0 0.0
    %v3212 = vand.u32 %v2770, 4294901760
    %3213 = vmatmul.mubr.f32.gmra.mrb[0].mxu0 %v3212
    %v3214 = vpop.f32.mrb[0].mxu0
    %v3215 = vadd.f32 %v3143, %v3214
    %v3216 = vpop.f32.mrb[0].mxu0
    %3217 = vdwg.mxu0
    %v3218 = vadd.f32 %v2766, %v3215
    %vm3219 = vcmask 8192
    %3220 = vst.msk [vmem:[#allocation2] sm:$0x1] %vm3219, %v3218
    // Predicated region
    $region30: #{mean_predict_net.1} parent=1 // pred_check
      _
    $region31: #{mean_predict_net.1} parent=1 // pred_check_branch
      %3222 = sbr.rel (0) target = $region33
    $region32: #{mean_predict_net.1} parent=1 // pred_region
      %s3224 = ssub.s32 16, 16
      %3225 = vsyncadd [#allocation3], %s3224
      %s3227 = sshll.u32 [#allocation2], 4
      %s3228 = int_to_ptr.vmem [resolvable:$true] %s3227
      %3230 = dma.vmem_to_hbm [thread:$0]  %s3228, 16, %s7, [#allocation3]
    $region33: #{mean_predict_net.1} parent=1 // pred_fallthru
      _
    // Predicated region
    $region34: #{mean_predict_net.1} parent=1 // pred_check
      _
    $region35: #{mean_predict_net.1} parent=1 // pred_check_branch
      %3232 = sbr.rel (0) target = $region37
    $region36: #{mean_predict_net.1} parent=1 // pred_region
      %3233 = dma.done [#allocation3], 16
    $region37: #{mean_predict_net.1} parent=1 // pred_fallthru
      _
    %3234 = vsyncpa [#allocation3], 1

</llo_original>
